<compile_context>
chip_gen: v7x
topology: tpu7x:2x2x1
jax: 0.10.0
libtpu: 0.0.40
codegen_flags: <defaults>
</compile_context>

<pallas_src>
import numpy as np
import jax
import jax.numpy as jnp
from jax import lax
from jax.experimental import pallas as pl
from jax.experimental.pallas import tpu as pltpu


def _disc_kernel(x0_ref, dx_ref,                                    # (B,C) knot0, (T-1,B,C*H) repeated slopes
                 w0_ref, b0_ref, w1_ref, b1_ref, w2_ref, b2_ref,    # initial MLP (f32)
                 v0t_ref, v0h_ref, c0_ref, v1_ref, c1_ref,          # func hidden layers (weights bf16)
                 v2_ref, c2_ref,                                    # fused func final layer (M, C*H) bf16
                 ro_w_ref, ro_b_ref,                                # readout (f32)
                 out_ref):                                          # (1,1) mean score
    f32 = jnp.float32
    bf16 = jnp.bfloat16
    n_steps, batch, ch_hidden = dx_ref.shape
    hidden = w2_ref.shape[1]
    chan = ch_hidden // hidden

    # Hoist every loop-invariant weight once (nothing re-loaded inside the serial chain).
    w0 = w0_ref[...]; b0 = b0_ref[...]
    w1 = w1_ref[...]; b1 = b1_ref[...]
    w2 = w2_ref[...]; b2 = b2_ref[...]
    v0t = v0t_ref[...]; v0h = v0h_ref[...]; c0 = c0_ref[...]
    v1 = v1_ref[...]; c1 = c1_ref[...]
    v2 = v2_ref[...]; c2 = c2_ref[...]
    ro_w = ro_w_ref[...]; ro_b = ro_b_ref[...]

    def _silu(x):
        # LipSwish with the 0.909 folded into the downstream weights; divide goes to EUP.
        return x * pl.reciprocal(1.0 + jnp.exp(-x), approx=True)

    def initial_mlp(x):                                   # runs once, off the chain -> f32
        h = _silu(jnp.dot(x, w0, preferred_element_type=f32) + b0)
        h = _silu(jnp.dot(h, w1, preferred_element_type=f32) + b1)
        return jnp.dot(h, w2, preferred_element_type=f32) + b2

    def vector_field(t, h, dxr):                          # func(t,h) contracted with dX -> (B,H)
        # concat([t, h]) @ W0 computed as t*W0[0] + h @ W0[1:]  (no in-kernel concat)
        x = _silu(t * v0t + jnp.dot(h.astype(bf16), v0h, preferred_element_type=f32) + c0)
        x = _silu(jnp.dot(x.astype(bf16), v1, preferred_element_type=f32) + c1)
        # single fused MXU matmul + single tanh over all control channels
        g = jnp.tanh(jnp.dot(x.astype(bf16), v2, preferred_element_type=f32) + c2)   # (B, C*H)
        prod = g * dxr                                    # dxr[b, c*H + h] == dX[b, c]
        acc = prod[:, 0:hidden]
        for c in range(1, chan):                          # static lane-slice adds
            acc = acc + prod[:, c * hidden:(c + 1) * hidden]
        return acc

    h0 = initial_mlp(x0_ref[...])
    f0 = vector_field(0.0, h0, dx_ref[0])

    def body(n, carry):
        y, z, f = carry
        dxr = dx_ref[n]
        z_new = 2.0 * y - z + f
        f_new = vector_field((n + 1).astype(f32), z_new, dxr)
        y_new = y + 0.5 * (f + f_new)
        return (y_new, z_new, f_new)

    # Static trip count -> full unroll so the LLO scheduler overlaps adjacent steps.
    y_final, _, _ = lax.fori_loop(0, n_steps, body, (h0, h0, f0), unroll=True)

    score = jnp.dot(y_final, ro_w, preferred_element_type=f32) + ro_b    # (B, 1)
    out_ref[...] = jnp.sum(score, axis=0, keepdims=True) * (1.0 / batch)  # score.mean()


def make_params(key, data_size, hidden_size, mlp_size):
    chan = 1 + data_size

    def lin(k, fan_in, fan_out):
        k1, k2 = jax.random.split(k)
        lim = 1.0 / (fan_in ** 0.5)
        w = jax.random.uniform(k1, (fan_in, fan_out), jnp.float32, -lim, lim)
        b = jax.random.uniform(k2, (fan_out,), jnp.float32, -lim, lim)
        return w, b

    keys = jax.random.split(key, 7)
    p = {}
    p['i_W0'], p['i_b0'] = lin(keys[0], chan, mlp_size)
    p['i_W1'], p['i_b1'] = lin(keys[1], mlp_size, mlp_size)
    p['i_W2'], p['i_b2'] = lin(keys[2], mlp_size, hidden_size)
    p['f_W0'], p['f_b0'] = lin(keys[3], 1 + hidden_size, mlp_size)
    p['f_W1'], p['f_b1'] = lin(keys[4], mlp_size, mlp_size)
    p['f_W2'], p['f_b2'] = lin(keys[5], mlp_size, hidden_size * chan)
    p['r_W'],  p['r_b'] = lin(keys[6], hidden_size, 1)
    return p


def discriminator_forward(ys_coeffs, params, hidden_size, data_size):
    batch, t_size, chan = ys_coeffs.shape
    assert chan == 1 + data_size
    H = hidden_size
    M = params['i_W0'].shape[1]
    f32, bf16 = jnp.float32, jnp.bfloat16
    LS = 0.909                                             # LipSwish scale, folded into consumer weights

    coeffs = ys_coeffs.astype(f32)
    x0 = coeffs[:, 0, :]                                   # Y0 = Y.evaluate(interval[0])   (B, C)
    dX = coeffs[:, 1:, :] - coeffs[:, :-1, :]              # segment slopes                 (B, T-1, C)
    dX_t = jnp.transpose(dX, (1, 0, 2))                    # time-major                     (T-1, B, C)
    dxrep = jnp.repeat(dX_t, H, axis=-1)                   # dxrep[..., c*H + h] = dX[..., c]

    row = lambda b: b.reshape(1, -1)

    # Fused func final layer: PyTorch output index h*C + c  ->  channel-major column c*H + h,
    # matching both the c2 repack and the dxrep / lane-slice ordering in the kernel.
    v2 = params['f_W2'].reshape(M, H, chan).transpose(0, 2, 1).reshape(M, chan * H)
    c2 = params['f_b2'].reshape(H, chan).T.reshape(1, chan * H)

    inputs = [
        x0, dxrep,
        params['i_W0'], row(params['i_b0']),
        LS * params['i_W1'], row(params['i_b1']),          # 0.909 folded into LipSwish consumers
        LS * params['i_W2'], row(params['i_b2']),
        params['f_W0'][0:1, :],                            # t column stays f32 (VPU path)
        params['f_W0'][1:, :].astype(bf16),                # h columns -> bf16 MXU
        row(params['f_b0']),
        (LS * params['f_W1']).astype(bf16), row(params['f_b1']),
        (LS * v2).astype(bf16), c2,
        params['r_W'], params['r_b'].reshape(1, 1),
    ]

    out = pl.pallas_call(
        _disc_kernel,
        out_shape=jax.ShapeDtypeStruct((1, 1), f32),
        in_specs=[pl.BlockSpec(memory_space=pltpu.MemorySpace.VMEM) for _ in inputs],
        out_specs=pl.BlockSpec(memory_space=pltpu.MemorySpace.VMEM),
    )(*inputs)
    return out[0, 0]


def reference_forward(ys_coeffs, params, hidden_size, data_size):
    """Pure-JAX f32 reference (mirrors the PyTorch/torchcde forward exactly)."""
    HIGH = lax.Precision.HIGHEST
    batch, t_size, chan = ys_coeffs.shape
    H = hidden_size

    def lipswish(x):
        return 0.909 * x * (1.0 / (1.0 + jnp.exp(-x)))

    def mlp_initial(x):
        h = lipswish(jnp.dot(x, params['i_W0'], precision=HIGH) + params['i_b0'])
        h = lipswish(jnp.dot(h, params['i_W1'], precision=HIGH) + params['i_b1'])
        return jnp.dot(h, params['i_W2'], precision=HIGH) + params['i_b2']

    def func(t, h):
        th = jnp.concatenate([jnp.full((h.shape[0], 1), t, h.dtype), h], axis=1)
        x = lipswish(jnp.dot(th, params['f_W0'], precision=HIGH) + params['f_b0'])
        x = lipswish(jnp.dot(x, params['f_W1'], precision=HIGH) + params['f_b1'])
        out = jnp.tanh(jnp.dot(x, params['f_W2'], precision=HIGH) + params['f_b2'])
        return out.reshape(h.shape[0], H, chan)

    def vf(t, z, dx):
        return jnp.einsum('bhc,bc->bh', func(t, z), dx, precision=HIGH)

    h0 = mlp_initial(ys_coeffs[:, 0, :])
    dX = ys_coeffs[:, 1:, :] - ys_coeffs[:, :-1, :]
    y = h0
    z = h0
    f = vf(0.0, h0, dX[:, 0, :])
    for n in range(t_size - 1):
        dx = dX[:, n, :]
        z_new = 2.0 * y - z + f
        f_new = vf(float(n + 1), z_new, dx)
        y = y + 0.5 * (f + f_new)
        z, f = z_new, f_new
    score = jnp.dot(y, params['r_W'], precision=HIGH) + params['r_b']
    return jnp.mean(score)


if __name__ == "__main__":
    data_size, hidden_size, mlp_size, num_layers = 4, 16, 32, 2
    batch, t_size = 8, 9
    chan = 1 + data_size

    key = jax.random.PRNGKey(0)
    kp, kx = jax.random.split(key)
    params = make_params(kp, data_size, hidden_size, mlp_size)

    # Synthetic linear-interpolation coefficients: channel 0 is time, rest a random walk.
    t_grid = jnp.linspace(0.0, 1.0, t_size)
    walk = jnp.cumsum(0.1 * jax.random.normal(kx, (batch, t_size, data_size), jnp.float32), axis=1)
    ys_coeffs = jnp.concatenate(
        [jnp.broadcast_to(t_grid[None, :, None], (batch, t_size, 1)), walk], axis=2)

    out = discriminator_forward(ys_coeffs, params, hidden_size, data_size)
    out = jax.block_until_ready(out)

    # Tolerance is loose because the kernel intentionally uses bf16 MXU inputs and the
    # EUP approximate reciprocal on the 8-step serial chain (structural bugs would be
    # orders of magnitude larger than this); reference is full-f32 HIGHEST precision.
    ref = reference_forward(ys_coeffs, params, hidden_size, data_size)
    np.testing.assert_allclose(np.asarray(out), np.asarray(ref), rtol=3e-2, atol=3e-2)

    print("KERNEL_OK")
</pallas_src>

<mosaic_0001>
module attributes {stable_mosaic.version = 11 : i64} {
  func.func @_disc_kernel(%arg0: memref<8x5xf32, #tpu.memory_space<vmem>>, %arg1: memref<8x8x80xf32, #tpu.memory_space<vmem>>, %arg2: memref<5x32xf32, #tpu.memory_space<vmem>>, %arg3: memref<1x32xf32, #tpu.memory_space<vmem>>, %arg4: memref<32x32xf32, #tpu.memory_space<vmem>>, %arg5: memref<1x32xf32, #tpu.memory_space<vmem>>, %arg6: memref<32x16xf32, #tpu.memory_space<vmem>>, %arg7: memref<1x16xf32, #tpu.memory_space<vmem>>, %arg8: memref<1x32xf32, #tpu.memory_space<vmem>>, %arg9: memref<16x32xbf16, #tpu.memory_space<vmem>>, %arg10: memref<1x32xf32, #tpu.memory_space<vmem>>, %arg11: memref<32x32xbf16, #tpu.memory_space<vmem>>, %arg12: memref<1x32xf32, #tpu.memory_space<vmem>>, %arg13: memref<32x80xbf16, #tpu.memory_space<vmem>>, %arg14: memref<1x80xf32, #tpu.memory_space<vmem>>, %arg15: memref<16x1xf32, #tpu.memory_space<vmem>>, %arg16: memref<1x1xf32, #tpu.memory_space<vmem>>, %arg17: memref<1x1xf32, #tpu.memory_space<vmem>>) attributes {dimension_semantics = [], scalar_prefetch = 0 : i64, scratch_operands = 0 : i64, tpu.core_type = #tpu.core_type<tc>} {
    %c0 = arith.constant 0 : index
    %c0_0 = arith.constant 0 : index
    %0 = vector.load %arg2[%c0, %c0_0] : memref<5x32xf32, #tpu.memory_space<vmem>>, vector<5x32xf32>
    %c0_1 = arith.constant 0 : index
    %c0_2 = arith.constant 0 : index
    %1 = vector.load %arg3[%c0_1, %c0_2] : memref<1x32xf32, #tpu.memory_space<vmem>>, vector<1x32xf32>
    %c0_3 = arith.constant 0 : index
    %c0_4 = arith.constant 0 : index
    %2 = vector.load %arg4[%c0_3, %c0_4] : memref<32x32xf32, #tpu.memory_space<vmem>>, vector<32x32xf32>
    %c0_5 = arith.constant 0 : index
    %c0_6 = arith.constant 0 : index
    %3 = vector.load %arg5[%c0_5, %c0_6] : memref<1x32xf32, #tpu.memory_space<vmem>>, vector<1x32xf32>
    %c0_7 = arith.constant 0 : index
    %c0_8 = arith.constant 0 : index
    %4 = vector.load %arg6[%c0_7, %c0_8] : memref<32x16xf32, #tpu.memory_space<vmem>>, vector<32x16xf32>
    %c0_9 = arith.constant 0 : index
    %c0_10 = arith.constant 0 : index
    %5 = vector.load %arg7[%c0_9, %c0_10] : memref<1x16xf32, #tpu.memory_space<vmem>>, vector<1x16xf32>
    %c0_11 = arith.constant 0 : index
    %c0_12 = arith.constant 0 : index
    %6 = vector.load %arg8[%c0_11, %c0_12] : memref<1x32xf32, #tpu.memory_space<vmem>>, vector<1x32xf32>
    %c0_13 = arith.constant 0 : index
    %c0_14 = arith.constant 0 : index
    %7 = vector.load %arg9[%c0_13, %c0_14] : memref<16x32xbf16, #tpu.memory_space<vmem>>, vector<16x32xbf16>
    %c0_15 = arith.constant 0 : index
    %c0_16 = arith.constant 0 : index
    %8 = vector.load %arg10[%c0_15, %c0_16] : memref<1x32xf32, #tpu.memory_space<vmem>>, vector<1x32xf32>
    %c0_17 = arith.constant 0 : index
    %c0_18 = arith.constant 0 : index
    %9 = vector.load %arg11[%c0_17, %c0_18] : memref<32x32xbf16, #tpu.memory_space<vmem>>, vector<32x32xbf16>
    %c0_19 = arith.constant 0 : index
    %c0_20 = arith.constant 0 : index
    %10 = vector.load %arg12[%c0_19, %c0_20] : memref<1x32xf32, #tpu.memory_space<vmem>>, vector<1x32xf32>
    %c0_21 = arith.constant 0 : index
    %c0_22 = arith.constant 0 : index
    %11 = vector.load %arg13[%c0_21, %c0_22] : memref<32x80xbf16, #tpu.memory_space<vmem>>, vector<32x80xbf16>
    %c0_23 = arith.constant 0 : index
    %c0_24 = arith.constant 0 : index
    %12 = vector.load %arg14[%c0_23, %c0_24] : memref<1x80xf32, #tpu.memory_space<vmem>>, vector<1x80xf32>
    %c0_25 = arith.constant 0 : index
    %c0_26 = arith.constant 0 : index
    %13 = vector.load %arg15[%c0_25, %c0_26] : memref<16x1xf32, #tpu.memory_space<vmem>>, vector<16x1xf32>
    %c0_27 = arith.constant 0 : index
    %c0_28 = arith.constant 0 : index
    %14 = vector.load %arg16[%c0_27, %c0_28] : memref<1x1xf32, #tpu.memory_space<vmem>>, vector<1x1xf32>
    %c0_29 = arith.constant 0 : index
    %c0_30 = arith.constant 0 : index
    %15 = vector.load %arg0[%c0_29, %c0_30] : memref<8x5xf32, #tpu.memory_space<vmem>>, vector<8x5xf32>
    %cst = arith.constant dense<0.000000e+00> : vector<8x32xf32>
    %16 = tpu.matmul %15, %0, %cst {dimension_numbers = #tpu.dot_dimension_numbers<[1], [0], [0], [1], [0, 0, 1, 1], [], []>} : vector<8x5xf32>, vector<5x32xf32>, vector<8x32xf32> -> vector<8x32xf32>
    %17 = vector.broadcast %1 : vector<1x32xf32> to vector<8x32xf32>
    %18 = arith.addf %16, %17 : vector<8x32xf32>
    %cst_31 = arith.constant 0.000000e+00 : f32
    %19 = vector.broadcast %cst_31 : f32 to vector<8x32xf32>
    %20 = arith.subf %19, %18 : vector<8x32xf32>
    %21 = math.exp %20 : vector<8x32xf32>
    %cst_32 = arith.constant 1.000000e+00 : f32
    %22 = vector.broadcast %cst_32 : f32 to vector<8x32xf32>
    %23 = arith.addf %22, %21 : vector<8x32xf32>
    %24 = tpu.reciprocal %23 {approx = true} : vector<8x32xf32> -> vector<8x32xf32>
    %25 = arith.mulf %18, %24 : vector<8x32xf32>
    %cst_33 = arith.constant dense<0.000000e+00> : vector<8x32xf32>
    %26 = tpu.matmul %25, %2, %cst_33 {dimension_numbers = #tpu.dot_dimension_numbers<[1], [0], [0], [1], [0, 0, 1, 1], [], []>} : vector<8x32xf32>, vector<32x32xf32>, vector<8x32xf32> -> vector<8x32xf32>
    %27 = vector.broadcast %3 : vector<1x32xf32> to vector<8x32xf32>
    %28 = arith.addf %26, %27 : vector<8x32xf32>
    %cst_34 = arith.constant 0.000000e+00 : f32
    %29 = vector.broadcast %cst_34 : f32 to vector<8x32xf32>
    %30 = arith.subf %29, %28 : vector<8x32xf32>
    %31 = math.exp %30 : vector<8x32xf32>
    %cst_35 = arith.constant 1.000000e+00 : f32
    %32 = vector.broadcast %cst_35 : f32 to vector<8x32xf32>
    %33 = arith.addf %32, %31 : vector<8x32xf32>
    %34 = tpu.reciprocal %33 {approx = true} : vector<8x32xf32> -> vector<8x32xf32>
    %35 = arith.mulf %28, %34 : vector<8x32xf32>
    %cst_36 = arith.constant dense<0.000000e+00> : vector<8x16xf32>
    %36 = tpu.matmul %35, %4, %cst_36 {dimension_numbers = #tpu.dot_dimension_numbers<[1], [0], [0], [1], [0, 0, 1, 1], [], []>} : vector<8x32xf32>, vector<32x16xf32>, vector<8x16xf32> -> vector<8x16xf32>
    %37 = vector.broadcast %5 : vector<1x16xf32> to vector<8x16xf32>
    %38 = arith.addf %36, %37 : vector<8x16xf32>
    %c0_37 = arith.constant 0 : index
    %c0_38 = arith.constant 0 : index
    %c0_39 = arith.constant 0 : index
    %39 = vector.load %arg1[%c0_37, %c0_38, %c0_39] : memref<8x8x80xf32, #tpu.memory_space<vmem>>, vector<1x8x80xf32>
    %40 = vector.shape_cast %39 : vector<1x8x80xf32> to vector<8x80xf32>
    %cst_40 = arith.constant 0.000000e+00 : f32
    %41 = vector.broadcast %cst_40 : f32 to vector<1x32xf32>
    %42 = arith.mulf %41, %6 : vector<1x32xf32>
    %43 = arith.truncf %38 : vector<8x16xf32> to vector<8x16xbf16>
    %cst_41 = arith.constant dense<0.000000e+00> : vector<8x32xf32>
    %44 = tpu.matmul %43, %7, %cst_41 {dimension_numbers = #tpu.dot_dimension_numbers<[1], [0], [0], [1], [0, 0, 1, 1], [], []>} : vector<8x16xbf16>, vector<16x32xbf16>, vector<8x32xf32> -> vector<8x32xf32>
    %45 = vector.broadcast %42 : vector<1x32xf32> to vector<8x32xf32>
    %46 = arith.addf %45, %44 : vector<8x32xf32>
    %47 = vector.broadcast %8 : vector<1x32xf32> to vector<8x32xf32>
    %48 = arith.addf %46, %47 : vector<8x32xf32>
    %cst_42 = arith.constant 0.000000e+00 : f32
    %49 = vector.broadcast %cst_42 : f32 to vector<8x32xf32>
    %50 = arith.subf %49, %48 : vector<8x32xf32>
    %51 = math.exp %50 : vector<8x32xf32>
    %cst_43 = arith.constant 1.000000e+00 : f32
    %52 = vector.broadcast %cst_43 : f32 to vector<8x32xf32>
    %53 = arith.addf %52, %51 : vector<8x32xf32>
    %54 = tpu.reciprocal %53 {approx = true} : vector<8x32xf32> -> vector<8x32xf32>
    %55 = arith.mulf %48, %54 : vector<8x32xf32>
    %56 = arith.truncf %55 : vector<8x32xf32> to vector<8x32xbf16>
    %cst_44 = arith.constant dense<0.000000e+00> : vector<8x32xf32>
    %57 = tpu.matmul %56, %9, %cst_44 {dimension_numbers = #tpu.dot_dimension_numbers<[1], [0], [0], [1], [0, 0, 1, 1], [], []>} : vector<8x32xbf16>, vector<32x32xbf16>, vector<8x32xf32> -> vector<8x32xf32>
    %58 = vector.broadcast %10 : vector<1x32xf32> to vector<8x32xf32>
    %59 = arith.addf %57, %58 : vector<8x32xf32>
    %cst_45 = arith.constant 0.000000e+00 : f32
    %60 = vector.broadcast %cst_45 : f32 to vector<8x32xf32>
    %61 = arith.subf %60, %59 : vector<8x32xf32>
    %62 = math.exp %61 : vector<8x32xf32>
    %cst_46 = arith.constant 1.000000e+00 : f32
    %63 = vector.broadcast %cst_46 : f32 to vector<8x32xf32>
    %64 = arith.addf %63, %62 : vector<8x32xf32>
    %65 = tpu.reciprocal %64 {approx = true} : vector<8x32xf32> -> vector<8x32xf32>
    %66 = arith.mulf %59, %65 : vector<8x32xf32>
    %67 = arith.truncf %66 : vector<8x32xf32> to vector<8x32xbf16>
    %cst_47 = arith.constant dense<0.000000e+00> : vector<8x80xf32>
    %68 = tpu.matmul %67, %11, %cst_47 {dimension_numbers = #tpu.dot_dimension_numbers<[1], [0], [0], [1], [0, 0, 1, 1], [], []>} : vector<8x32xbf16>, vector<32x80xbf16>, vector<8x80xf32> -> vector<8x80xf32>
    %69 = vector.broadcast %12 : vector<1x80xf32> to vector<8x80xf32>
    %70 = arith.addf %68, %69 : vector<8x80xf32>
    %71 = math.tanh %70 : vector<8x80xf32>
    %72 = arith.mulf %71, %40 : vector<8x80xf32>
    %73 = vector.extract_strided_slice %72 {offsets = [0, 0], sizes = [8, 16], strides = [1, 1]} : vector<8x80xf32> to vector<8x16xf32>
    %74 = vector.extract_strided_slice %72 {offsets = [0, 16], sizes = [8, 16], strides = [1, 1]} : vector<8x80xf32> to vector<8x16xf32>
    %75 = arith.addf %73, %74 : vector<8x16xf32>
    %76 = vector.extract_strided_slice %72 {offsets = [0, 32], sizes = [8, 16], strides = [1, 1]} : vector<8x80xf32> to vector<8x16xf32>
    %77 = arith.addf %75, %76 : vector<8x16xf32>
    %78 = vector.extract_strided_slice %72 {offsets = [0, 48], sizes = [8, 16], strides = [1, 1]} : vector<8x80xf32> to vector<8x16xf32>
    %79 = arith.addf %77, %78 : vector<8x16xf32>
    %80 = vector.extract_strided_slice %72 {offsets = [0, 64], sizes = [8, 16], strides = [1, 1]} : vector<8x80xf32> to vector<8x16xf32>
    %81 = arith.addf %79, %80 : vector<8x16xf32>
    %c0_i32 = arith.constant 0 : i32
    %82 = arith.index_cast %c0_i32 : i32 to index
    %c0_48 = arith.constant 0 : index
    %c0_49 = arith.constant 0 : index
    %83 = vector.load %arg1[%82, %c0_48, %c0_49] : memref<8x8x80xf32, #tpu.memory_space<vmem>>, vector<1x8x80xf32>
    %84 = vector.shape_cast %83 : vector<1x8x80xf32> to vector<8x80xf32>
    %cst_50 = arith.constant 2.000000e+00 : f32
    %85 = vector.broadcast %cst_50 : f32 to vector<8x16xf32>
    %86 = arith.mulf %85, %38 : vector<8x16xf32>
    %87 = arith.subf %86, %38 : vector<8x16xf32>
    %88 = arith.addf %87, %81 : vector<8x16xf32>
    %c1_i32 = arith.constant 1 : i32
    %89 = arith.addi %c0_i32, %c1_i32 : i32
    %90 = arith.sitofp %89 : i32 to f32
    %91 = vector.broadcast %90 : f32 to vector<1x32xf32>
    %92 = arith.mulf %91, %6 : vector<1x32xf32>
    %93 = arith.truncf %88 : vector<8x16xf32> to vector<8x16xbf16>
    %cst_51 = arith.constant dense<0.000000e+00> : vector<8x32xf32>
    %94 = tpu.matmul %93, %7, %cst_51 {dimension_numbers = #tpu.dot_dimension_numbers<[1], [0], [0], [1], [0, 0, 1, 1], [], []>} : vector<8x16xbf16>, vector<16x32xbf16>, vector<8x32xf32> -> vector<8x32xf32>
    %95 = vector.broadcast %92 : vector<1x32xf32> to vector<8x32xf32>
    %96 = arith.addf %95, %94 : vector<8x32xf32>
    %97 = vector.broadcast %8 : vector<1x32xf32> to vector<8x32xf32>
    %98 = arith.addf %96, %97 : vector<8x32xf32>
    %cst_52 = arith.constant 0.000000e+00 : f32
    %99 = vector.broadcast %cst_52 : f32 to vector<8x32xf32>
    %100 = arith.subf %99, %98 : vector<8x32xf32>
    %101 = math.exp %100 : vector<8x32xf32>
    %cst_53 = arith.constant 1.000000e+00 : f32
    %102 = vector.broadcast %cst_53 : f32 to vector<8x32xf32>
    %103 = arith.addf %102, %101 : vector<8x32xf32>
    %104 = tpu.reciprocal %103 {approx = true} : vector<8x32xf32> -> vector<8x32xf32>
    %105 = arith.mulf %98, %104 : vector<8x32xf32>
    %106 = arith.truncf %105 : vector<8x32xf32> to vector<8x32xbf16>
    %cst_54 = arith.constant dense<0.000000e+00> : vector<8x32xf32>
    %107 = tpu.matmul %106, %9, %cst_54 {dimension_numbers = #tpu.dot_dimension_numbers<[1], [0], [0], [1], [0, 0, 1, 1], [], []>} : vector<8x32xbf16>, vector<32x32xbf16>, vector<8x32xf32> -> vector<8x32xf32>
    %108 = vector.broadcast %10 : vector<1x32xf32> to vector<8x32xf32>
    %109 = arith.addf %107, %108 : vector<8x32xf32>
    %cst_55 = arith.constant 0.000000e+00 : f32
    %110 = vector.broadcast %cst_55 : f32 to vector<8x32xf32>
    %111 = arith.subf %110, %109 : vector<8x32xf32>
    %112 = math.exp %111 : vector<8x32xf32>
    %cst_56 = arith.constant 1.000000e+00 : f32
    %113 = vector.broadcast %cst_56 : f32 to vector<8x32xf32>
    %114 = arith.addf %113, %112 : vector<8x32xf32>
    %115 = tpu.reciprocal %114 {approx = true} : vector<8x32xf32> -> vector<8x32xf32>
    %116 = arith.mulf %109, %115 : vector<8x32xf32>
    %117 = arith.truncf %116 : vector<8x32xf32> to vector<8x32xbf16>
    %cst_57 = arith.constant dense<0.000000e+00> : vector<8x80xf32>
    %118 = tpu.matmul %117, %11, %cst_57 {dimension_numbers = #tpu.dot_dimension_numbers<[1], [0], [0], [1], [0, 0, 1, 1], [], []>} : vector<8x32xbf16>, vector<32x80xbf16>, vector<8x80xf32> -> vector<8x80xf32>
    %119 = vector.broadcast %12 : vector<1x80xf32> to vector<8x80xf32>
    %120 = arith.addf %118, %119 : vector<8x80xf32>
    %121 = math.tanh %120 : vector<8x80xf32>
    %122 = arith.mulf %121, %84 : vector<8x80xf32>
    %123 = vector.extract_strided_slice %122 {offsets = [0, 0], sizes = [8, 16], strides = [1, 1]} : vector<8x80xf32> to vector<8x16xf32>
    %124 = vector.extract_strided_slice %122 {offsets = [0, 16], sizes = [8, 16], strides = [1, 1]} : vector<8x80xf32> to vector<8x16xf32>
    %125 = arith.addf %123, %124 : vector<8x16xf32>
    %126 = vector.extract_strided_slice %122 {offsets = [0, 32], sizes = [8, 16], strides = [1, 1]} : vector<8x80xf32> to vector<8x16xf32>
    %127 = arith.addf %125, %126 : vector<8x16xf32>
    %128 = vector.extract_strided_slice %122 {offsets = [0, 48], sizes = [8, 16], strides = [1, 1]} : vector<8x80xf32> to vector<8x16xf32>
    %129 = arith.addf %127, %128 : vector<8x16xf32>
    %130 = vector.extract_strided_slice %122 {offsets = [0, 64], sizes = [8, 16], strides = [1, 1]} : vector<8x80xf32> to vector<8x16xf32>
    %131 = arith.addf %129, %130 : vector<8x16xf32>
    %132 = arith.addf %81, %131 : vector<8x16xf32>
    %cst_58 = arith.constant 5.000000e-01 : f32
    %133 = vector.broadcast %cst_58 : f32 to vector<8x16xf32>
    %134 = arith.mulf %133, %132 : vector<8x16xf32>
    %135 = arith.addf %38, %134 : vector<8x16xf32>
    %c1_i32_59 = arith.constant 1 : i32
    %136 = arith.index_cast %c1_i32_59 : i32 to index
    %c0_60 = arith.constant 0 : index
    %c0_61 = arith.constant 0 : index
    %137 = vector.load %arg1[%136, %c0_60, %c0_61] : memref<8x8x80xf32, #tpu.memory_space<vmem>>, vector<1x8x80xf32>
    %138 = vector.shape_cast %137 : vector<1x8x80xf32> to vector<8x80xf32>
    %cst_62 = arith.constant 2.000000e+00 : f32
    %139 = vector.broadcast %cst_62 : f32 to vector<8x16xf32>
    %140 = arith.mulf %139, %135 : vector<8x16xf32>
    %141 = arith.subf %140, %88 : vector<8x16xf32>
    %142 = arith.addf %141, %131 : vector<8x16xf32>
    %c1_i32_63 = arith.constant 1 : i32
    %143 = arith.addi %c1_i32_59, %c1_i32_63 : i32
    %144 = arith.sitofp %143 : i32 to f32
    %145 = vector.broadcast %144 : f32 to vector<1x32xf32>
    %146 = arith.mulf %145, %6 : vector<1x32xf32>
    %147 = arith.truncf %142 : vector<8x16xf32> to vector<8x16xbf16>
    %cst_64 = arith.constant dense<0.000000e+00> : vector<8x32xf32>
    %148 = tpu.matmul %147, %7, %cst_64 {dimension_numbers = #tpu.dot_dimension_numbers<[1], [0], [0], [1], [0, 0, 1, 1], [], []>} : vector<8x16xbf16>, vector<16x32xbf16>, vector<8x32xf32> -> vector<8x32xf32>
    %149 = vector.broadcast %146 : vector<1x32xf32> to vector<8x32xf32>
    %150 = arith.addf %149, %148 : vector<8x32xf32>
    %151 = vector.broadcast %8 : vector<1x32xf32> to vector<8x32xf32>
    %152 = arith.addf %150, %151 : vector<8x32xf32>
    %cst_65 = arith.constant 0.000000e+00 : f32
    %153 = vector.broadcast %cst_65 : f32 to vector<8x32xf32>
    %154 = arith.subf %153, %152 : vector<8x32xf32>
    %155 = math.exp %154 : vector<8x32xf32>
    %cst_66 = arith.constant 1.000000e+00 : f32
    %156 = vector.broadcast %cst_66 : f32 to vector<8x32xf32>
    %157 = arith.addf %156, %155 : vector<8x32xf32>
    %158 = tpu.reciprocal %157 {approx = true} : vector<8x32xf32> -> vector<8x32xf32>
    %159 = arith.mulf %152, %158 : vector<8x32xf32>
    %160 = arith.truncf %159 : vector<8x32xf32> to vector<8x32xbf16>
    %cst_67 = arith.constant dense<0.000000e+00> : vector<8x32xf32>
    %161 = tpu.matmul %160, %9, %cst_67 {dimension_numbers = #tpu.dot_dimension_numbers<[1], [0], [0], [1], [0, 0, 1, 1], [], []>} : vector<8x32xbf16>, vector<32x32xbf16>, vector<8x32xf32> -> vector<8x32xf32>
    %162 = vector.broadcast %10 : vector<1x32xf32> to vector<8x32xf32>
    %163 = arith.addf %161, %162 : vector<8x32xf32>
    %cst_68 = arith.constant 0.000000e+00 : f32
    %164 = vector.broadcast %cst_68 : f32 to vector<8x32xf32>
    %165 = arith.subf %164, %163 : vector<8x32xf32>
    %166 = math.exp %165 : vector<8x32xf32>
    %cst_69 = arith.constant 1.000000e+00 : f32
    %167 = vector.broadcast %cst_69 : f32 to vector<8x32xf32>
    %168 = arith.addf %167, %166 : vector<8x32xf32>
    %169 = tpu.reciprocal %168 {approx = true} : vector<8x32xf32> -> vector<8x32xf32>
    %170 = arith.mulf %163, %169 : vector<8x32xf32>
    %171 = arith.truncf %170 : vector<8x32xf32> to vector<8x32xbf16>
    %cst_70 = arith.constant dense<0.000000e+00> : vector<8x80xf32>
    %172 = tpu.matmul %171, %11, %cst_70 {dimension_numbers = #tpu.dot_dimension_numbers<[1], [0], [0], [1], [0, 0, 1, 1], [], []>} : vector<8x32xbf16>, vector<32x80xbf16>, vector<8x80xf32> -> vector<8x80xf32>
    %173 = vector.broadcast %12 : vector<1x80xf32> to vector<8x80xf32>
    %174 = arith.addf %172, %173 : vector<8x80xf32>
    %175 = math.tanh %174 : vector<8x80xf32>
    %176 = arith.mulf %175, %138 : vector<8x80xf32>
    %177 = vector.extract_strided_slice %176 {offsets = [0, 0], sizes = [8, 16], strides = [1, 1]} : vector<8x80xf32> to vector<8x16xf32>
    %178 = vector.extract_strided_slice %176 {offsets = [0, 16], sizes = [8, 16], strides = [1, 1]} : vector<8x80xf32> to vector<8x16xf32>
    %179 = arith.addf %177, %178 : vector<8x16xf32>
    %180 = vector.extract_strided_slice %176 {offsets = [0, 32], sizes = [8, 16], strides = [1, 1]} : vector<8x80xf32> to vector<8x16xf32>
    %181 = arith.addf %179, %180 : vector<8x16xf32>
    %182 = vector.extract_strided_slice %176 {offsets = [0, 48], sizes = [8, 16], strides = [1, 1]} : vector<8x80xf32> to vector<8x16xf32>
    %183 = arith.addf %181, %182 : vector<8x16xf32>
    %184 = vector.extract_strided_slice %176 {offsets = [0, 64], sizes = [8, 16], strides = [1, 1]} : vector<8x80xf32> to vector<8x16xf32>
    %185 = arith.addf %183, %184 : vector<8x16xf32>
    %186 = arith.addf %131, %185 : vector<8x16xf32>
    %cst_71 = arith.constant 5.000000e-01 : f32
    %187 = vector.broadcast %cst_71 : f32 to vector<8x16xf32>
    %188 = arith.mulf %187, %186 : vector<8x16xf32>
    %189 = arith.addf %135, %188 : vector<8x16xf32>
    %c2_i32 = arith.constant 2 : i32
    %190 = arith.index_cast %c2_i32 : i32 to index
    %c0_72 = arith.constant 0 : index
    %c0_73 = arith.constant 0 : index
    %191 = vector.load %arg1[%190, %c0_72, %c0_73] : memref<8x8x80xf32, #tpu.memory_space<vmem>>, vector<1x8x80xf32>
    %192 = vector.shape_cast %191 : vector<1x8x80xf32> to vector<8x80xf32>
    %cst_74 = arith.constant 2.000000e+00 : f32
    %193 = vector.broadcast %cst_74 : f32 to vector<8x16xf32>
    %194 = arith.mulf %193, %189 : vector<8x16xf32>
    %195 = arith.subf %194, %142 : vector<8x16xf32>
    %196 = arith.addf %195, %185 : vector<8x16xf32>
    %c1_i32_75 = arith.constant 1 : i32
    %197 = arith.addi %c2_i32, %c1_i32_75 : i32
    %198 = arith.sitofp %197 : i32 to f32
    %199 = vector.broadcast %198 : f32 to vector<1x32xf32>
    %200 = arith.mulf %199, %6 : vector<1x32xf32>
    %201 = arith.truncf %196 : vector<8x16xf32> to vector<8x16xbf16>
    %cst_76 = arith.constant dense<0.000000e+00> : vector<8x32xf32>
    %202 = tpu.matmul %201, %7, %cst_76 {dimension_numbers = #tpu.dot_dimension_numbers<[1], [0], [0], [1], [0, 0, 1, 1], [], []>} : vector<8x16xbf16>, vector<16x32xbf16>, vector<8x32xf32> -> vector<8x32xf32>
    %203 = vector.broadcast %200 : vector<1x32xf32> to vector<8x32xf32>
    %204 = arith.addf %203, %202 : vector<8x32xf32>
    %205 = vector.broadcast %8 : vector<1x32xf32> to vector<8x32xf32>
    %206 = arith.addf %204, %205 : vector<8x32xf32>
    %cst_77 = arith.constant 0.000000e+00 : f32
    %207 = vector.broadcast %cst_77 : f32 to vector<8x32xf32>
    %208 = arith.subf %207, %206 : vector<8x32xf32>
    %209 = math.exp %208 : vector<8x32xf32>
    %cst_78 = arith.constant 1.000000e+00 : f32
    %210 = vector.broadcast %cst_78 : f32 to vector<8x32xf32>
    %211 = arith.addf %210, %209 : vector<8x32xf32>
    %212 = tpu.reciprocal %211 {approx = true} : vector<8x32xf32> -> vector<8x32xf32>
    %213 = arith.mulf %206, %212 : vector<8x32xf32>
    %214 = arith.truncf %213 : vector<8x32xf32> to vector<8x32xbf16>
    %cst_79 = arith.constant dense<0.000000e+00> : vector<8x32xf32>
    %215 = tpu.matmul %214, %9, %cst_79 {dimension_numbers = #tpu.dot_dimension_numbers<[1], [0], [0], [1], [0, 0, 1, 1], [], []>} : vector<8x32xbf16>, vector<32x32xbf16>, vector<8x32xf32> -> vector<8x32xf32>
    %216 = vector.broadcast %10 : vector<1x32xf32> to vector<8x32xf32>
    %217 = arith.addf %215, %216 : vector<8x32xf32>
    %cst_80 = arith.constant 0.000000e+00 : f32
    %218 = vector.broadcast %cst_80 : f32 to vector<8x32xf32>
    %219 = arith.subf %218, %217 : vector<8x32xf32>
    %220 = math.exp %219 : vector<8x32xf32>
    %cst_81 = arith.constant 1.000000e+00 : f32
    %221 = vector.broadcast %cst_81 : f32 to vector<8x32xf32>
    %222 = arith.addf %221, %220 : vector<8x32xf32>
    %223 = tpu.reciprocal %222 {approx = true} : vector<8x32xf32> -> vector<8x32xf32>
    %224 = arith.mulf %217, %223 : vector<8x32xf32>
    %225 = arith.truncf %224 : vector<8x32xf32> to vector<8x32xbf16>
    %cst_82 = arith.constant dense<0.000000e+00> : vector<8x80xf32>
    %226 = tpu.matmul %225, %11, %cst_82 {dimension_numbers = #tpu.dot_dimension_numbers<[1], [0], [0], [1], [0, 0, 1, 1], [], []>} : vector<8x32xbf16>, vector<32x80xbf16>, vector<8x80xf32> -> vector<8x80xf32>
    %227 = vector.broadcast %12 : vector<1x80xf32> to vector<8x80xf32>
    %228 = arith.addf %226, %227 : vector<8x80xf32>
    %229 = math.tanh %228 : vector<8x80xf32>
    %230 = arith.mulf %229, %192 : vector<8x80xf32>
    %231 = vector.extract_strided_slice %230 {offsets = [0, 0], sizes = [8, 16], strides = [1, 1]} : vector<8x80xf32> to vector<8x16xf32>
    %232 = vector.extract_strided_slice %230 {offsets = [0, 16], sizes = [8, 16], strides = [1, 1]} : vector<8x80xf32> to vector<8x16xf32>
    %233 = arith.addf %231, %232 : vector<8x16xf32>
    %234 = vector.extract_strided_slice %230 {offsets = [0, 32], sizes = [8, 16], strides = [1, 1]} : vector<8x80xf32> to vector<8x16xf32>
    %235 = arith.addf %233, %234 : vector<8x16xf32>
    %236 = vector.extract_strided_slice %230 {offsets = [0, 48], sizes = [8, 16], strides = [1, 1]} : vector<8x80xf32> to vector<8x16xf32>
    %237 = arith.addf %235, %236 : vector<8x16xf32>
    %238 = vector.extract_strided_slice %230 {offsets = [0, 64], sizes = [8, 16], strides = [1, 1]} : vector<8x80xf32> to vector<8x16xf32>
    %239 = arith.addf %237, %238 : vector<8x16xf32>
    %240 = arith.addf %185, %239 : vector<8x16xf32>
    %cst_83 = arith.constant 5.000000e-01 : f32
    %241 = vector.broadcast %cst_83 : f32 to vector<8x16xf32>
    %242 = arith.mulf %241, %240 : vector<8x16xf32>
    %243 = arith.addf %189, %242 : vector<8x16xf32>
    %c3_i32 = arith.constant 3 : i32
    %244 = arith.index_cast %c3_i32 : i32 to index
    %c0_84 = arith.constant 0 : index
    %c0_85 = arith.constant 0 : index
    %245 = vector.load %arg1[%244, %c0_84, %c0_85] : memref<8x8x80xf32, #tpu.memory_space<vmem>>, vector<1x8x80xf32>
    %246 = vector.shape_cast %245 : vector<1x8x80xf32> to vector<8x80xf32>
    %cst_86 = arith.constant 2.000000e+00 : f32
    %247 = vector.broadcast %cst_86 : f32 to vector<8x16xf32>
    %248 = arith.mulf %247, %243 : vector<8x16xf32>
    %249 = arith.subf %248, %196 : vector<8x16xf32>
    %250 = arith.addf %249, %239 : vector<8x16xf32>
    %c1_i32_87 = arith.constant 1 : i32
    %251 = arith.addi %c3_i32, %c1_i32_87 : i32
    %252 = arith.sitofp %251 : i32 to f32
    %253 = vector.broadcast %252 : f32 to vector<1x32xf32>
    %254 = arith.mulf %253, %6 : vector<1x32xf32>
    %255 = arith.truncf %250 : vector<8x16xf32> to vector<8x16xbf16>
    %cst_88 = arith.constant dense<0.000000e+00> : vector<8x32xf32>
    %256 = tpu.matmul %255, %7, %cst_88 {dimension_numbers = #tpu.dot_dimension_numbers<[1], [0], [0], [1], [0, 0, 1, 1], [], []>} : vector<8x16xbf16>, vector<16x32xbf16>, vector<8x32xf32> -> vector<8x32xf32>
    %257 = vector.broadcast %254 : vector<1x32xf32> to vector<8x32xf32>
    %258 = arith.addf %257, %256 : vector<8x32xf32>
    %259 = vector.broadcast %8 : vector<1x32xf32> to vector<8x32xf32>
    %260 = arith.addf %258, %259 : vector<8x32xf32>
    %cst_89 = arith.constant 0.000000e+00 : f32
    %261 = vector.broadcast %cst_89 : f32 to vector<8x32xf32>
    %262 = arith.subf %261, %260 : vector<8x32xf32>
    %263 = math.exp %262 : vector<8x32xf32>
    %cst_90 = arith.constant 1.000000e+00 : f32
    %264 = vector.broadcast %cst_90 : f32 to vector<8x32xf32>
    %265 = arith.addf %264, %263 : vector<8x32xf32>
    %266 = tpu.reciprocal %265 {approx = true} : vector<8x32xf32> -> vector<8x32xf32>
    %267 = arith.mulf %260, %266 : vector<8x32xf32>
    %268 = arith.truncf %267 : vector<8x32xf32> to vector<8x32xbf16>
    %cst_91 = arith.constant dense<0.000000e+00> : vector<8x32xf32>
    %269 = tpu.matmul %268, %9, %cst_91 {dimension_numbers = #tpu.dot_dimension_numbers<[1], [0], [0], [1], [0, 0, 1, 1], [], []>} : vector<8x32xbf16>, vector<32x32xbf16>, vector<8x32xf32> -> vector<8x32xf32>
    %270 = vector.broadcast %10 : vector<1x32xf32> to vector<8x32xf32>
    %271 = arith.addf %269, %270 : vector<8x32xf32>
    %cst_92 = arith.constant 0.000000e+00 : f32
    %272 = vector.broadcast %cst_92 : f32 to vector<8x32xf32>
    %273 = arith.subf %272, %271 : vector<8x32xf32>
    %274 = math.exp %273 : vector<8x32xf32>
    %cst_93 = arith.constant 1.000000e+00 : f32
    %275 = vector.broadcast %cst_93 : f32 to vector<8x32xf32>
    %276 = arith.addf %275, %274 : vector<8x32xf32>
    %277 = tpu.reciprocal %276 {approx = true} : vector<8x32xf32> -> vector<8x32xf32>
    %278 = arith.mulf %271, %277 : vector<8x32xf32>
    %279 = arith.truncf %278 : vector<8x32xf32> to vector<8x32xbf16>
    %cst_94 = arith.constant dense<0.000000e+00> : vector<8x80xf32>
    %280 = tpu.matmul %279, %11, %cst_94 {dimension_numbers = #tpu.dot_dimension_numbers<[1], [0], [0], [1], [0, 0, 1, 1], [], []>} : vector<8x32xbf16>, vector<32x80xbf16>, vector<8x80xf32> -> vector<8x80xf32>
    %281 = vector.broadcast %12 : vector<1x80xf32> to vector<8x80xf32>
    %282 = arith.addf %280, %281 : vector<8x80xf32>
    %283 = math.tanh %282 : vector<8x80xf32>
    %284 = arith.mulf %283, %246 : vector<8x80xf32>
    %285 = vector.extract_strided_slice %284 {offsets = [0, 0], sizes = [8, 16], strides = [1, 1]} : vector<8x80xf32> to vector<8x16xf32>
    %286 = vector.extract_strided_slice %284 {offsets = [0, 16], sizes = [8, 16], strides = [1, 1]} : vector<8x80xf32> to vector<8x16xf32>
    %287 = arith.addf %285, %286 : vector<8x16xf32>
    %288 = vector.extract_strided_slice %284 {offsets = [0, 32], sizes = [8, 16], strides = [1, 1]} : vector<8x80xf32> to vector<8x16xf32>
    %289 = arith.addf %287, %288 : vector<8x16xf32>
    %290 = vector.extract_strided_slice %284 {offsets = [0, 48], sizes = [8, 16], strides = [1, 1]} : vector<8x80xf32> to vector<8x16xf32>
    %291 = arith.addf %289, %290 : vector<8x16xf32>
    %292 = vector.extract_strided_slice %284 {offsets = [0, 64], sizes = [8, 16], strides = [1, 1]} : vector<8x80xf32> to vector<8x16xf32>
    %293 = arith.addf %291, %292 : vector<8x16xf32>
    %294 = arith.addf %239, %293 : vector<8x16xf32>
    %cst_95 = arith.constant 5.000000e-01 : f32
    %295 = vector.broadcast %cst_95 : f32 to vector<8x16xf32>
    %296 = arith.mulf %295, %294 : vector<8x16xf32>
    %297 = arith.addf %243, %296 : vector<8x16xf32>
    %c4_i32 = arith.constant 4 : i32
    %298 = arith.index_cast %c4_i32 : i32 to index
    %c0_96 = arith.constant 0 : index
    %c0_97 = arith.constant 0 : index
    %299 = vector.load %arg1[%298, %c0_96, %c0_97] : memref<8x8x80xf32, #tpu.memory_space<vmem>>, vector<1x8x80xf32>
    %300 = vector.shape_cast %299 : vector<1x8x80xf32> to vector<8x80xf32>
    %cst_98 = arith.constant 2.000000e+00 : f32
    %301 = vector.broadcast %cst_98 : f32 to vector<8x16xf32>
    %302 = arith.mulf %301, %297 : vector<8x16xf32>
    %303 = arith.subf %302, %250 : vector<8x16xf32>
    %304 = arith.addf %303, %293 : vector<8x16xf32>
    %c1_i32_99 = arith.constant 1 : i32
    %305 = arith.addi %c4_i32, %c1_i32_99 : i32
    %306 = arith.sitofp %305 : i32 to f32
    %307 = vector.broadcast %306 : f32 to vector<1x32xf32>
    %308 = arith.mulf %307, %6 : vector<1x32xf32>
    %309 = arith.truncf %304 : vector<8x16xf32> to vector<8x16xbf16>
    %cst_100 = arith.constant dense<0.000000e+00> : vector<8x32xf32>
    %310 = tpu.matmul %309, %7, %cst_100 {dimension_numbers = #tpu.dot_dimension_numbers<[1], [0], [0], [1], [0, 0, 1, 1], [], []>} : vector<8x16xbf16>, vector<16x32xbf16>, vector<8x32xf32> -> vector<8x32xf32>
    %311 = vector.broadcast %308 : vector<1x32xf32> to vector<8x32xf32>
    %312 = arith.addf %311, %310 : vector<8x32xf32>
    %313 = vector.broadcast %8 : vector<1x32xf32> to vector<8x32xf32>
    %314 = arith.addf %312, %313 : vector<8x32xf32>
    %cst_101 = arith.constant 0.000000e+00 : f32
    %315 = vector.broadcast %cst_101 : f32 to vector<8x32xf32>
    %316 = arith.subf %315, %314 : vector<8x32xf32>
    %317 = math.exp %316 : vector<8x32xf32>
    %cst_102 = arith.constant 1.000000e+00 : f32
    %318 = vector.broadcast %cst_102 : f32 to vector<8x32xf32>
    %319 = arith.addf %318, %317 : vector<8x32xf32>
    %320 = tpu.reciprocal %319 {approx = true} : vector<8x32xf32> -> vector<8x32xf32>
    %321 = arith.mulf %314, %320 : vector<8x32xf32>
    %322 = arith.truncf %321 : vector<8x32xf32> to vector<8x32xbf16>
    %cst_103 = arith.constant dense<0.000000e+00> : vector<8x32xf32>
    %323 = tpu.matmul %322, %9, %cst_103 {dimension_numbers = #tpu.dot_dimension_numbers<[1], [0], [0], [1], [0, 0, 1, 1], [], []>} : vector<8x32xbf16>, vector<32x32xbf16>, vector<8x32xf32> -> vector<8x32xf32>
    %324 = vector.broadcast %10 : vector<1x32xf32> to vector<8x32xf32>
    %325 = arith.addf %323, %324 : vector<8x32xf32>
    %cst_104 = arith.constant 0.000000e+00 : f32
    %326 = vector.broadcast %cst_104 : f32 to vector<8x32xf32>
    %327 = arith.subf %326, %325 : vector<8x32xf32>
    %328 = math.exp %327 : vector<8x32xf32>
    %cst_105 = arith.constant 1.000000e+00 : f32
    %329 = vector.broadcast %cst_105 : f32 to vector<8x32xf32>
    %330 = arith.addf %329, %328 : vector<8x32xf32>
    %331 = tpu.reciprocal %330 {approx = true} : vector<8x32xf32> -> vector<8x32xf32>
    %332 = arith.mulf %325, %331 : vector<8x32xf32>
    %333 = arith.truncf %332 : vector<8x32xf32> to vector<8x32xbf16>
    %cst_106 = arith.constant dense<0.000000e+00> : vector<8x80xf32>
    %334 = tpu.matmul %333, %11, %cst_106 {dimension_numbers = #tpu.dot_dimension_numbers<[1], [0], [0], [1], [0, 0, 1, 1], [], []>} : vector<8x32xbf16>, vector<32x80xbf16>, vector<8x80xf32> -> vector<8x80xf32>
    %335 = vector.broadcast %12 : vector<1x80xf32> to vector<8x80xf32>
    %336 = arith.addf %334, %335 : vector<8x80xf32>
    %337 = math.tanh %336 : vector<8x80xf32>
    %338 = arith.mulf %337, %300 : vector<8x80xf32>
    %339 = vector.extract_strided_slice %338 {offsets = [0, 0], sizes = [8, 16], strides = [1, 1]} : vector<8x80xf32> to vector<8x16xf32>
    %340 = vector.extract_strided_slice %338 {offsets = [0, 16], sizes = [8, 16], strides = [1, 1]} : vector<8x80xf32> to vector<8x16xf32>
    %341 = arith.addf %339, %340 : vector<8x16xf32>
    %342 = vector.extract_strided_slice %338 {offsets = [0, 32], sizes = [8, 16], strides = [1, 1]} : vector<8x80xf32> to vector<8x16xf32>
    %343 = arith.addf %341, %342 : vector<8x16xf32>
    %344 = vector.extract_strided_slice %338 {offsets = [0, 48], sizes = [8, 16], strides = [1, 1]} : vector<8x80xf32> to vector<8x16xf32>
    %345 = arith.addf %343, %344 : vector<8x16xf32>
    %346 = vector.extract_strided_slice %338 {offsets = [0, 64], sizes = [8, 16], strides = [1, 1]} : vector<8x80xf32> to vector<8x16xf32>
    %347 = arith.addf %345, %346 : vector<8x16xf32>
    %348 = arith.addf %293, %347 : vector<8x16xf32>
    %cst_107 = arith.constant 5.000000e-01 : f32
    %349 = vector.broadcast %cst_107 : f32 to vector<8x16xf32>
    %350 = arith.mulf %349, %348 : vector<8x16xf32>
    %351 = arith.addf %297, %350 : vector<8x16xf32>
    %c5_i32 = arith.constant 5 : i32
    %352 = arith.index_cast %c5_i32 : i32 to index
    %c0_108 = arith.constant 0 : index
    %c0_109 = arith.constant 0 : index
    %353 = vector.load %arg1[%352, %c0_108, %c0_109] : memref<8x8x80xf32, #tpu.memory_space<vmem>>, vector<1x8x80xf32>
    %354 = vector.shape_cast %353 : vector<1x8x80xf32> to vector<8x80xf32>
    %cst_110 = arith.constant 2.000000e+00 : f32
    %355 = vector.broadcast %cst_110 : f32 to vector<8x16xf32>
    %356 = arith.mulf %355, %351 : vector<8x16xf32>
    %357 = arith.subf %356, %304 : vector<8x16xf32>
    %358 = arith.addf %357, %347 : vector<8x16xf32>
    %c1_i32_111 = arith.constant 1 : i32
    %359 = arith.addi %c5_i32, %c1_i32_111 : i32
    %360 = arith.sitofp %359 : i32 to f32
    %361 = vector.broadcast %360 : f32 to vector<1x32xf32>
    %362 = arith.mulf %361, %6 : vector<1x32xf32>
    %363 = arith.truncf %358 : vector<8x16xf32> to vector<8x16xbf16>
    %cst_112 = arith.constant dense<0.000000e+00> : vector<8x32xf32>
    %364 = tpu.matmul %363, %7, %cst_112 {dimension_numbers = #tpu.dot_dimension_numbers<[1], [0], [0], [1], [0, 0, 1, 1], [], []>} : vector<8x16xbf16>, vector<16x32xbf16>, vector<8x32xf32> -> vector<8x32xf32>
    %365 = vector.broadcast %362 : vector<1x32xf32> to vector<8x32xf32>
    %366 = arith.addf %365, %364 : vector<8x32xf32>
    %367 = vector.broadcast %8 : vector<1x32xf32> to vector<8x32xf32>
    %368 = arith.addf %366, %367 : vector<8x32xf32>
    %cst_113 = arith.constant 0.000000e+00 : f32
    %369 = vector.broadcast %cst_113 : f32 to vector<8x32xf32>
    %370 = arith.subf %369, %368 : vector<8x32xf32>
    %371 = math.exp %370 : vector<8x32xf32>
    %cst_114 = arith.constant 1.000000e+00 : f32
    %372 = vector.broadcast %cst_114 : f32 to vector<8x32xf32>
    %373 = arith.addf %372, %371 : vector<8x32xf32>
    %374 = tpu.reciprocal %373 {approx = true} : vector<8x32xf32> -> vector<8x32xf32>
    %375 = arith.mulf %368, %374 : vector<8x32xf32>
    %376 = arith.truncf %375 : vector<8x32xf32> to vector<8x32xbf16>
    %cst_115 = arith.constant dense<0.000000e+00> : vector<8x32xf32>
    %377 = tpu.matmul %376, %9, %cst_115 {dimension_numbers = #tpu.dot_dimension_numbers<[1], [0], [0], [1], [0, 0, 1, 1], [], []>} : vector<8x32xbf16>, vector<32x32xbf16>, vector<8x32xf32> -> vector<8x32xf32>
    %378 = vector.broadcast %10 : vector<1x32xf32> to vector<8x32xf32>
    %379 = arith.addf %377, %378 : vector<8x32xf32>
    %cst_116 = arith.constant 0.000000e+00 : f32
    %380 = vector.broadcast %cst_116 : f32 to vector<8x32xf32>
    %381 = arith.subf %380, %379 : vector<8x32xf32>
    %382 = math.exp %381 : vector<8x32xf32>
    %cst_117 = arith.constant 1.000000e+00 : f32
    %383 = vector.broadcast %cst_117 : f32 to vector<8x32xf32>
    %384 = arith.addf %383, %382 : vector<8x32xf32>
    %385 = tpu.reciprocal %384 {approx = true} : vector<8x32xf32> -> vector<8x32xf32>
    %386 = arith.mulf %379, %385 : vector<8x32xf32>
    %387 = arith.truncf %386 : vector<8x32xf32> to vector<8x32xbf16>
    %cst_118 = arith.constant dense<0.000000e+00> : vector<8x80xf32>
    %388 = tpu.matmul %387, %11, %cst_118 {dimension_numbers = #tpu.dot_dimension_numbers<[1], [0], [0], [1], [0, 0, 1, 1], [], []>} : vector<8x32xbf16>, vector<32x80xbf16>, vector<8x80xf32> -> vector<8x80xf32>
    %389 = vector.broadcast %12 : vector<1x80xf32> to vector<8x80xf32>
    %390 = arith.addf %388, %389 : vector<8x80xf32>
    %391 = math.tanh %390 : vector<8x80xf32>
    %392 = arith.mulf %391, %354 : vector<8x80xf32>
    %393 = vector.extract_strided_slice %392 {offsets = [0, 0], sizes = [8, 16], strides = [1, 1]} : vector<8x80xf32> to vector<8x16xf32>
    %394 = vector.extract_strided_slice %392 {offsets = [0, 16], sizes = [8, 16], strides = [1, 1]} : vector<8x80xf32> to vector<8x16xf32>
    %395 = arith.addf %393, %394 : vector<8x16xf32>
    %396 = vector.extract_strided_slice %392 {offsets = [0, 32], sizes = [8, 16], strides = [1, 1]} : vector<8x80xf32> to vector<8x16xf32>
    %397 = arith.addf %395, %396 : vector<8x16xf32>
    %398 = vector.extract_strided_slice %392 {offsets = [0, 48], sizes = [8, 16], strides = [1, 1]} : vector<8x80xf32> to vector<8x16xf32>
    %399 = arith.addf %397, %398 : vector<8x16xf32>
    %400 = vector.extract_strided_slice %392 {offsets = [0, 64], sizes = [8, 16], strides = [1, 1]} : vector<8x80xf32> to vector<8x16xf32>
    %401 = arith.addf %399, %400 : vector<8x16xf32>
    %402 = arith.addf %347, %401 : vector<8x16xf32>
    %cst_119 = arith.constant 5.000000e-01 : f32
    %403 = vector.broadcast %cst_119 : f32 to vector<8x16xf32>
    %404 = arith.mulf %403, %402 : vector<8x16xf32>
    %405 = arith.addf %351, %404 : vector<8x16xf32>
    %c6_i32 = arith.constant 6 : i32
    %406 = arith.index_cast %c6_i32 : i32 to index
    %c0_120 = arith.constant 0 : index
    %c0_121 = arith.constant 0 : index
    %407 = vector.load %arg1[%406, %c0_120, %c0_121] : memref<8x8x80xf32, #tpu.memory_space<vmem>>, vector<1x8x80xf32>
    %408 = vector.shape_cast %407 : vector<1x8x80xf32> to vector<8x80xf32>
    %cst_122 = arith.constant 2.000000e+00 : f32
    %409 = vector.broadcast %cst_122 : f32 to vector<8x16xf32>
    %410 = arith.mulf %409, %405 : vector<8x16xf32>
    %411 = arith.subf %410, %358 : vector<8x16xf32>
    %412 = arith.addf %411, %401 : vector<8x16xf32>
    %c1_i32_123 = arith.constant 1 : i32
    %413 = arith.addi %c6_i32, %c1_i32_123 : i32
    %414 = arith.sitofp %413 : i32 to f32
    %415 = vector.broadcast %414 : f32 to vector<1x32xf32>
    %416 = arith.mulf %415, %6 : vector<1x32xf32>
    %417 = arith.truncf %412 : vector<8x16xf32> to vector<8x16xbf16>
    %cst_124 = arith.constant dense<0.000000e+00> : vector<8x32xf32>
    %418 = tpu.matmul %417, %7, %cst_124 {dimension_numbers = #tpu.dot_dimension_numbers<[1], [0], [0], [1], [0, 0, 1, 1], [], []>} : vector<8x16xbf16>, vector<16x32xbf16>, vector<8x32xf32> -> vector<8x32xf32>
    %419 = vector.broadcast %416 : vector<1x32xf32> to vector<8x32xf32>
    %420 = arith.addf %419, %418 : vector<8x32xf32>
    %421 = vector.broadcast %8 : vector<1x32xf32> to vector<8x32xf32>
    %422 = arith.addf %420, %421 : vector<8x32xf32>
    %cst_125 = arith.constant 0.000000e+00 : f32
    %423 = vector.broadcast %cst_125 : f32 to vector<8x32xf32>
    %424 = arith.subf %423, %422 : vector<8x32xf32>
    %425 = math.exp %424 : vector<8x32xf32>
    %cst_126 = arith.constant 1.000000e+00 : f32
    %426 = vector.broadcast %cst_126 : f32 to vector<8x32xf32>
    %427 = arith.addf %426, %425 : vector<8x32xf32>
    %428 = tpu.reciprocal %427 {approx = true} : vector<8x32xf32> -> vector<8x32xf32>
    %429 = arith.mulf %422, %428 : vector<8x32xf32>
    %430 = arith.truncf %429 : vector<8x32xf32> to vector<8x32xbf16>
    %cst_127 = arith.constant dense<0.000000e+00> : vector<8x32xf32>
    %431 = tpu.matmul %430, %9, %cst_127 {dimension_numbers = #tpu.dot_dimension_numbers<[1], [0], [0], [1], [0, 0, 1, 1], [], []>} : vector<8x32xbf16>, vector<32x32xbf16>, vector<8x32xf32> -> vector<8x32xf32>
    %432 = vector.broadcast %10 : vector<1x32xf32> to vector<8x32xf32>
    %433 = arith.addf %431, %432 : vector<8x32xf32>
    %cst_128 = arith.constant 0.000000e+00 : f32
    %434 = vector.broadcast %cst_128 : f32 to vector<8x32xf32>
    %435 = arith.subf %434, %433 : vector<8x32xf32>
    %436 = math.exp %435 : vector<8x32xf32>
    %cst_129 = arith.constant 1.000000e+00 : f32
    %437 = vector.broadcast %cst_129 : f32 to vector<8x32xf32>
    %438 = arith.addf %437, %436 : vector<8x32xf32>
    %439 = tpu.reciprocal %438 {approx = true} : vector<8x32xf32> -> vector<8x32xf32>
    %440 = arith.mulf %433, %439 : vector<8x32xf32>
    %441 = arith.truncf %440 : vector<8x32xf32> to vector<8x32xbf16>
    %cst_130 = arith.constant dense<0.000000e+00> : vector<8x80xf32>
    %442 = tpu.matmul %441, %11, %cst_130 {dimension_numbers = #tpu.dot_dimension_numbers<[1], [0], [0], [1], [0, 0, 1, 1], [], []>} : vector<8x32xbf16>, vector<32x80xbf16>, vector<8x80xf32> -> vector<8x80xf32>
    %443 = vector.broadcast %12 : vector<1x80xf32> to vector<8x80xf32>
    %444 = arith.addf %442, %443 : vector<8x80xf32>
    %445 = math.tanh %444 : vector<8x80xf32>
    %446 = arith.mulf %445, %408 : vector<8x80xf32>
    %447 = vector.extract_strided_slice %446 {offsets = [0, 0], sizes = [8, 16], strides = [1, 1]} : vector<8x80xf32> to vector<8x16xf32>
    %448 = vector.extract_strided_slice %446 {offsets = [0, 16], sizes = [8, 16], strides = [1, 1]} : vector<8x80xf32> to vector<8x16xf32>
    %449 = arith.addf %447, %448 : vector<8x16xf32>
    %450 = vector.extract_strided_slice %446 {offsets = [0, 32], sizes = [8, 16], strides = [1, 1]} : vector<8x80xf32> to vector<8x16xf32>
    %451 = arith.addf %449, %450 : vector<8x16xf32>
    %452 = vector.extract_strided_slice %446 {offsets = [0, 48], sizes = [8, 16], strides = [1, 1]} : vector<8x80xf32> to vector<8x16xf32>
    %453 = arith.addf %451, %452 : vector<8x16xf32>
    %454 = vector.extract_strided_slice %446 {offsets = [0, 64], sizes = [8, 16], strides = [1, 1]} : vector<8x80xf32> to vector<8x16xf32>
    %455 = arith.addf %453, %454 : vector<8x16xf32>
    %456 = arith.addf %401, %455 : vector<8x16xf32>
    %cst_131 = arith.constant 5.000000e-01 : f32
    %457 = vector.broadcast %cst_131 : f32 to vector<8x16xf32>
    %458 = arith.mulf %457, %456 : vector<8x16xf32>
    %459 = arith.addf %405, %458 : vector<8x16xf32>
    %c7_i32 = arith.constant 7 : i32
    %460 = arith.index_cast %c7_i32 : i32 to index
    %c0_132 = arith.constant 0 : index
    %c0_133 = arith.constant 0 : index
    %461 = vector.load %arg1[%460, %c0_132, %c0_133] : memref<8x8x80xf32, #tpu.memory_space<vmem>>, vector<1x8x80xf32>
    %462 = vector.shape_cast %461 : vector<1x8x80xf32> to vector<8x80xf32>
    %cst_134 = arith.constant 2.000000e+00 : f32
    %463 = vector.broadcast %cst_134 : f32 to vector<8x16xf32>
    %464 = arith.mulf %463, %459 : vector<8x16xf32>
    %465 = arith.subf %464, %412 : vector<8x16xf32>
    %466 = arith.addf %465, %455 : vector<8x16xf32>
    %c1_i32_135 = arith.constant 1 : i32
    %467 = arith.addi %c7_i32, %c1_i32_135 : i32
    %468 = arith.sitofp %467 : i32 to f32
    %469 = vector.broadcast %468 : f32 to vector<1x32xf32>
    %470 = arith.mulf %469, %6 : vector<1x32xf32>
    %471 = arith.truncf %466 : vector<8x16xf32> to vector<8x16xbf16>
    %cst_136 = arith.constant dense<0.000000e+00> : vector<8x32xf32>
    %472 = tpu.matmul %471, %7, %cst_136 {dimension_numbers = #tpu.dot_dimension_numbers<[1], [0], [0], [1], [0, 0, 1, 1], [], []>} : vector<8x16xbf16>, vector<16x32xbf16>, vector<8x32xf32> -> vector<8x32xf32>
    %473 = vector.broadcast %470 : vector<1x32xf32> to vector<8x32xf32>
    %474 = arith.addf %473, %472 : vector<8x32xf32>
    %475 = vector.broadcast %8 : vector<1x32xf32> to vector<8x32xf32>
    %476 = arith.addf %474, %475 : vector<8x32xf32>
    %cst_137 = arith.constant 0.000000e+00 : f32
    %477 = vector.broadcast %cst_137 : f32 to vector<8x32xf32>
    %478 = arith.subf %477, %476 : vector<8x32xf32>
    %479 = math.exp %478 : vector<8x32xf32>
    %cst_138 = arith.constant 1.000000e+00 : f32
    %480 = vector.broadcast %cst_138 : f32 to vector<8x32xf32>
    %481 = arith.addf %480, %479 : vector<8x32xf32>
    %482 = tpu.reciprocal %481 {approx = true} : vector<8x32xf32> -> vector<8x32xf32>
    %483 = arith.mulf %476, %482 : vector<8x32xf32>
    %484 = arith.truncf %483 : vector<8x32xf32> to vector<8x32xbf16>
    %cst_139 = arith.constant dense<0.000000e+00> : vector<8x32xf32>
    %485 = tpu.matmul %484, %9, %cst_139 {dimension_numbers = #tpu.dot_dimension_numbers<[1], [0], [0], [1], [0, 0, 1, 1], [], []>} : vector<8x32xbf16>, vector<32x32xbf16>, vector<8x32xf32> -> vector<8x32xf32>
    %486 = vector.broadcast %10 : vector<1x32xf32> to vector<8x32xf32>
    %487 = arith.addf %485, %486 : vector<8x32xf32>
    %cst_140 = arith.constant 0.000000e+00 : f32
    %488 = vector.broadcast %cst_140 : f32 to vector<8x32xf32>
    %489 = arith.subf %488, %487 : vector<8x32xf32>
    %490 = math.exp %489 : vector<8x32xf32>
    %cst_141 = arith.constant 1.000000e+00 : f32
    %491 = vector.broadcast %cst_141 : f32 to vector<8x32xf32>
    %492 = arith.addf %491, %490 : vector<8x32xf32>
    %493 = tpu.reciprocal %492 {approx = true} : vector<8x32xf32> -> vector<8x32xf32>
    %494 = arith.mulf %487, %493 : vector<8x32xf32>
    %495 = arith.truncf %494 : vector<8x32xf32> to vector<8x32xbf16>
    %cst_142 = arith.constant dense<0.000000e+00> : vector<8x80xf32>
    %496 = tpu.matmul %495, %11, %cst_142 {dimension_numbers = #tpu.dot_dimension_numbers<[1], [0], [0], [1], [0, 0, 1, 1], [], []>} : vector<8x32xbf16>, vector<32x80xbf16>, vector<8x80xf32> -> vector<8x80xf32>
    %497 = vector.broadcast %12 : vector<1x80xf32> to vector<8x80xf32>
    %498 = arith.addf %496, %497 : vector<8x80xf32>
    %499 = math.tanh %498 : vector<8x80xf32>
    %500 = arith.mulf %499, %462 : vector<8x80xf32>
    %501 = vector.extract_strided_slice %500 {offsets = [0, 0], sizes = [8, 16], strides = [1, 1]} : vector<8x80xf32> to vector<8x16xf32>
    %502 = vector.extract_strided_slice %500 {offsets = [0, 16], sizes = [8, 16], strides = [1, 1]} : vector<8x80xf32> to vector<8x16xf32>
    %503 = arith.addf %501, %502 : vector<8x16xf32>
    %504 = vector.extract_strided_slice %500 {offsets = [0, 32], sizes = [8, 16], strides = [1, 1]} : vector<8x80xf32> to vector<8x16xf32>
    %505 = arith.addf %503, %504 : vector<8x16xf32>
    %506 = vector.extract_strided_slice %500 {offsets = [0, 48], sizes = [8, 16], strides = [1, 1]} : vector<8x80xf32> to vector<8x16xf32>
    %507 = arith.addf %505, %506 : vector<8x16xf32>
    %508 = vector.extract_strided_slice %500 {offsets = [0, 64], sizes = [8, 16], strides = [1, 1]} : vector<8x80xf32> to vector<8x16xf32>
    %509 = arith.addf %507, %508 : vector<8x16xf32>
    %510 = arith.addf %455, %509 : vector<8x16xf32>
    %cst_143 = arith.constant 5.000000e-01 : f32
    %511 = vector.broadcast %cst_143 : f32 to vector<8x16xf32>
    %512 = arith.mulf %511, %510 : vector<8x16xf32>
    %513 = arith.addf %459, %512 : vector<8x16xf32>
    %c8_i32 = arith.constant 8 : i32
    %cst_144 = arith.constant dense<0.000000e+00> : vector<8x1xf32>
    %514 = tpu.matmul %513, %13, %cst_144 {dimension_numbers = #tpu.dot_dimension_numbers<[1], [0], [0], [1], [0, 0, 1, 1], [], []>} : vector<8x16xf32>, vector<16x1xf32>, vector<8x1xf32> -> vector<8x1xf32>
    %515 = vector.broadcast %14 : vector<1x1xf32> to vector<8x1xf32>
    %516 = arith.addf %514, %515 : vector<8x1xf32>
    %cst_145 = arith.constant dense<0.000000e+00> : vector<1xf32>
    %517 = vector.multi_reduction <add>, %516, %cst_145 [0] : vector<8x1xf32> to vector<1xf32>
    %518 = vector.shape_cast %517 : vector<1xf32> to vector<1x1xf32>
    %cst_146 = arith.constant 1.250000e-01 : f32
    %519 = vector.broadcast %cst_146 : f32 to vector<1x1xf32>
    %520 = arith.mulf %518, %519 : vector<1x1xf32>
    %c0_147 = arith.constant 0 : index
    %c0_148 = arith.constant 0 : index
    %521 = vector.load %arg17[%c0_147, %c0_148] : memref<1x1xf32, #tpu.memory_space<vmem>>, vector<1x1xf32>
    tpu.vector_store %arg17[%c0_147, %c0_148], %520 {strides = array<i32>} : memref<1x1xf32, #tpu.memory_space<vmem>>, vector<1x1xf32>,
    return
  }
}

</mosaic_0001>

<llo_original>
// kernel: tpu_custom_call.1
$region0: #{tpu_custom_call.1}
  #allocation0 [shape = 'u32[]', space=smem, size = 0x4, offset = 0x4, fixed_abs, tag = 'smem constant byte address 0x4 - core index']
  #allocation1 [shape = 'u32[144,128]{1,0:T(1,128)}', space=vmem, size = 0x12000, scoped, tag = 'internal scratch']
  #allocation2 [shape = 'f32[1,1]{1,0:T(1,128)S(1)}', space=vmem, size = 0x200, scoped, tag = 'scoped memory for tpu_custom_call.1']
  %s0 = inlined_call_operand.hbm [shape: f32[8,5], index: 0, kind: input, shape index: {}]
  %s1 = inlined_call_operand.vmem [shape: f32[8,8,80], index: 1, kind: input, shape index: {}]
  %s2 = inlined_call_operand.hbm [shape: f32[5,32], index: 2, kind: input, shape index: {}]
  %s3 = inlined_call_operand.hbm [shape: f32[1,32], index: 3, kind: input, shape index: {}]
  %s4 = inlined_call_operand.hbm [shape: f32[32,32], index: 4, kind: input, shape index: {}]
  %s5 = inlined_call_operand.vmem [shape: f32[1,32], index: 5, kind: input, shape index: {}]
  %s6 = inlined_call_operand.vmem [shape: f32[32,16], index: 6, kind: input, shape index: {}]
  %s7 = inlined_call_operand.vmem [shape: f32[1,16], index: 7, kind: input, shape index: {}]
  %s8 = inlined_call_operand.hbm [shape: f32[1,32], index: 8, kind: input, shape index: {}]
  %s9 = inlined_call_operand.hbm [shape: bf16[16,32], index: 9, kind: input, shape index: {}]
  %s10 = inlined_call_operand.hbm [shape: f32[1,32], index: 10, kind: input, shape index: {}]
  %s11 = inlined_call_operand.vmem [shape: bf16[32,32], index: 11, kind: input, shape index: {}]
  %s12 = inlined_call_operand.hbm [shape: f32[1,32], index: 12, kind: input, shape index: {}]
  %s13 = inlined_call_operand.vmem [shape: bf16[32,80], index: 13, kind: input, shape index: {}]
  %s14 = inlined_call_operand.vmem [shape: f32[1,80], index: 14, kind: input, shape index: {}]
  %s15 = inlined_call_operand.vmem [shape: f32[16,1], index: 15, kind: input, shape index: {}]
  %s16 = inlined_call_operand.<no memory space> [shape: f32[1,1], index: 16, kind: input, shape index: {}]
  %s17 = inlined_call_operand.hbm [shape: f32[1,1], index: 17, kind: output, shape index: {}]
  %s18 = sld [smem:[#allocation0]]
  $region110: #{tpu_custom_call.1} parent=0
    _
  %s20 = ssub.s32 1, %s18
  %s21 = scalar_select 0, %s20, %s18
  %v22 = vstv %s16
  %23 = vst [vmem:[#allocation2] sm:$0x1] %v22
  $region1: #{tpu_custom_call.1} parent=0
    #allocation3 [shape = 'u8[4096]{0}', space=vmem, size = 0x1000, scoped, tag = 'input window, operand 0, single buffered']
    #allocation4 [shape = 's32[1]{0}', space=sflag, size = 0x4, scoped, tag = 'scoped memory for tpu_custom_call.1']
    #allocation5 [shape = 's32[1]{0}', space=sflag, size = 0x4, scoped, tag = 'scoped memory for tpu_custom_call.1']
    #allocation6 [shape = 'u8[4096]{0}', space=vmem, size = 0x1000, scoped, tag = 'input window, operand 2, single buffered']
    #allocation7 [shape = 's32[1]{0}', space=sflag, size = 0x4, scoped, tag = 'scoped memory for tpu_custom_call.1']
    #allocation8 [shape = 'u8[512]{0}', space=vmem, size = 0x400, scoped, tag = 'input window, operand 3, single buffered']
    #allocation9 [shape = 'u8[16384]{0}', space=vmem, size = 0x4000, scoped, tag = 'input window, operand 4, single buffered']
    #allocation10 [shape = 's32[1]{0}', space=sflag, size = 0x4, scoped, tag = 'scoped memory for tpu_custom_call.1']
    #allocation11 [shape = 'u8[512]{0}', space=vmem, size = 0x400, scoped, tag = 'input window, operand 8, single buffered']
    #allocation12 [shape = 'u8[4096]{0}', space=vmem, size = 0x1000, scoped, tag = 'input window, operand 9, single buffered']
    #allocation13 [shape = 's32[1]{0}', space=sflag, size = 0x4, scoped, tag = 'scoped memory for tpu_custom_call.1']
    #allocation14 [shape = 'u8[512]{0}', space=vmem, size = 0x400, scoped, tag = 'input window, operand 10, single buffered']
    #allocation15 [shape = 'u8[512]{0}', space=vmem, size = 0x400, scoped, tag = 'input window, operand 12, single buffered']
    #allocation16 [shape = 's32[1]{0}', space=sflag, size = 0x4, scoped, tag = 'scoped memory for tpu_custom_call.1']
    #allocation17 [shape = 'u8[512]{0}', space=vmem, size = 0x400, scoped, tag = 'output window, operand 0, single buffered']
    %24 = vsyncpa [#allocation4], 0
    %25 = vsyncpa [#allocation7], 0
    %26 = vsyncpa [#allocation10], 0
    %27 = vsyncpa [#allocation13], 0
    %28 = vsyncpa [#allocation16], 0
    %29 = vsyncpa [#allocation5], 0
    // Predicated region
    $region2: #{tpu_custom_call.1} parent=1 // pred_check
      _
    $region3: #{tpu_custom_call.1} parent=1 // pred_check_branch
      %31 = sbr.rel (0) target = $region5
    $region4: #{tpu_custom_call.1} parent=1 // pred_region
      %s33 = ssub.s32 128, 128
      %34 = vsyncadd [#allocation4], %s33
      %s36 = sshll.u32 [#allocation3], 4
      %s37 = int_to_ptr.vmem [resolvable:$true] %s36
      %39 = dma.hbm_to_vmem [thread:$0]  %s0, 128, %s37, [#allocation4]
    $region5: #{tpu_custom_call.1} parent=1 // pred_fallthru
      _
    // Predicated region
    $region6: #{tpu_custom_call.1} parent=1 // pred_check
      _
    $region7: #{tpu_custom_call.1} parent=1 // pred_check_branch
      %41 = sbr.rel (0) target = $region9
    $region8: #{tpu_custom_call.1} parent=1 // pred_region
      _
    $region9: #{tpu_custom_call.1} parent=1 // pred_fallthru
      _
    // Predicated region
    $region10: #{tpu_custom_call.1} parent=1 // pred_check
      _
    $region11: #{tpu_custom_call.1} parent=1 // pred_check_branch
      %43 = sbr.rel (0) target = $region13
    $region12: #{tpu_custom_call.1} parent=1 // pred_region
      %s45 = ssub.s32 128, 128
      %46 = vsyncadd [#allocation7], %s45
      %s48 = sshll.u32 [#allocation6], 4
      %s49 = int_to_ptr.vmem [resolvable:$true] %s48
      %51 = dma.hbm_to_vmem [thread:$0]  %s2, 128, %s49, [#allocation7]
    $region13: #{tpu_custom_call.1} parent=1 // pred_fallthru
      _
    // Predicated region
    $region14: #{tpu_custom_call.1} parent=1 // pred_check
      _
    $region15: #{tpu_custom_call.1} parent=1 // pred_check_branch
      %53 = sbr.rel (0) target = $region17
    $region16: #{tpu_custom_call.1} parent=1 // pred_region
      %s55 = ssub.s32 16, 16
      %56 = vsyncadd [#allocation7], %s55
      %s58 = sshll.u32 [#allocation8], 4
      %s59 = int_to_ptr.vmem [resolvable:$true] %s58
      %61 = dma.hbm_to_vmem [thread:$0]  %s3, 16, %s59, [#allocation7]
    $region17: #{tpu_custom_call.1} parent=1 // pred_fallthru
      _
    // Predicated region
    $region18: #{tpu_custom_call.1} parent=1 // pred_check
      _
    $region19: #{tpu_custom_call.1} parent=1 // pred_check_branch
      %63 = sbr.rel (0) target = $region21
    $region20: #{tpu_custom_call.1} parent=1 // pred_region
      %s65 = ssub.s32 512, 512
      %66 = vsyncadd [#allocation10], %s65
      %s67 = sshll.u32 [#allocation9], 4
      %s68 = int_to_ptr.vmem [resolvable:$true] %s67
      %73 = dma.hbm_to_vmem [thread:$0]  %s4, 512, %s68, [#allocation10], 128, 128, 8
    $region21: #{tpu_custom_call.1} parent=1 // pred_fallthru
      _
    // Predicated region
    $region22: #{tpu_custom_call.1} parent=1 // pred_check
      _
    $region23: #{tpu_custom_call.1} parent=1 // pred_check_branch
      %75 = sbr.rel (0) target = $region25
    $region24: #{tpu_custom_call.1} parent=1 // pred_region
      _
    $region25: #{tpu_custom_call.1} parent=1 // pred_fallthru
      _
    // Predicated region
    $region26: #{tpu_custom_call.1} parent=1 // pred_check
      _
    $region27: #{tpu_custom_call.1} parent=1 // pred_check_branch
      %77 = sbr.rel (0) target = $region29
    $region28: #{tpu_custom_call.1} parent=1 // pred_region
      _
    $region29: #{tpu_custom_call.1} parent=1 // pred_fallthru
      _
    // Predicated region
    $region30: #{tpu_custom_call.1} parent=1 // pred_check
      _
    $region31: #{tpu_custom_call.1} parent=1 // pred_check_branch
      %79 = sbr.rel (0) target = $region33
    $region32: #{tpu_custom_call.1} parent=1 // pred_region
      _
    $region33: #{tpu_custom_call.1} parent=1 // pred_fallthru
      _
    // Predicated region
    $region34: #{tpu_custom_call.1} parent=1 // pred_check
      _
    $region35: #{tpu_custom_call.1} parent=1 // pred_check_branch
      %81 = sbr.rel (0) target = $region37
    $region36: #{tpu_custom_call.1} parent=1 // pred_region
      %s83 = ssub.s32 16, 16
      %84 = vsyncadd [#allocation10], %s83
      %s86 = sshll.u32 [#allocation11], 4
      %s87 = int_to_ptr.vmem [resolvable:$true] %s86
      %89 = dma.hbm_to_vmem [thread:$0]  %s8, 16, %s87, [#allocation10]
    $region37: #{tpu_custom_call.1} parent=1 // pred_fallthru
      _
    // Predicated region
    $region38: #{tpu_custom_call.1} parent=1 // pred_check
      _
    $region39: #{tpu_custom_call.1} parent=1 // pred_check_branch
      %91 = sbr.rel (0) target = $region41
    $region40: #{tpu_custom_call.1} parent=1 // pred_region
      %s93 = ssub.s32 128, 128
      %94 = vsyncadd [#allocation13], %s93
      %s95 = sshll.u32 [#allocation12], 4
      %s96 = int_to_ptr.vmem [resolvable:$true] %s95
      %101 = dma.hbm_to_vmem [thread:$0]  %s9, 128, %s96, [#allocation13], 64, 64, 4
    $region41: #{tpu_custom_call.1} parent=1 // pred_fallthru
      _
    // Predicated region
    $region42: #{tpu_custom_call.1} parent=1 // pred_check
      _
    $region43: #{tpu_custom_call.1} parent=1 // pred_check_branch
      %103 = sbr.rel (0) target = $region45
    $region44: #{tpu_custom_call.1} parent=1 // pred_region
      %s105 = ssub.s32 16, 16
      %106 = vsyncadd [#allocation13], %s105
      %s108 = sshll.u32 [#allocation14], 4
      %s109 = int_to_ptr.vmem [resolvable:$true] %s108
      %111 = dma.hbm_to_vmem [thread:$0]  %s10, 16, %s109, [#allocation13]
    $region45: #{tpu_custom_call.1} parent=1 // pred_fallthru
      _
    // Predicated region
    $region46: #{tpu_custom_call.1} parent=1 // pred_check
      _
    $region47: #{tpu_custom_call.1} parent=1 // pred_check_branch
      %113 = sbr.rel (0) target = $region49
    $region48: #{tpu_custom_call.1} parent=1 // pred_region
      _
    $region49: #{tpu_custom_call.1} parent=1 // pred_fallthru
      _
    // Predicated region
    $region50: #{tpu_custom_call.1} parent=1 // pred_check
      _
    $region51: #{tpu_custom_call.1} parent=1 // pred_check_branch
      %115 = sbr.rel (0) target = $region53
    $region52: #{tpu_custom_call.1} parent=1 // pred_region
      %s117 = ssub.s32 16, 16
      %118 = vsyncadd [#allocation16], %s117
      %s120 = sshll.u32 [#allocation15], 4
      %s121 = int_to_ptr.vmem [resolvable:$true] %s120
      %123 = dma.hbm_to_vmem [thread:$0]  %s12, 16, %s121, [#allocation16]
    $region53: #{tpu_custom_call.1} parent=1 // pred_fallthru
      _
    // Predicated region
    $region54: #{tpu_custom_call.1} parent=1 // pred_check
      _
    $region55: #{tpu_custom_call.1} parent=1 // pred_check_branch
      %125 = sbr.rel (0) target = $region57
    $region56: #{tpu_custom_call.1} parent=1 // pred_region
      _
    $region57: #{tpu_custom_call.1} parent=1 // pred_fallthru
      _
    // Predicated region
    $region58: #{tpu_custom_call.1} parent=1 // pred_check
      _
    $region59: #{tpu_custom_call.1} parent=1 // pred_check_branch
      %127 = sbr.rel (0) target = $region61
    $region60: #{tpu_custom_call.1} parent=1 // pred_region
      _
    $region61: #{tpu_custom_call.1} parent=1 // pred_fallthru
      _
    // Predicated region
    $region62: #{tpu_custom_call.1} parent=1 // pred_check
      _
    $region63: #{tpu_custom_call.1} parent=1 // pred_check_branch
      %129 = sbr.rel (0) target = $region65
    $region64: #{tpu_custom_call.1} parent=1 // pred_region
      _
    $region65: #{tpu_custom_call.1} parent=1 // pred_fallthru
      _
    // Predicated region
    $region66: #{tpu_custom_call.1} parent=1 // pred_check
      _
    $region67: #{tpu_custom_call.1} parent=1 // pred_check_branch
      %131 = sbr.rel (0) target = $region69
    $region68: #{tpu_custom_call.1} parent=1 // pred_region
      _
    $region69: #{tpu_custom_call.1} parent=1 // pred_fallthru
      _
    // Predicated region
    $region70: #{tpu_custom_call.1} parent=1 // pred_check
      _
    $region71: #{tpu_custom_call.1} parent=1 // pred_check_branch
      %133 = sbr.rel (0) target = $region73
    $region72: #{tpu_custom_call.1} parent=1 // pred_region
      %134 = dma.done [#allocation4], 128
    $region73: #{tpu_custom_call.1} parent=1 // pred_fallthru
      _
    // Predicated region
    $region74: #{tpu_custom_call.1} parent=1 // pred_check
      _
    $region75: #{tpu_custom_call.1} parent=1 // pred_check_branch
      %136 = sbr.rel (0) target = $region77
    $region76: #{tpu_custom_call.1} parent=1 // pred_region
      %137 = dma.done [#allocation7], 128
    $region77: #{tpu_custom_call.1} parent=1 // pred_fallthru
      _
    // Predicated region
    $region78: #{tpu_custom_call.1} parent=1 // pred_check
      _
    $region79: #{tpu_custom_call.1} parent=1 // pred_check_branch
      %139 = sbr.rel (0) target = $region81
    $region80: #{tpu_custom_call.1} parent=1 // pred_region
      %140 = dma.done [#allocation7], 16
    $region81: #{tpu_custom_call.1} parent=1 // pred_fallthru
      _
    // Predicated region
    $region82: #{tpu_custom_call.1} parent=1 // pred_check
      _
    $region83: #{tpu_custom_call.1} parent=1 // pred_check_branch
      %142 = sbr.rel (0) target = $region85
    $region84: #{tpu_custom_call.1} parent=1 // pred_region
      %143 = dma.done [#allocation10], 512
    $region85: #{tpu_custom_call.1} parent=1 // pred_fallthru
      _
    // Predicated region
    $region86: #{tpu_custom_call.1} parent=1 // pred_check
      _
    $region87: #{tpu_custom_call.1} parent=1 // pred_check_branch
      %145 = sbr.rel (0) target = $region89
    $region88: #{tpu_custom_call.1} parent=1 // pred_region
      %146 = dma.done [#allocation10], 16
    $region89: #{tpu_custom_call.1} parent=1 // pred_fallthru
      _
    // Predicated region
    $region90: #{tpu_custom_call.1} parent=1 // pred_check
      _
    $region91: #{tpu_custom_call.1} parent=1 // pred_check_branch
      %148 = sbr.rel (0) target = $region93
    $region92: #{tpu_custom_call.1} parent=1 // pred_region
      %149 = dma.done [#allocation13], 128
    $region93: #{tpu_custom_call.1} parent=1 // pred_fallthru
      _
    // Predicated region
    $region94: #{tpu_custom_call.1} parent=1 // pred_check
      _
    $region95: #{tpu_custom_call.1} parent=1 // pred_check_branch
      %151 = sbr.rel (0) target = $region97
    $region96: #{tpu_custom_call.1} parent=1 // pred_region
      %152 = dma.done [#allocation13], 16
    $region97: #{tpu_custom_call.1} parent=1 // pred_fallthru
      _
    // Predicated region
    $region98: #{tpu_custom_call.1} parent=1 // pred_check
      _
    $region99: #{tpu_custom_call.1} parent=1 // pred_check_branch
      %154 = sbr.rel (0) target = $region101
    $region100: #{tpu_custom_call.1} parent=1 // pred_region
      %155 = dma.done [#allocation16], 16
    $region101: #{tpu_custom_call.1} parent=1 // pred_fallthru
      _
    %v157 = vld [vmem:[#allocation6] sm:$0x1f]
    %v158 = vld [vmem:[#allocation8] sm:$0x1]
    %v159 = vld [vmem:[#allocation9] sm:$0xff]
    %v160 = vld [vmem:[#allocation9 + $0x8] sm:$0xff]
    %v161 = vld [vmem:[#allocation9 + $0x10] sm:$0xff]
    %v162 = vld [vmem:[#allocation9 + $0x18] sm:$0xff]
    %v163 = vld [vmem:[%s5] sm:$0x1]
    %v164 = vld [vmem:[%s6] sm:$0xff]
    %v165 = vld [vmem:[%s6 + $0x8] sm:$0xff]
    %v166 = vld [vmem:[%s6 + $0x10] sm:$0xff]
    %v167 = vld [vmem:[%s6 + $0x18] sm:$0xff]
    %v168 = vld [vmem:[%s7] sm:$0x1]
    %v169 = vld [vmem:[#allocation11] sm:$0x1]
    %v170 = vld [vmem:[#allocation12] sm:$0xf]
    %v171 = vld [vmem:[#allocation12 + $0x4] sm:$0xf]
    %v172 = vld [vmem:[#allocation14] sm:$0x1]
    %v173 = vld [vmem:[%s11] sm:$0xf]
    %v174 = vld [vmem:[%s11 + $0x4] sm:$0xf]
    %v175 = vld [vmem:[%s11 + $0x8] sm:$0xf]
    %v176 = vld [vmem:[%s11 + $0xc] sm:$0xf]
    %v177 = vld [vmem:[#allocation15] sm:$0x1]
    %v178 = vld [vmem:[%s13] sm:$0xf]
    %v179 = vld [vmem:[%s13 + $0x4] sm:$0xf]
    %v180 = vld [vmem:[%s13 + $0x8] sm:$0xf]
    %v181 = vld [vmem:[%s13 + $0xc] sm:$0xf]
    %v182 = vld [vmem:[%s14] sm:$0x1]
    %v183 = vld [vmem:[%s15] sm:$0xff]
    %v184 = vld [vmem:[%s15 + $0x8] sm:$0xff]
    %v185 = vld [vmem:[#allocation2] sm:$0x1]
    %v186 = vld [vmem:[#allocation3] sm:$0xff]
    %v188 = vlaneseq
    %v189 = vshrl.u32 %v188, 7
    %v190 = vsub.s32 0, %v189
    %v191 = vrot.slane %v158, %v190
    %vm193 = vcmask 39936
    %v195 = vsel %vm193, %v186, 0
    %vm197 = vcmask 1044480
    %v199 = vsel %vm197, %v157, 0
    %201 = vmatprep.subr.mxu0 0.0
    %202 = vmatpush1.msra.mxu0 %v199
    %203 = vmatprep.subr.mxu0 0.0
    %204 = vmatpush1.msra.mxu0 0.0
    %205 = vmatprep.subr.mxu0 0.0
    %206 = vmatpush1.msra.mxu0 0.0
    %207 = vmatprep.subr.mxu0 0.0
    %208 = vmatpush1.msra.mxu0 0.0
    %209 = vmatprep.subr.mxu0 0.0
    %210 = vmatpush1.msra.mxu0 0.0
    %211 = vmatprep.subr.mxu0 0.0
    %212 = vmatpush1.msra.mxu0 0.0
    %213 = vmatprep.subr.mxu0 0.0
    %214 = vmatpush1.msra.mxu0 0.0
    %215 = vmatprep.subr.mxu0 0.0
    %216 = vmatpush1.msra.mxu0 0.0
    %217 = vmatprep.subr.mxu0 0.0
    %218 = vmatpush1.msra.mxu0 0.0
    %219 = vmatprep.subr.mxu0 0.0
    %220 = vmatpush1.msra.mxu0 0.0
    %221 = vmatprep.subr.mxu0 0.0
    %222 = vmatpush1.msra.mxu0 0.0
    %223 = vmatprep.subr.mxu0 0.0
    %224 = vmatpush1.msra.mxu0 0.0
    %225 = vmatprep.subr.mxu0 0.0
    %226 = vmatpush1.msra.mxu0 0.0
    %227 = vmatprep.subr.mxu0 0.0
    %228 = vmatpush1.msra.mxu0 0.0
    %229 = vmatprep.subr.mxu0 0.0
    %230 = vmatpush1.msra.mxu0 0.0
    %231 = vmatprep.subr.mxu0 0.0
    %232 = vmatpush1.msra.mxu0 0.0
    %233 = vmatprep.subr.mxu0 0.0
    %234 = vmatpush1.msra.mxu0 0.0
    %235 = vmatprep.subr.mxu0 0.0
    %236 = vmatpush1.msra.mxu0 0.0
    %237 = vmatprep.subr.mxu0 0.0
    %238 = vmatpush1.msra.mxu0 0.0
    %239 = vmatprep.subr.mxu0 0.0
    %240 = vmatpush1.msra.mxu0 0.0
    %241 = vmatprep.subr.mxu0 0.0
    %242 = vmatpush1.msra.mxu0 0.0
    %243 = vmatprep.subr.mxu0 0.0
    %244 = vmatpush1.msra.mxu0 0.0
    %245 = vmatprep.subr.mxu0 0.0
    %246 = vmatpush1.msra.mxu0 0.0
    %247 = vmatprep.subr.mxu0 0.0
    %248 = vmatpush1.msra.mxu0 0.0
    %249 = vmatprep.subr.mxu0 0.0
    %250 = vmatpush1.msra.mxu0 0.0
    %251 = vmatprep.subr.mxu0 0.0
    %252 = vmatpush1.msra.mxu0 0.0
    %253 = vmatprep.subr.mxu0 0.0
    %254 = vmatpush1.msra.mxu0 0.0
    %255 = vmatprep.subr.mxu0 0.0
    %256 = vmatpush1.msra.mxu0 0.0
    %257 = vmatprep.subr.mxu0 0.0
    %258 = vmatpush1.msra.mxu0 0.0
    %259 = vmatprep.subr.mxu0 0.0
    %260 = vmatpush1.msra.mxu0 0.0
    %261 = vmatprep.subr.mxu0 0.0
    %262 = vmatpush1.msra.mxu0 0.0
    %263 = vmatprep.subr.mxu0 0.0
    %264 = vmatpush1.msra.mxu0 0.0
    %265 = vmatprep.mubr.f32.mxu0 0.0
    %266 = vmatmul.mubr.f32.gmra.mrb[0].mxu0 %v195
    %v267 = vpop.f32.mrb[0].mxu0
    %v268 = vadd.f32 %v191, %v267
    %v269 = vpop.f32.mrb[0].mxu0
    %270 = vdwg.mxu0
    %v271 = vsub.f32 0.0, %v268
    %v272 = vmul.f32 %v271, 1.442695
    %v273 = vpow.pop %v272
    %v274 = vadd.f32 %v273, 1.0
    %v275 = vrcp.pop %v274
    %v276 = vmul.f32 %v268, %v275
    %v278 = vlaneseq
    %v279 = vshrl.u32 %v278, 7
    %v280 = vsub.s32 0, %v279
    %v281 = vrot.slane %v163, %v280
    %vm283 = vcmask 261120
    %v285 = vsel %vm283, %v276, 0
    %287 = vmatprep.subr.mxu0 0.0
    %288 = vmatpush1.msra.mxu0 %v159
    %289 = vmatprep.subr.mxu0 0.0
    %290 = vmatpush1.msra.mxu0 %v160
    %291 = vmatprep.subr.mxu0 0.0
    %292 = vmatpush1.msra.mxu0 %v161
    %293 = vmatprep.subr.mxu0 0.0
    %294 = vmatpush1.msra.mxu0 %v162
    %295 = vmatprep.subr.mxu0 0.0
    %296 = vmatpush1.msra.mxu0 0.0
    %297 = vmatprep.subr.mxu0 0.0
    %298 = vmatpush1.msra.mxu0 0.0
    %299 = vmatprep.subr.mxu0 0.0
    %300 = vmatpush1.msra.mxu0 0.0
    %301 = vmatprep.subr.mxu0 0.0
    %302 = vmatpush1.msra.mxu0 0.0
    %303 = vmatprep.subr.mxu0 0.0
    %304 = vmatpush1.msra.mxu0 0.0
    %305 = vmatprep.subr.mxu0 0.0
    %306 = vmatpush1.msra.mxu0 0.0
    %307 = vmatprep.subr.mxu0 0.0
    %308 = vmatpush1.msra.mxu0 0.0
    %309 = vmatprep.subr.mxu0 0.0
    %310 = vmatpush1.msra.mxu0 0.0
    %311 = vmatprep.subr.mxu0 0.0
    %312 = vmatpush1.msra.mxu0 0.0
    %313 = vmatprep.subr.mxu0 0.0
    %314 = vmatpush1.msra.mxu0 0.0
    %315 = vmatprep.subr.mxu0 0.0
    %316 = vmatpush1.msra.mxu0 0.0
    %317 = vmatprep.subr.mxu0 0.0
    %318 = vmatpush1.msra.mxu0 0.0
    %319 = vmatprep.subr.mxu0 0.0
    %320 = vmatpush1.msra.mxu0 0.0
    %321 = vmatprep.subr.mxu0 0.0
    %322 = vmatpush1.msra.mxu0 0.0
    %323 = vmatprep.subr.mxu0 0.0
    %324 = vmatpush1.msra.mxu0 0.0
    %325 = vmatprep.subr.mxu0 0.0
    %326 = vmatpush1.msra.mxu0 0.0
    %327 = vmatprep.subr.mxu0 0.0
    %328 = vmatpush1.msra.mxu0 0.0
    %329 = vmatprep.subr.mxu0 0.0
    %330 = vmatpush1.msra.mxu0 0.0
    %331 = vmatprep.subr.mxu0 0.0
    %332 = vmatpush1.msra.mxu0 0.0
    %333 = vmatprep.subr.mxu0 0.0
    %334 = vmatpush1.msra.mxu0 0.0
    %335 = vmatprep.subr.mxu0 0.0
    %336 = vmatpush1.msra.mxu0 0.0
    %337 = vmatprep.subr.mxu0 0.0
    %338 = vmatpush1.msra.mxu0 0.0
    %339 = vmatprep.subr.mxu0 0.0
    %340 = vmatpush1.msra.mxu0 0.0
    %341 = vmatprep.subr.mxu0 0.0
    %342 = vmatpush1.msra.mxu0 0.0
    %343 = vmatprep.subr.mxu0 0.0
    %344 = vmatpush1.msra.mxu0 0.0
    %345 = vmatprep.subr.mxu0 0.0
    %346 = vmatpush1.msra.mxu0 0.0
    %347 = vmatprep.subr.mxu0 0.0
    %348 = vmatpush1.msra.mxu0 0.0
    %349 = vmatprep.subr.mxu0 0.0
    %350 = vmatpush1.msra.mxu0 0.0
    %351 = vmatprep.mubr.f32.mxu0 0.0
    %352 = vmatmul.mubr.f32.gmra.mrb[0].mxu0 %v285
    %v353 = vpop.f32.mrb[0].mxu0
    %v354 = vadd.f32 %v281, %v353
    %v355 = vpop.f32.mrb[0].mxu0
    %356 = vdwg.mxu0
    %v357 = vsub.f32 0.0, %v354
    %v358 = vmul.f32 %v357, 1.442695
    %v359 = vpow.pop %v358
    %v360 = vadd.f32 %v359, 1.0
    %v361 = vrcp.pop %v360
    %v362 = vmul.f32 %v354, %v361
    %v364 = vlaneseq
    %v365 = vshrl.u32 %v364, 7
    %v366 = vsub.s32 0, %v365
    %v367 = vrot.slane %v168, %v366
    %v370 = vsel %vm283, %v362, 0
    %372 = vmatprep.subr.mxu0 0.0
    %373 = vmatpush1.msra.mxu0 %v164
    %374 = vmatprep.subr.mxu0 0.0
    %375 = vmatpush1.msra.mxu0 %v165
    %376 = vmatprep.subr.mxu0 0.0
    %377 = vmatpush1.msra.mxu0 %v166
    %378 = vmatprep.subr.mxu0 0.0
    %379 = vmatpush1.msra.mxu0 %v167
    %380 = vmatprep.subr.mxu0 0.0
    %381 = vmatpush1.msra.mxu0 0.0
    %382 = vmatprep.subr.mxu0 0.0
    %383 = vmatpush1.msra.mxu0 0.0
    %384 = vmatprep.subr.mxu0 0.0
    %385 = vmatpush1.msra.mxu0 0.0
    %386 = vmatprep.subr.mxu0 0.0
    %387 = vmatpush1.msra.mxu0 0.0
    %388 = vmatprep.subr.mxu0 0.0
    %389 = vmatpush1.msra.mxu0 0.0
    %390 = vmatprep.subr.mxu0 0.0
    %391 = vmatpush1.msra.mxu0 0.0
    %392 = vmatprep.subr.mxu0 0.0
    %393 = vmatpush1.msra.mxu0 0.0
    %394 = vmatprep.subr.mxu0 0.0
    %395 = vmatpush1.msra.mxu0 0.0
    %396 = vmatprep.subr.mxu0 0.0
    %397 = vmatpush1.msra.mxu0 0.0
    %398 = vmatprep.subr.mxu0 0.0
    %399 = vmatpush1.msra.mxu0 0.0
    %400 = vmatprep.subr.mxu0 0.0
    %401 = vmatpush1.msra.mxu0 0.0
    %402 = vmatprep.subr.mxu0 0.0
    %403 = vmatpush1.msra.mxu0 0.0
    %404 = vmatprep.subr.mxu0 0.0
    %405 = vmatpush1.msra.mxu0 0.0
    %406 = vmatprep.subr.mxu0 0.0
    %407 = vmatpush1.msra.mxu0 0.0
    %408 = vmatprep.subr.mxu0 0.0
    %409 = vmatpush1.msra.mxu0 0.0
    %410 = vmatprep.subr.mxu0 0.0
    %411 = vmatpush1.msra.mxu0 0.0
    %412 = vmatprep.subr.mxu0 0.0
    %413 = vmatpush1.msra.mxu0 0.0
    %414 = vmatprep.subr.mxu0 0.0
    %415 = vmatpush1.msra.mxu0 0.0
    %416 = vmatprep.subr.mxu0 0.0
    %417 = vmatpush1.msra.mxu0 0.0
    %418 = vmatprep.subr.mxu0 0.0
    %419 = vmatpush1.msra.mxu0 0.0
    %420 = vmatprep.subr.mxu0 0.0
    %421 = vmatpush1.msra.mxu0 0.0
    %422 = vmatprep.subr.mxu0 0.0
    %423 = vmatpush1.msra.mxu0 0.0
    %424 = vmatprep.subr.mxu0 0.0
    %425 = vmatpush1.msra.mxu0 0.0
    %426 = vmatprep.subr.mxu0 0.0
    %427 = vmatpush1.msra.mxu0 0.0
    %428 = vmatprep.subr.mxu0 0.0
    %429 = vmatpush1.msra.mxu0 0.0
    %430 = vmatprep.subr.mxu0 0.0
    %431 = vmatpush1.msra.mxu0 0.0
    %432 = vmatprep.subr.mxu0 0.0
    %433 = vmatpush1.msra.mxu0 0.0
    %434 = vmatprep.subr.mxu0 0.0
    %435 = vmatpush1.msra.mxu0 0.0
    %436 = vmatprep.mubr.f32.mxu0 0.0
    %437 = vmatmul.mubr.f32.gmra.mrb[0].mxu0 %v370
    %v438 = vpop.f32.mrb[0].mxu0
    %v439 = vadd.f32 %v367, %v438
    %v440 = vpop.f32.mrb[0].mxu0
    %441 = vdwg.mxu0
    %v442 = vld [vmem:[%s1] sm:$0xff]
    %v443 = vmul.f32 %v169, 0.0
    %v444 = vpack.c.bf16 %v439, %v439
    %v447 = vunpack.c.l.b16 %v170
    %v448 = vunpack.c.l.b16 %v171
    %v449 = vpack.c.b16 %v448, %v447
    %vm451 = vcmask 130048
    %v453 = vsel %vm451, %v444, 0
    %455 = vmatprep.subr.bf16.mxu0 0
    %456 = vmatpush1.bf16.msra.mxu0 %v449
    %457 = vmatprep.subr.bf16.mxu0 0
    %458 = vmatpush1.bf16.msra.mxu0 0
    %459 = vmatprep.subr.bf16.mxu0 0
    %460 = vmatpush1.bf16.msra.mxu0 0
    %461 = vmatprep.subr.bf16.mxu0 0
    %462 = vmatpush1.bf16.msra.mxu0 0
    %463 = vmatprep.subr.bf16.mxu0 0
    %464 = vmatpush1.bf16.msra.mxu0 0
    %465 = vmatprep.subr.bf16.mxu0 0
    %466 = vmatpush1.bf16.msra.mxu0 0
    %467 = vmatprep.subr.bf16.mxu0 0
    %468 = vmatpush1.bf16.msra.mxu0 0
    %469 = vmatprep.subr.bf16.mxu0 0
    %470 = vmatpush1.bf16.msra.mxu0 0
    %471 = vmatprep.subr.bf16.mxu0 0
    %472 = vmatpush1.bf16.msra.mxu0 0
    %473 = vmatprep.subr.bf16.mxu0 0
    %474 = vmatpush1.bf16.msra.mxu0 0
    %475 = vmatprep.subr.bf16.mxu0 0
    %476 = vmatpush1.bf16.msra.mxu0 0
    %477 = vmatprep.subr.bf16.mxu0 0
    %478 = vmatpush1.bf16.msra.mxu0 0
    %479 = vmatprep.subr.bf16.mxu0 0
    %480 = vmatpush1.bf16.msra.mxu0 0
    %481 = vmatprep.subr.bf16.mxu0 0
    %482 = vmatpush1.bf16.msra.mxu0 0
    %483 = vmatprep.subr.bf16.mxu0 0
    %484 = vmatpush1.bf16.msra.mxu0 0
    %485 = vmatprep.subr.bf16.mxu0 0
    %486 = vmatpush1.bf16.msra.mxu0 0
    %487 = vmatprep.mubr.bf16.mxu0 0
    %488 = vmatmul.mubr.bf16.gmra.mrb[0].mxu0 %v453
    %v489 = vpop.f32.mrb[0].mxu0
    %v490 = vadd.f32 0.0, %v489
    %v491 = vpop.f32.mrb[0].mxu0
    %v492 = vpop.f32.mrb[0].mxu0
    %v493 = vpop.f32.mrb[0].mxu0
    %494 = vdwg.mxu0
    %v496 = vlaneseq
    %v497 = vshrl.u32 %v496, 7
    %v498 = vsub.s32 0, %v497
    %v499 = vrot.slane %v443, %v498
    %v501 = vadd.f32 %v499, %v490
    %v503 = vlaneseq
    %v504 = vshrl.u32 %v503, 7
    %v505 = vsub.s32 0, %v504
    %v506 = vrot.slane %v172, %v505
    %v508 = vadd.f32 %v501, %v506
    %v509 = vsub.f32 0.0, %v508
    %v510 = vmul.f32 %v509, 1.442695
    %v511 = vpow.pop %v510
    %v512 = vadd.f32 %v511, 1.0
    %v513 = vrcp.pop %v512
    %v514 = vmul.f32 %v508, %v513
    %v515 = vpack.c.bf16 %v514, %v514
    %v517 = vlaneseq
    %v518 = vshrl.u32 %v517, 7
    %v519 = vsub.s32 0, %v518
    %v520 = vrot.slane %v177, %v519
    %v526 = vunpack.c.l.b16 %v173
    %v527 = vunpack.c.l.b16 %v174
    %v528 = vunpack.c.l.b16 %v175
    %v529 = vunpack.c.l.b16 %v176
    %v530 = vpack.c.b16 %v527, %v526
    %v531 = vpack.c.b16 %v529, %v528
    %v535 = vsel %vm283, %v515, 0
    %537 = vmatprep.subr.bf16.mxu0 0
    %538 = vmatpush1.bf16.msra.mxu0 %v530
    %539 = vmatprep.subr.bf16.mxu0 0
    %540 = vmatpush1.bf16.msra.mxu0 %v531
    %541 = vmatprep.subr.bf16.mxu0 0
    %542 = vmatpush1.bf16.msra.mxu0 0
    %543 = vmatprep.subr.bf16.mxu0 0
    %544 = vmatpush1.bf16.msra.mxu0 0
    %545 = vmatprep.subr.bf16.mxu0 0
    %546 = vmatpush1.bf16.msra.mxu0 0
    %547 = vmatprep.subr.bf16.mxu0 0
    %548 = vmatpush1.bf16.msra.mxu0 0
    %549 = vmatprep.subr.bf16.mxu0 0
    %550 = vmatpush1.bf16.msra.mxu0 0
    %551 = vmatprep.subr.bf16.mxu0 0
    %552 = vmatpush1.bf16.msra.mxu0 0
    %553 = vmatprep.subr.bf16.mxu0 0
    %554 = vmatpush1.bf16.msra.mxu0 0
    %555 = vmatprep.subr.bf16.mxu0 0
    %556 = vmatpush1.bf16.msra.mxu0 0
    %557 = vmatprep.subr.bf16.mxu0 0
    %558 = vmatpush1.bf16.msra.mxu0 0
    %559 = vmatprep.subr.bf16.mxu0 0
    %560 = vmatpush1.bf16.msra.mxu0 0
    %561 = vmatprep.subr.bf16.mxu0 0
    %562 = vmatpush1.bf16.msra.mxu0 0
    %563 = vmatprep.subr.bf16.mxu0 0
    %564 = vmatpush1.bf16.msra.mxu0 0
    %565 = vmatprep.subr.bf16.mxu0 0
    %566 = vmatpush1.bf16.msra.mxu0 0
    %567 = vmatprep.subr.bf16.mxu0 0
    %568 = vmatpush1.bf16.msra.mxu0 0
    %569 = vmatprep.mubr.bf16.mxu0 0
    %570 = vmatmul.mubr.bf16.gmra.mrb[0].mxu0 %v535
    %v571 = vpop.f32.mrb[0].mxu0
    %v572 = vadd.f32 %v520, %v571
    %v573 = vpop.f32.mrb[0].mxu0
    %v574 = vpop.f32.mrb[0].mxu0
    %v575 = vpop.f32.mrb[0].mxu0
    %576 = vdwg.mxu0
    %v577 = vsub.f32 0.0, %v572
    %v578 = vmul.f32 %v577, 1.442695
    %v579 = vpow.pop %v578
    %v580 = vadd.f32 %v579, 1.0
    %v581 = vrcp.pop %v580
    %v582 = vmul.f32 %v572, %v581
    %v583 = vpack.c.bf16 %v582, %v582
    %v585 = vlaneseq
    %v586 = vshrl.u32 %v585, 7
    %v587 = vsub.s32 0, %v586
    %v588 = vrot.slane %v182, %v587
    %v594 = vunpack.c.l.b16 %v178
    %v595 = vunpack.c.l.b16 %v179
    %v596 = vunpack.c.l.b16 %v180
    %v597 = vunpack.c.l.b16 %v181
    %v598 = vpack.c.b16 %v595, %v594
    %v599 = vpack.c.b16 %v597, %v596
    %v603 = vsel %vm283, %v583, 0
    %605 = vmatprep.subr.bf16.mxu0 0
    %606 = vmatpush1.bf16.msra.mxu0 %v598
    %607 = vmatprep.subr.bf16.mxu0 0
    %608 = vmatpush1.bf16.msra.mxu0 %v599
    %609 = vmatprep.subr.bf16.mxu0 0
    %610 = vmatpush1.bf16.msra.mxu0 0
    %611 = vmatprep.subr.bf16.mxu0 0
    %612 = vmatpush1.bf16.msra.mxu0 0
    %613 = vmatprep.subr.bf16.mxu0 0
    %614 = vmatpush1.bf16.msra.mxu0 0
    %615 = vmatprep.subr.bf16.mxu0 0
    %616 = vmatpush1.bf16.msra.mxu0 0
    %617 = vmatprep.subr.bf16.mxu0 0
    %618 = vmatpush1.bf16.msra.mxu0 0
    %619 = vmatprep.subr.bf16.mxu0 0
    %620 = vmatpush1.bf16.msra.mxu0 0
    %621 = vmatprep.subr.bf16.mxu0 0
    %622 = vmatpush1.bf16.msra.mxu0 0
    %623 = vmatprep.subr.bf16.mxu0 0
    %624 = vmatpush1.bf16.msra.mxu0 0
    %625 = vmatprep.subr.bf16.mxu0 0
    %626 = vmatpush1.bf16.msra.mxu0 0
    %627 = vmatprep.subr.bf16.mxu0 0
    %628 = vmatpush1.bf16.msra.mxu0 0
    %629 = vmatprep.subr.bf16.mxu0 0
    %630 = vmatpush1.bf16.msra.mxu0 0
    %631 = vmatprep.subr.bf16.mxu0 0
    %632 = vmatpush1.bf16.msra.mxu0 0
    %633 = vmatprep.subr.bf16.mxu0 0
    %634 = vmatpush1.bf16.msra.mxu0 0
    %635 = vmatprep.subr.bf16.mxu0 0
    %636 = vmatpush1.bf16.msra.mxu0 0
    %637 = vmatprep.mubr.bf16.mxu0 0
    %638 = vmatmul.mubr.bf16.gmra.mrb[0].mxu0 %v603
    %v639 = vpop.f32.mrb[0].mxu0
    %v640 = vadd.f32 %v588, %v639
    %v641 = vpop.f32.mrb[0].mxu0
    %v642 = vpop.f32.mrb[0].mxu0
    %v643 = vpop.f32.mrb[0].mxu0
    %644 = vdwg.mxu0
    %v645 = vtanh.pop %v640
    %v646 = vmul.f32 %v645, %v442
    %648 = vrot.lane.b32.xlu0 %v646, 112
    %v649 = vpop.permute.xlu0 %648
    %v651 = vadd.f32 %v646, %v649
    %652 = vrot.lane.b32.xlu0 %v646, 96
    %v653 = vpop.permute.xlu0 %652
    %v655 = vadd.f32 %v651, %v653
    %656 = vrot.lane.b32.xlu0 %v646, 80
    %v657 = vpop.permute.xlu0 %656
    %v659 = vadd.f32 %v655, %v657
    %660 = vrot.lane.b32.xlu0 %v646, 64
    %v661 = vpop.permute.xlu0 %660
    %v663 = vadd.f32 %v659, %v661
    %v664 = vmul.f32 %v439, 2.0
    %v665 = vsub.f32 %v664, %v439
    %v666 = vadd.f32 %v665, %v663
    %v667 = vpack.c.bf16 %v666, %v666
    %v669 = vsel %vm451, %v667, 0
    %671 = vmatprep.subr.bf16.mxu0 0
    %672 = vmatpush1.bf16.msra.mxu0 %v449
    %673 = vmatprep.subr.bf16.mxu0 0
    %674 = vmatpush1.bf16.msra.mxu0 0
    %675 = vmatprep.subr.bf16.mxu0 0
    %676 = vmatpush1.bf16.msra.mxu0 0
    %677 = vmatprep.subr.bf16.mxu0 0
    %678 = vmatpush1.bf16.msra.mxu0 0
    %679 = vmatprep.subr.bf16.mxu0 0
    %680 = vmatpush1.bf16.msra.mxu0 0
    %681 = vmatprep.subr.bf16.mxu0 0
    %682 = vmatpush1.bf16.msra.mxu0 0
    %683 = vmatprep.subr.bf16.mxu0 0
    %684 = vmatpush1.bf16.msra.mxu0 0
    %685 = vmatprep.subr.bf16.mxu0 0
    %686 = vmatpush1.bf16.msra.mxu0 0
    %687 = vmatprep.subr.bf16.mxu0 0
    %688 = vmatpush1.bf16.msra.mxu0 0
    %689 = vmatprep.subr.bf16.mxu0 0
    %690 = vmatpush1.bf16.msra.mxu0 0
    %691 = vmatprep.subr.bf16.mxu0 0
    %692 = vmatpush1.bf16.msra.mxu0 0
    %693 = vmatprep.subr.bf16.mxu0 0
    %694 = vmatpush1.bf16.msra.mxu0 0
    %695 = vmatprep.subr.bf16.mxu0 0
    %696 = vmatpush1.bf16.msra.mxu0 0
    %697 = vmatprep.subr.bf16.mxu0 0
    %698 = vmatpush1.bf16.msra.mxu0 0
    %699 = vmatprep.subr.bf16.mxu0 0
    %700 = vmatpush1.bf16.msra.mxu0 0
    %701 = vmatprep.subr.bf16.mxu0 0
    %702 = vmatpush1.bf16.msra.mxu0 0
    %703 = vmatprep.mubr.bf16.mxu0 0
    %704 = vmatmul.mubr.bf16.gmra.mrb[0].mxu0 %v669
    %v705 = vpop.f32.mrb[0].mxu0
    %v706 = vadd.f32 0.0, %v705
    %v707 = vpop.f32.mrb[0].mxu0
    %v708 = vpop.f32.mrb[0].mxu0
    %v709 = vpop.f32.mrb[0].mxu0
    %710 = vdwg.mxu0
    %v712 = vlaneseq
    %v713 = vshrl.u32 %v712, 7
    %v714 = vsub.s32 0, %v713
    %v715 = vrot.slane %v169, %v714
    %v717 = vadd.f32 %v715, %v706
    %v718 = vadd.f32 %v717, %v506
    %v719 = vsub.f32 0.0, %v718
    %v720 = vmul.f32 %v719, 1.442695
    %v721 = vpow.pop %v720
    %v722 = vadd.f32 %v721, 1.0
    %v723 = vrcp.pop %v722
    %v724 = vmul.f32 %v718, %v723
    %v725 = vpack.c.bf16 %v724, %v724
    %v727 = vsel %vm283, %v725, 0
    %729 = vmatprep.subr.bf16.mxu0 0
    %730 = vmatpush1.bf16.msra.mxu0 %v530
    %731 = vmatprep.subr.bf16.mxu0 0
    %732 = vmatpush1.bf16.msra.mxu0 %v531
    %733 = vmatprep.subr.bf16.mxu0 0
    %734 = vmatpush1.bf16.msra.mxu0 0
    %735 = vmatprep.subr.bf16.mxu0 0
    %736 = vmatpush1.bf16.msra.mxu0 0
    %737 = vmatprep.subr.bf16.mxu0 0
    %738 = vmatpush1.bf16.msra.mxu0 0
    %739 = vmatprep.subr.bf16.mxu0 0
    %740 = vmatpush1.bf16.msra.mxu0 0
    %741 = vmatprep.subr.bf16.mxu0 0
    %742 = vmatpush1.bf16.msra.mxu0 0
    %743 = vmatprep.subr.bf16.mxu0 0
    %744 = vmatpush1.bf16.msra.mxu0 0
    %745 = vmatprep.subr.bf16.mxu0 0
    %746 = vmatpush1.bf16.msra.mxu0 0
    %747 = vmatprep.subr.bf16.mxu0 0
    %748 = vmatpush1.bf16.msra.mxu0 0
    %749 = vmatprep.subr.bf16.mxu0 0
    %750 = vmatpush1.bf16.msra.mxu0 0
    %751 = vmatprep.subr.bf16.mxu0 0
    %752 = vmatpush1.bf16.msra.mxu0 0
    %753 = vmatprep.subr.bf16.mxu0 0
    %754 = vmatpush1.bf16.msra.mxu0 0
    %755 = vmatprep.subr.bf16.mxu0 0
    %756 = vmatpush1.bf16.msra.mxu0 0
    %757 = vmatprep.subr.bf16.mxu0 0
    %758 = vmatpush1.bf16.msra.mxu0 0
    %759 = vmatprep.subr.bf16.mxu0 0
    %760 = vmatpush1.bf16.msra.mxu0 0
    %761 = vmatprep.mubr.bf16.mxu0 0
    %762 = vmatmul.mubr.bf16.gmra.mrb[0].mxu0 %v727
    %v763 = vpop.f32.mrb[0].mxu0
    %v764 = vadd.f32 %v520, %v763
    %v765 = vpop.f32.mrb[0].mxu0
    %v766 = vpop.f32.mrb[0].mxu0
    %v767 = vpop.f32.mrb[0].mxu0
    %768 = vdwg.mxu0
    %v769 = vsub.f32 0.0, %v764
    %v770 = vmul.f32 %v769, 1.442695
    %v771 = vpow.pop %v770
    %v772 = vadd.f32 %v771, 1.0
    %v773 = vrcp.pop %v772
    %v774 = vmul.f32 %v764, %v773
    %v775 = vpack.c.bf16 %v774, %v774
    %v777 = vsel %vm283, %v775, 0
    %779 = vmatprep.subr.bf16.mxu0 0
    %780 = vmatpush1.bf16.msra.mxu0 %v598
    %781 = vmatprep.subr.bf16.mxu0 0
    %782 = vmatpush1.bf16.msra.mxu0 %v599
    %783 = vmatprep.subr.bf16.mxu0 0
    %784 = vmatpush1.bf16.msra.mxu0 0
    %785 = vmatprep.subr.bf16.mxu0 0
    %786 = vmatpush1.bf16.msra.mxu0 0
    %787 = vmatprep.subr.bf16.mxu0 0
    %788 = vmatpush1.bf16.msra.mxu0 0
    %789 = vmatprep.subr.bf16.mxu0 0
    %790 = vmatpush1.bf16.msra.mxu0 0
    %791 = vmatprep.subr.bf16.mxu0 0
    %792 = vmatpush1.bf16.msra.mxu0 0
    %793 = vmatprep.subr.bf16.mxu0 0
    %794 = vmatpush1.bf16.msra.mxu0 0
    %795 = vmatprep.subr.bf16.mxu0 0
    %796 = vmatpush1.bf16.msra.mxu0 0
    %797 = vmatprep.subr.bf16.mxu0 0
    %798 = vmatpush1.bf16.msra.mxu0 0
    %799 = vmatprep.subr.bf16.mxu0 0
    %800 = vmatpush1.bf16.msra.mxu0 0
    %801 = vmatprep.subr.bf16.mxu0 0
    %802 = vmatpush1.bf16.msra.mxu0 0
    %803 = vmatprep.subr.bf16.mxu0 0
    %804 = vmatpush1.bf16.msra.mxu0 0
    %805 = vmatprep.subr.bf16.mxu0 0
    %806 = vmatpush1.bf16.msra.mxu0 0
    %807 = vmatprep.subr.bf16.mxu0 0
    %808 = vmatpush1.bf16.msra.mxu0 0
    %809 = vmatprep.subr.bf16.mxu0 0
    %810 = vmatpush1.bf16.msra.mxu0 0
    %811 = vmatprep.mubr.bf16.mxu0 0
    %812 = vmatmul.mubr.bf16.gmra.mrb[0].mxu0 %v777
    %v813 = vpop.f32.mrb[0].mxu0
    %v814 = vadd.f32 %v588, %v813
    %v815 = vpop.f32.mrb[0].mxu0
    %v816 = vpop.f32.mrb[0].mxu0
    %v817 = vpop.f32.mrb[0].mxu0
    %818 = vdwg.mxu0
    %v819 = vtanh.pop %v814
    %v820 = vmul.f32 %v819, %v442
    %822 = vrot.lane.b32.xlu0 %v820, 112
    %v823 = vpop.permute.xlu0 %822
    %v825 = vadd.f32 %v820, %v823
    %826 = vrot.lane.b32.xlu0 %v820, 96
    %v827 = vpop.permute.xlu0 %826
    %v829 = vadd.f32 %v825, %v827
    %830 = vrot.lane.b32.xlu0 %v820, 80
    %v831 = vpop.permute.xlu0 %830
    %v833 = vadd.f32 %v829, %v831
    %834 = vrot.lane.b32.xlu0 %v820, 64
    %v835 = vpop.permute.xlu0 %834
    %v837 = vadd.f32 %v833, %v835
    %v838 = vadd.f32 %v663, %v837
    %v839 = vmul.f32 %v838, 0.5
    %v840 = vadd.f32 %v439, %v839
    %s841 = scalar_lea.vmem %s1, 8
    %v842 = vld [vmem:[%s841] sm:$0xff]
    %v843 = vmul.f32 %v840, 2.0
    %v844 = vsub.f32 %v843, %v666
    %v845 = vadd.f32 %v844, %v837
    %v846 = vmul.f32 %v169, 2.0
    %v847 = vpack.c.bf16 %v845, %v845
    %v849 = vsel %vm451, %v847, 0
    %851 = vmatprep.subr.bf16.mxu0 0
    %852 = vmatpush1.bf16.msra.mxu0 %v449
    %853 = vmatprep.subr.bf16.mxu0 0
    %854 = vmatpush1.bf16.msra.mxu0 0
    %855 = vmatprep.subr.bf16.mxu0 0
    %856 = vmatpush1.bf16.msra.mxu0 0
    %857 = vmatprep.subr.bf16.mxu0 0
    %858 = vmatpush1.bf16.msra.mxu0 0
    %859 = vmatprep.subr.bf16.mxu0 0
    %860 = vmatpush1.bf16.msra.mxu0 0
    %861 = vmatprep.subr.bf16.mxu0 0
    %862 = vmatpush1.bf16.msra.mxu0 0
    %863 = vmatprep.subr.bf16.mxu0 0
    %864 = vmatpush1.bf16.msra.mxu0 0
    %865 = vmatprep.subr.bf16.mxu0 0
    %866 = vmatpush1.bf16.msra.mxu0 0
    %867 = vmatprep.subr.bf16.mxu0 0
    %868 = vmatpush1.bf16.msra.mxu0 0
    %869 = vmatprep.subr.bf16.mxu0 0
    %870 = vmatpush1.bf16.msra.mxu0 0
    %871 = vmatprep.subr.bf16.mxu0 0
    %872 = vmatpush1.bf16.msra.mxu0 0
    %873 = vmatprep.subr.bf16.mxu0 0
    %874 = vmatpush1.bf16.msra.mxu0 0
    %875 = vmatprep.subr.bf16.mxu0 0
    %876 = vmatpush1.bf16.msra.mxu0 0
    %877 = vmatprep.subr.bf16.mxu0 0
    %878 = vmatpush1.bf16.msra.mxu0 0
    %879 = vmatprep.subr.bf16.mxu0 0
    %880 = vmatpush1.bf16.msra.mxu0 0
    %881 = vmatprep.subr.bf16.mxu0 0
    %882 = vmatpush1.bf16.msra.mxu0 0
    %883 = vmatprep.mubr.bf16.mxu0 0
    %884 = vmatmul.mubr.bf16.gmra.mrb[0].mxu0 %v849
    %v885 = vpop.f32.mrb[0].mxu0
    %v886 = vadd.f32 0.0, %v885
    %v887 = vpop.f32.mrb[0].mxu0
    %v888 = vpop.f32.mrb[0].mxu0
    %v889 = vpop.f32.mrb[0].mxu0
    %890 = vdwg.mxu0
    %v892 = vlaneseq
    %v893 = vshrl.u32 %v892, 7
    %v894 = vsub.s32 0, %v893
    %v895 = vrot.slane %v846, %v894
    %v897 = vadd.f32 %v895, %v886
    %v898 = vadd.f32 %v897, %v506
    %v899 = vsub.f32 0.0, %v898
    %v900 = vmul.f32 %v899, 1.442695
    %v901 = vpow.pop %v900
    %v902 = vadd.f32 %v901, 1.0
    %v903 = vrcp.pop %v902
    %v904 = vmul.f32 %v898, %v903
    %v905 = vpack.c.bf16 %v904, %v904
    %v907 = vsel %vm283, %v905, 0
    %909 = vmatprep.subr.bf16.mxu0 0
    %910 = vmatpush1.bf16.msra.mxu0 %v530
    %911 = vmatprep.subr.bf16.mxu0 0
    %912 = vmatpush1.bf16.msra.mxu0 %v531
    %913 = vmatprep.subr.bf16.mxu0 0
    %914 = vmatpush1.bf16.msra.mxu0 0
    %915 = vmatprep.subr.bf16.mxu0 0
    %916 = vmatpush1.bf16.msra.mxu0 0
    %917 = vmatprep.subr.bf16.mxu0 0
    %918 = vmatpush1.bf16.msra.mxu0 0
    %919 = vmatprep.subr.bf16.mxu0 0
    %920 = vmatpush1.bf16.msra.mxu0 0
    %921 = vmatprep.subr.bf16.mxu0 0
    %922 = vmatpush1.bf16.msra.mxu0 0
    %923 = vmatprep.subr.bf16.mxu0 0
    %924 = vmatpush1.bf16.msra.mxu0 0
    %925 = vmatprep.subr.bf16.mxu0 0
    %926 = vmatpush1.bf16.msra.mxu0 0
    %927 = vmatprep.subr.bf16.mxu0 0
    %928 = vmatpush1.bf16.msra.mxu0 0
    %929 = vmatprep.subr.bf16.mxu0 0
    %930 = vmatpush1.bf16.msra.mxu0 0
    %931 = vmatprep.subr.bf16.mxu0 0
    %932 = vmatpush1.bf16.msra.mxu0 0
    %933 = vmatprep.subr.bf16.mxu0 0
    %934 = vmatpush1.bf16.msra.mxu0 0
    %935 = vmatprep.subr.bf16.mxu0 0
    %936 = vmatpush1.bf16.msra.mxu0 0
    %937 = vmatprep.subr.bf16.mxu0 0
    %938 = vmatpush1.bf16.msra.mxu0 0
    %939 = vmatprep.subr.bf16.mxu0 0
    %940 = vmatpush1.bf16.msra.mxu0 0
    %941 = vmatprep.mubr.bf16.mxu0 0
    %942 = vmatmul.mubr.bf16.gmra.mrb[0].mxu0 %v907
    %v943 = vpop.f32.mrb[0].mxu0
    %v944 = vadd.f32 %v520, %v943
    %v945 = vpop.f32.mrb[0].mxu0
    %v946 = vpop.f32.mrb[0].mxu0
    %v947 = vpop.f32.mrb[0].mxu0
    %948 = vdwg.mxu0
    %v949 = vsub.f32 0.0, %v944
    %v950 = vmul.f32 %v949, 1.442695
    %v951 = vpow.pop %v950
    %v952 = vadd.f32 %v951, 1.0
    %v953 = vrcp.pop %v952
    %v954 = vmul.f32 %v944, %v953
    %v955 = vpack.c.bf16 %v954, %v954
    %v957 = vsel %vm283, %v955, 0
    %959 = vmatprep.subr.bf16.mxu0 0
    %960 = vmatpush1.bf16.msra.mxu0 %v598
    %961 = vmatprep.subr.bf16.mxu0 0
    %962 = vmatpush1.bf16.msra.mxu0 %v599
    %963 = vmatprep.subr.bf16.mxu0 0
    %964 = vmatpush1.bf16.msra.mxu0 0
    %965 = vmatprep.subr.bf16.mxu0 0
    %966 = vmatpush1.bf16.msra.mxu0 0
    %967 = vmatprep.subr.bf16.mxu0 0
    %968 = vmatpush1.bf16.msra.mxu0 0
    %969 = vmatprep.subr.bf16.mxu0 0
    %970 = vmatpush1.bf16.msra.mxu0 0
    %971 = vmatprep.subr.bf16.mxu0 0
    %972 = vmatpush1.bf16.msra.mxu0 0
    %973 = vmatprep.subr.bf16.mxu0 0
    %974 = vmatpush1.bf16.msra.mxu0 0
    %975 = vmatprep.subr.bf16.mxu0 0
    %976 = vmatpush1.bf16.msra.mxu0 0
    %977 = vmatprep.subr.bf16.mxu0 0
    %978 = vmatpush1.bf16.msra.mxu0 0
    %979 = vmatprep.subr.bf16.mxu0 0
    %980 = vmatpush1.bf16.msra.mxu0 0
    %981 = vmatprep.subr.bf16.mxu0 0
    %982 = vmatpush1.bf16.msra.mxu0 0
    %983 = vmatprep.subr.bf16.mxu0 0
    %984 = vmatpush1.bf16.msra.mxu0 0
    %985 = vmatprep.subr.bf16.mxu0 0
    %986 = vmatpush1.bf16.msra.mxu0 0
    %987 = vmatprep.subr.bf16.mxu0 0
    %988 = vmatpush1.bf16.msra.mxu0 0
    %989 = vmatprep.subr.bf16.mxu0 0
    %990 = vmatpush1.bf16.msra.mxu0 0
    %991 = vmatprep.mubr.bf16.mxu0 0
    %992 = vmatmul.mubr.bf16.gmra.mrb[0].mxu0 %v957
    %v993 = vpop.f32.mrb[0].mxu0
    %v994 = vadd.f32 %v588, %v993
    %v995 = vpop.f32.mrb[0].mxu0
    %v996 = vpop.f32.mrb[0].mxu0
    %v997 = vpop.f32.mrb[0].mxu0
    %998 = vdwg.mxu0
    %v999 = vtanh.pop %v994
    %v1000 = vmul.f32 %v999, %v842
    %1002 = vrot.lane.b32.xlu0 %v1000, 112
    %v1003 = vpop.permute.xlu0 %1002
    %v1005 = vadd.f32 %v1000, %v1003
    %1006 = vrot.lane.b32.xlu0 %v1000, 96
    %v1007 = vpop.permute.xlu0 %1006
    %v1009 = vadd.f32 %v1005, %v1007
    %1010 = vrot.lane.b32.xlu0 %v1000, 80
    %v1011 = vpop.permute.xlu0 %1010
    %v1013 = vadd.f32 %v1009, %v1011
    %1014 = vrot.lane.b32.xlu0 %v1000, 64
    %v1015 = vpop.permute.xlu0 %1014
    %v1017 = vadd.f32 %v1013, %v1015
    %v1018 = vadd.f32 %v837, %v1017
    %v1019 = vmul.f32 %v1018, 0.5
    %v1020 = vadd.f32 %v840, %v1019
    %s1021 = scalar_lea.vmem %s1, 16
    %v1022 = vld [vmem:[%s1021] sm:$0xff]
    %v1023 = vmul.f32 %v1020, 2.0
    %v1024 = vsub.f32 %v1023, %v845
    %v1025 = vadd.f32 %v1024, %v1017
    %v1026 = vmul.f32 %v169, 3.0
    %v1027 = vpack.c.bf16 %v1025, %v1025
    %v1029 = vsel %vm451, %v1027, 0
    %1031 = vmatprep.subr.bf16.mxu0 0
    %1032 = vmatpush1.bf16.msra.mxu0 %v449
    %1033 = vmatprep.subr.bf16.mxu0 0
    %1034 = vmatpush1.bf16.msra.mxu0 0
    %1035 = vmatprep.subr.bf16.mxu0 0
    %1036 = vmatpush1.bf16.msra.mxu0 0
    %1037 = vmatprep.subr.bf16.mxu0 0
    %1038 = vmatpush1.bf16.msra.mxu0 0
    %1039 = vmatprep.subr.bf16.mxu0 0
    %1040 = vmatpush1.bf16.msra.mxu0 0
    %1041 = vmatprep.subr.bf16.mxu0 0
    %1042 = vmatpush1.bf16.msra.mxu0 0
    %1043 = vmatprep.subr.bf16.mxu0 0
    %1044 = vmatpush1.bf16.msra.mxu0 0
    %1045 = vmatprep.subr.bf16.mxu0 0
    %1046 = vmatpush1.bf16.msra.mxu0 0
    %1047 = vmatprep.subr.bf16.mxu0 0
    %1048 = vmatpush1.bf16.msra.mxu0 0
    %1049 = vmatprep.subr.bf16.mxu0 0
    %1050 = vmatpush1.bf16.msra.mxu0 0
    %1051 = vmatprep.subr.bf16.mxu0 0
    %1052 = vmatpush1.bf16.msra.mxu0 0
    %1053 = vmatprep.subr.bf16.mxu0 0
    %1054 = vmatpush1.bf16.msra.mxu0 0
    %1055 = vmatprep.subr.bf16.mxu0 0
    %1056 = vmatpush1.bf16.msra.mxu0 0
    %1057 = vmatprep.subr.bf16.mxu0 0
    %1058 = vmatpush1.bf16.msra.mxu0 0
    %1059 = vmatprep.subr.bf16.mxu0 0
    %1060 = vmatpush1.bf16.msra.mxu0 0
    %1061 = vmatprep.subr.bf16.mxu0 0
    %1062 = vmatpush1.bf16.msra.mxu0 0
    %1063 = vmatprep.mubr.bf16.mxu0 0
    %1064 = vmatmul.mubr.bf16.gmra.mrb[0].mxu0 %v1029
    %v1065 = vpop.f32.mrb[0].mxu0
    %v1066 = vadd.f32 0.0, %v1065
    %v1067 = vpop.f32.mrb[0].mxu0
    %v1068 = vpop.f32.mrb[0].mxu0
    %v1069 = vpop.f32.mrb[0].mxu0
    %1070 = vdwg.mxu0
    %v1072 = vlaneseq
    %v1073 = vshrl.u32 %v1072, 7
    %v1074 = vsub.s32 0, %v1073
    %v1075 = vrot.slane %v1026, %v1074
    %v1077 = vadd.f32 %v1075, %v1066
    %v1078 = vadd.f32 %v1077, %v506
    %v1079 = vsub.f32 0.0, %v1078
    %v1080 = vmul.f32 %v1079, 1.442695
    %v1081 = vpow.pop %v1080
    %v1082 = vadd.f32 %v1081, 1.0
    %v1083 = vrcp.pop %v1082
    %v1084 = vmul.f32 %v1078, %v1083
    %v1085 = vpack.c.bf16 %v1084, %v1084
    %v1087 = vsel %vm283, %v1085, 0
    %1089 = vmatprep.subr.bf16.mxu0 0
    %1090 = vmatpush1.bf16.msra.mxu0 %v530
    %1091 = vmatprep.subr.bf16.mxu0 0
    %1092 = vmatpush1.bf16.msra.mxu0 %v531
    %1093 = vmatprep.subr.bf16.mxu0 0
    %1094 = vmatpush1.bf16.msra.mxu0 0
    %1095 = vmatprep.subr.bf16.mxu0 0
    %1096 = vmatpush1.bf16.msra.mxu0 0
    %1097 = vmatprep.subr.bf16.mxu0 0
    %1098 = vmatpush1.bf16.msra.mxu0 0
    %1099 = vmatprep.subr.bf16.mxu0 0
    %1100 = vmatpush1.bf16.msra.mxu0 0
    %1101 = vmatprep.subr.bf16.mxu0 0
    %1102 = vmatpush1.bf16.msra.mxu0 0
    %1103 = vmatprep.subr.bf16.mxu0 0
    %1104 = vmatpush1.bf16.msra.mxu0 0
    %1105 = vmatprep.subr.bf16.mxu0 0
    %1106 = vmatpush1.bf16.msra.mxu0 0
    %1107 = vmatprep.subr.bf16.mxu0 0
    %1108 = vmatpush1.bf16.msra.mxu0 0
    %1109 = vmatprep.subr.bf16.mxu0 0
    %1110 = vmatpush1.bf16.msra.mxu0 0
    %1111 = vmatprep.subr.bf16.mxu0 0
    %1112 = vmatpush1.bf16.msra.mxu0 0
    %1113 = vmatprep.subr.bf16.mxu0 0
    %1114 = vmatpush1.bf16.msra.mxu0 0
    %1115 = vmatprep.subr.bf16.mxu0 0
    %1116 = vmatpush1.bf16.msra.mxu0 0
    %1117 = vmatprep.subr.bf16.mxu0 0
    %1118 = vmatpush1.bf16.msra.mxu0 0
    %1119 = vmatprep.subr.bf16.mxu0 0
    %1120 = vmatpush1.bf16.msra.mxu0 0
    %1121 = vmatprep.mubr.bf16.mxu0 0
    %1122 = vmatmul.mubr.bf16.gmra.mrb[0].mxu0 %v1087
    %v1123 = vpop.f32.mrb[0].mxu0
    %v1124 = vadd.f32 %v520, %v1123
    %v1125 = vpop.f32.mrb[0].mxu0
    %v1126 = vpop.f32.mrb[0].mxu0
    %v1127 = vpop.f32.mrb[0].mxu0
    %1128 = vdwg.mxu0
    %v1129 = vsub.f32 0.0, %v1124
    %v1130 = vmul.f32 %v1129, 1.442695
    %v1131 = vpow.pop %v1130
    %v1132 = vadd.f32 %v1131, 1.0
    %v1133 = vrcp.pop %v1132
    %v1134 = vmul.f32 %v1124, %v1133
    %v1135 = vpack.c.bf16 %v1134, %v1134
    %v1137 = vsel %vm283, %v1135, 0
    %1139 = vmatprep.subr.bf16.mxu0 0
    %1140 = vmatpush1.bf16.msra.mxu0 %v598
    %1141 = vmatprep.subr.bf16.mxu0 0
    %1142 = vmatpush1.bf16.msra.mxu0 %v599
    %1143 = vmatprep.subr.bf16.mxu0 0
    %1144 = vmatpush1.bf16.msra.mxu0 0
    %1145 = vmatprep.subr.bf16.mxu0 0
    %1146 = vmatpush1.bf16.msra.mxu0 0
    %1147 = vmatprep.subr.bf16.mxu0 0
    %1148 = vmatpush1.bf16.msra.mxu0 0
    %1149 = vmatprep.subr.bf16.mxu0 0
    %1150 = vmatpush1.bf16.msra.mxu0 0
    %1151 = vmatprep.subr.bf16.mxu0 0
    %1152 = vmatpush1.bf16.msra.mxu0 0
    %1153 = vmatprep.subr.bf16.mxu0 0
    %1154 = vmatpush1.bf16.msra.mxu0 0
    %1155 = vmatprep.subr.bf16.mxu0 0
    %1156 = vmatpush1.bf16.msra.mxu0 0
    %1157 = vmatprep.subr.bf16.mxu0 0
    %1158 = vmatpush1.bf16.msra.mxu0 0
    %1159 = vmatprep.subr.bf16.mxu0 0
    %1160 = vmatpush1.bf16.msra.mxu0 0
    %1161 = vmatprep.subr.bf16.mxu0 0
    %1162 = vmatpush1.bf16.msra.mxu0 0
    %1163 = vmatprep.subr.bf16.mxu0 0
    %1164 = vmatpush1.bf16.msra.mxu0 0
    %1165 = vmatprep.subr.bf16.mxu0 0
    %1166 = vmatpush1.bf16.msra.mxu0 0
    %1167 = vmatprep.subr.bf16.mxu0 0
    %1168 = vmatpush1.bf16.msra.mxu0 0
    %1169 = vmatprep.subr.bf16.mxu0 0
    %1170 = vmatpush1.bf16.msra.mxu0 0
    %1171 = vmatprep.mubr.bf16.mxu0 0
    %1172 = vmatmul.mubr.bf16.gmra.mrb[0].mxu0 %v1137
    %v1173 = vpop.f32.mrb[0].mxu0
    %v1174 = vadd.f32 %v588, %v1173
    %v1175 = vpop.f32.mrb[0].mxu0
    %v1176 = vpop.f32.mrb[0].mxu0
    %v1177 = vpop.f32.mrb[0].mxu0
    %1178 = vdwg.mxu0
    %v1179 = vtanh.pop %v1174
    %v1180 = vmul.f32 %v1179, %v1022
    %1182 = vrot.lane.b32.xlu0 %v1180, 112
    %v1183 = vpop.permute.xlu0 %1182
    %v1185 = vadd.f32 %v1180, %v1183
    %1186 = vrot.lane.b32.xlu0 %v1180, 96
    %v1187 = vpop.permute.xlu0 %1186
    %v1189 = vadd.f32 %v1185, %v1187
    %1190 = vrot.lane.b32.xlu0 %v1180, 80
    %v1191 = vpop.permute.xlu0 %1190
    %v1193 = vadd.f32 %v1189, %v1191
    %1194 = vrot.lane.b32.xlu0 %v1180, 64
    %v1195 = vpop.permute.xlu0 %1194
    %v1197 = vadd.f32 %v1193, %v1195
    %v1198 = vadd.f32 %v1017, %v1197
    %v1199 = vmul.f32 %v1198, 0.5
    %v1200 = vadd.f32 %v1020, %v1199
    %s1201 = scalar_lea.vmem %s1, 24
    %v1202 = vld [vmem:[%s1201] sm:$0xff]
    %v1203 = vmul.f32 %v1200, 2.0
    %v1204 = vsub.f32 %v1203, %v1025
    %v1205 = vadd.f32 %v1204, %v1197
    %v1206 = vmul.f32 %v169, 4.0
    %v1207 = vpack.c.bf16 %v1205, %v1205
    %v1209 = vsel %vm451, %v1207, 0
    %1211 = vmatprep.subr.bf16.mxu0 0
    %1212 = vmatpush1.bf16.msra.mxu0 %v449
    %1213 = vmatprep.subr.bf16.mxu0 0
    %1214 = vmatpush1.bf16.msra.mxu0 0
    %1215 = vmatprep.subr.bf16.mxu0 0
    %1216 = vmatpush1.bf16.msra.mxu0 0
    %1217 = vmatprep.subr.bf16.mxu0 0
    %1218 = vmatpush1.bf16.msra.mxu0 0
    %1219 = vmatprep.subr.bf16.mxu0 0
    %1220 = vmatpush1.bf16.msra.mxu0 0
    %1221 = vmatprep.subr.bf16.mxu0 0
    %1222 = vmatpush1.bf16.msra.mxu0 0
    %1223 = vmatprep.subr.bf16.mxu0 0
    %1224 = vmatpush1.bf16.msra.mxu0 0
    %1225 = vmatprep.subr.bf16.mxu0 0
    %1226 = vmatpush1.bf16.msra.mxu0 0
    %1227 = vmatprep.subr.bf16.mxu0 0
    %1228 = vmatpush1.bf16.msra.mxu0 0
    %1229 = vmatprep.subr.bf16.mxu0 0
    %1230 = vmatpush1.bf16.msra.mxu0 0
    %1231 = vmatprep.subr.bf16.mxu0 0
    %1232 = vmatpush1.bf16.msra.mxu0 0
    %1233 = vmatprep.subr.bf16.mxu0 0
    %1234 = vmatpush1.bf16.msra.mxu0 0
    %1235 = vmatprep.subr.bf16.mxu0 0
    %1236 = vmatpush1.bf16.msra.mxu0 0
    %1237 = vmatprep.subr.bf16.mxu0 0
    %1238 = vmatpush1.bf16.msra.mxu0 0
    %1239 = vmatprep.subr.bf16.mxu0 0
    %1240 = vmatpush1.bf16.msra.mxu0 0
    %1241 = vmatprep.subr.bf16.mxu0 0
    %1242 = vmatpush1.bf16.msra.mxu0 0
    %1243 = vmatprep.mubr.bf16.mxu0 0
    %1244 = vmatmul.mubr.bf16.gmra.mrb[0].mxu0 %v1209
    %v1245 = vpop.f32.mrb[0].mxu0
    %v1246 = vadd.f32 0.0, %v1245
    %v1247 = vpop.f32.mrb[0].mxu0
    %v1248 = vpop.f32.mrb[0].mxu0
    %v1249 = vpop.f32.mrb[0].mxu0
    %1250 = vdwg.mxu0
    %v1252 = vlaneseq
    %v1253 = vshrl.u32 %v1252, 7
    %v1254 = vsub.s32 0, %v1253
    %v1255 = vrot.slane %v1206, %v1254
    %v1257 = vadd.f32 %v1255, %v1246
    %v1258 = vadd.f32 %v1257, %v506
    %v1259 = vsub.f32 0.0, %v1258
    %v1260 = vmul.f32 %v1259, 1.442695
    %v1261 = vpow.pop %v1260
    %v1262 = vadd.f32 %v1261, 1.0
    %v1263 = vrcp.pop %v1262
    %v1264 = vmul.f32 %v1258, %v1263
    %v1265 = vpack.c.bf16 %v1264, %v1264
    %v1267 = vsel %vm283, %v1265, 0
    %1269 = vmatprep.subr.bf16.mxu0 0
    %1270 = vmatpush1.bf16.msra.mxu0 %v530
    %1271 = vmatprep.subr.bf16.mxu0 0
    %1272 = vmatpush1.bf16.msra.mxu0 %v531
    %1273 = vmatprep.subr.bf16.mxu0 0
    %1274 = vmatpush1.bf16.msra.mxu0 0
    %1275 = vmatprep.subr.bf16.mxu0 0
    %1276 = vmatpush1.bf16.msra.mxu0 0
    %1277 = vmatprep.subr.bf16.mxu0 0
    %1278 = vmatpush1.bf16.msra.mxu0 0
    %1279 = vmatprep.subr.bf16.mxu0 0
    %1280 = vmatpush1.bf16.msra.mxu0 0
    %1281 = vmatprep.subr.bf16.mxu0 0
    %1282 = vmatpush1.bf16.msra.mxu0 0
    %1283 = vmatprep.subr.bf16.mxu0 0
    %1284 = vmatpush1.bf16.msra.mxu0 0
    %1285 = vmatprep.subr.bf16.mxu0 0
    %1286 = vmatpush1.bf16.msra.mxu0 0
    %1287 = vmatprep.subr.bf16.mxu0 0
    %1288 = vmatpush1.bf16.msra.mxu0 0
    %1289 = vmatprep.subr.bf16.mxu0 0
    %1290 = vmatpush1.bf16.msra.mxu0 0
    %1291 = vmatprep.subr.bf16.mxu0 0
    %1292 = vmatpush1.bf16.msra.mxu0 0
    %1293 = vmatprep.subr.bf16.mxu0 0
    %1294 = vmatpush1.bf16.msra.mxu0 0
    %1295 = vmatprep.subr.bf16.mxu0 0
    %1296 = vmatpush1.bf16.msra.mxu0 0
    %1297 = vmatprep.subr.bf16.mxu0 0
    %1298 = vmatpush1.bf16.msra.mxu0 0
    %1299 = vmatprep.subr.bf16.mxu0 0
    %1300 = vmatpush1.bf16.msra.mxu0 0
    %1301 = vmatprep.mubr.bf16.mxu0 0
    %1302 = vmatmul.mubr.bf16.gmra.mrb[0].mxu0 %v1267
    %v1303 = vpop.f32.mrb[0].mxu0
    %v1304 = vadd.f32 %v520, %v1303
    %v1305 = vpop.f32.mrb[0].mxu0
    %v1306 = vpop.f32.mrb[0].mxu0
    %v1307 = vpop.f32.mrb[0].mxu0
    %1308 = vdwg.mxu0
    %v1309 = vsub.f32 0.0, %v1304
    %v1310 = vmul.f32 %v1309, 1.442695
    %v1311 = vpow.pop %v1310
    %v1312 = vadd.f32 %v1311, 1.0
    %v1313 = vrcp.pop %v1312
    %v1314 = vmul.f32 %v1304, %v1313
    %v1315 = vpack.c.bf16 %v1314, %v1314
    %v1317 = vsel %vm283, %v1315, 0
    %1319 = vmatprep.subr.bf16.mxu0 0
    %1320 = vmatpush1.bf16.msra.mxu0 %v598
    %1321 = vmatprep.subr.bf16.mxu0 0
    %1322 = vmatpush1.bf16.msra.mxu0 %v599
    %1323 = vmatprep.subr.bf16.mxu0 0
    %1324 = vmatpush1.bf16.msra.mxu0 0
    %1325 = vmatprep.subr.bf16.mxu0 0
    %1326 = vmatpush1.bf16.msra.mxu0 0
    %1327 = vmatprep.subr.bf16.mxu0 0
    %1328 = vmatpush1.bf16.msra.mxu0 0
    %1329 = vmatprep.subr.bf16.mxu0 0
    %1330 = vmatpush1.bf16.msra.mxu0 0
    %1331 = vmatprep.subr.bf16.mxu0 0
    %1332 = vmatpush1.bf16.msra.mxu0 0
    %1333 = vmatprep.subr.bf16.mxu0 0
    %1334 = vmatpush1.bf16.msra.mxu0 0
    %1335 = vmatprep.subr.bf16.mxu0 0
    %1336 = vmatpush1.bf16.msra.mxu0 0
    %1337 = vmatprep.subr.bf16.mxu0 0
    %1338 = vmatpush1.bf16.msra.mxu0 0
    %1339 = vmatprep.subr.bf16.mxu0 0
    %1340 = vmatpush1.bf16.msra.mxu0 0
    %1341 = vmatprep.subr.bf16.mxu0 0
    %1342 = vmatpush1.bf16.msra.mxu0 0
    %1343 = vmatprep.subr.bf16.mxu0 0
    %1344 = vmatpush1.bf16.msra.mxu0 0
    %1345 = vmatprep.subr.bf16.mxu0 0
    %1346 = vmatpush1.bf16.msra.mxu0 0
    %1347 = vmatprep.subr.bf16.mxu0 0
    %1348 = vmatpush1.bf16.msra.mxu0 0
    %1349 = vmatprep.subr.bf16.mxu0 0
    %1350 = vmatpush1.bf16.msra.mxu0 0
    %1351 = vmatprep.mubr.bf16.mxu0 0
    %1352 = vmatmul.mubr.bf16.gmra.mrb[0].mxu0 %v1317
    %v1353 = vpop.f32.mrb[0].mxu0
    %v1354 = vadd.f32 %v588, %v1353
    %v1355 = vpop.f32.mrb[0].mxu0
    %v1356 = vpop.f32.mrb[0].mxu0
    %v1357 = vpop.f32.mrb[0].mxu0
    %1358 = vdwg.mxu0
    %v1359 = vtanh.pop %v1354
    %v1360 = vmul.f32 %v1359, %v1202
    %1362 = vrot.lane.b32.xlu0 %v1360, 112
    %v1363 = vpop.permute.xlu0 %1362
    %v1365 = vadd.f32 %v1360, %v1363
    %1366 = vrot.lane.b32.xlu0 %v1360, 96
    %v1367 = vpop.permute.xlu0 %1366
    %v1369 = vadd.f32 %v1365, %v1367
    %1370 = vrot.lane.b32.xlu0 %v1360, 80
    %v1371 = vpop.permute.xlu0 %1370
    %v1373 = vadd.f32 %v1369, %v1371
    %1374 = vrot.lane.b32.xlu0 %v1360, 64
    %v1375 = vpop.permute.xlu0 %1374
    %v1377 = vadd.f32 %v1373, %v1375
    %v1378 = vadd.f32 %v1197, %v1377
    %v1379 = vmul.f32 %v1378, 0.5
    %v1380 = vadd.f32 %v1200, %v1379
    %s1381 = scalar_lea.vmem %s1, 32
    %v1382 = vld [vmem:[%s1381] sm:$0xff]
    %v1383 = vmul.f32 %v1380, 2.0
    %v1384 = vsub.f32 %v1383, %v1205
    %v1385 = vadd.f32 %v1384, %v1377
    %v1386 = vmul.f32 %v169, 5.0
    %v1387 = vpack.c.bf16 %v1385, %v1385
    %v1389 = vsel %vm451, %v1387, 0
    %1391 = vmatprep.subr.bf16.mxu0 0
    %1392 = vmatpush1.bf16.msra.mxu0 %v449
    %1393 = vmatprep.subr.bf16.mxu0 0
    %1394 = vmatpush1.bf16.msra.mxu0 0
    %1395 = vmatprep.subr.bf16.mxu0 0
    %1396 = vmatpush1.bf16.msra.mxu0 0
    %1397 = vmatprep.subr.bf16.mxu0 0
    %1398 = vmatpush1.bf16.msra.mxu0 0
    %1399 = vmatprep.subr.bf16.mxu0 0
    %1400 = vmatpush1.bf16.msra.mxu0 0
    %1401 = vmatprep.subr.bf16.mxu0 0
    %1402 = vmatpush1.bf16.msra.mxu0 0
    %1403 = vmatprep.subr.bf16.mxu0 0
    %1404 = vmatpush1.bf16.msra.mxu0 0
    %1405 = vmatprep.subr.bf16.mxu0 0
    %1406 = vmatpush1.bf16.msra.mxu0 0
    %1407 = vmatprep.subr.bf16.mxu0 0
    %1408 = vmatpush1.bf16.msra.mxu0 0
    %1409 = vmatprep.subr.bf16.mxu0 0
    %1410 = vmatpush1.bf16.msra.mxu0 0
    %1411 = vmatprep.subr.bf16.mxu0 0
    %1412 = vmatpush1.bf16.msra.mxu0 0
    %1413 = vmatprep.subr.bf16.mxu0 0
    %1414 = vmatpush1.bf16.msra.mxu0 0
    %1415 = vmatprep.subr.bf16.mxu0 0
    %1416 = vmatpush1.bf16.msra.mxu0 0
    %1417 = vmatprep.subr.bf16.mxu0 0
    %1418 = vmatpush1.bf16.msra.mxu0 0
    %1419 = vmatprep.subr.bf16.mxu0 0
    %1420 = vmatpush1.bf16.msra.mxu0 0
    %1421 = vmatprep.subr.bf16.mxu0 0
    %1422 = vmatpush1.bf16.msra.mxu0 0
    %1423 = vmatprep.mubr.bf16.mxu0 0
    %1424 = vmatmul.mubr.bf16.gmra.mrb[0].mxu0 %v1389
    %v1425 = vpop.f32.mrb[0].mxu0
    %v1426 = vadd.f32 0.0, %v1425
    %v1427 = vpop.f32.mrb[0].mxu0
    %v1428 = vpop.f32.mrb[0].mxu0
    %v1429 = vpop.f32.mrb[0].mxu0
    %1430 = vdwg.mxu0
    %v1432 = vlaneseq
    %v1433 = vshrl.u32 %v1432, 7
    %v1434 = vsub.s32 0, %v1433
    %v1435 = vrot.slane %v1386, %v1434
    %v1437 = vadd.f32 %v1435, %v1426
    %v1438 = vadd.f32 %v1437, %v506
    %v1439 = vsub.f32 0.0, %v1438
    %v1440 = vmul.f32 %v1439, 1.442695
    %v1441 = vpow.pop %v1440
    %v1442 = vadd.f32 %v1441, 1.0
    %v1443 = vrcp.pop %v1442
    %v1444 = vmul.f32 %v1438, %v1443
    %v1445 = vpack.c.bf16 %v1444, %v1444
    %v1447 = vsel %vm283, %v1445, 0
    %1449 = vmatprep.subr.bf16.mxu0 0
    %1450 = vmatpush1.bf16.msra.mxu0 %v530
    %1451 = vmatprep.subr.bf16.mxu0 0
    %1452 = vmatpush1.bf16.msra.mxu0 %v531
    %1453 = vmatprep.subr.bf16.mxu0 0
    %1454 = vmatpush1.bf16.msra.mxu0 0
    %1455 = vmatprep.subr.bf16.mxu0 0
    %1456 = vmatpush1.bf16.msra.mxu0 0
    %1457 = vmatprep.subr.bf16.mxu0 0
    %1458 = vmatpush1.bf16.msra.mxu0 0
    %1459 = vmatprep.subr.bf16.mxu0 0
    %1460 = vmatpush1.bf16.msra.mxu0 0
    %1461 = vmatprep.subr.bf16.mxu0 0
    %1462 = vmatpush1.bf16.msra.mxu0 0
    %1463 = vmatprep.subr.bf16.mxu0 0
    %1464 = vmatpush1.bf16.msra.mxu0 0
    %1465 = vmatprep.subr.bf16.mxu0 0
    %1466 = vmatpush1.bf16.msra.mxu0 0
    %1467 = vmatprep.subr.bf16.mxu0 0
    %1468 = vmatpush1.bf16.msra.mxu0 0
    %1469 = vmatprep.subr.bf16.mxu0 0
    %1470 = vmatpush1.bf16.msra.mxu0 0
    %1471 = vmatprep.subr.bf16.mxu0 0
    %1472 = vmatpush1.bf16.msra.mxu0 0
    %1473 = vmatprep.subr.bf16.mxu0 0
    %1474 = vmatpush1.bf16.msra.mxu0 0
    %1475 = vmatprep.subr.bf16.mxu0 0
    %1476 = vmatpush1.bf16.msra.mxu0 0
    %1477 = vmatprep.subr.bf16.mxu0 0
    %1478 = vmatpush1.bf16.msra.mxu0 0
    %1479 = vmatprep.subr.bf16.mxu0 0
    %1480 = vmatpush1.bf16.msra.mxu0 0
    %1481 = vmatprep.mubr.bf16.mxu0 0
    %1482 = vmatmul.mubr.bf16.gmra.mrb[0].mxu0 %v1447
    %v1483 = vpop.f32.mrb[0].mxu0
    %v1484 = vadd.f32 %v520, %v1483
    %v1485 = vpop.f32.mrb[0].mxu0
    %v1486 = vpop.f32.mrb[0].mxu0
    %v1487 = vpop.f32.mrb[0].mxu0
    %1488 = vdwg.mxu0
    %v1489 = vsub.f32 0.0, %v1484
    %v1490 = vmul.f32 %v1489, 1.442695
    %v1491 = vpow.pop %v1490
    %v1492 = vadd.f32 %v1491, 1.0
    %v1493 = vrcp.pop %v1492
    %v1494 = vmul.f32 %v1484, %v1493
    %v1495 = vpack.c.bf16 %v1494, %v1494
    %v1497 = vsel %vm283, %v1495, 0
    %1499 = vmatprep.subr.bf16.mxu0 0
    %1500 = vmatpush1.bf16.msra.mxu0 %v598
    %1501 = vmatprep.subr.bf16.mxu0 0
    %1502 = vmatpush1.bf16.msra.mxu0 %v599
    %1503 = vmatprep.subr.bf16.mxu0 0
    %1504 = vmatpush1.bf16.msra.mxu0 0
    %1505 = vmatprep.subr.bf16.mxu0 0
    %1506 = vmatpush1.bf16.msra.mxu0 0
    %1507 = vmatprep.subr.bf16.mxu0 0
    %1508 = vmatpush1.bf16.msra.mxu0 0
    %1509 = vmatprep.subr.bf16.mxu0 0
    %1510 = vmatpush1.bf16.msra.mxu0 0
    %1511 = vmatprep.subr.bf16.mxu0 0
    %1512 = vmatpush1.bf16.msra.mxu0 0
    %1513 = vmatprep.subr.bf16.mxu0 0
    %1514 = vmatpush1.bf16.msra.mxu0 0
    %1515 = vmatprep.subr.bf16.mxu0 0
    %1516 = vmatpush1.bf16.msra.mxu0 0
    %1517 = vmatprep.subr.bf16.mxu0 0
    %1518 = vmatpush1.bf16.msra.mxu0 0
    %1519 = vmatprep.subr.bf16.mxu0 0
    %1520 = vmatpush1.bf16.msra.mxu0 0
    %1521 = vmatprep.subr.bf16.mxu0 0
    %1522 = vmatpush1.bf16.msra.mxu0 0
    %1523 = vmatprep.subr.bf16.mxu0 0
    %1524 = vmatpush1.bf16.msra.mxu0 0
    %1525 = vmatprep.subr.bf16.mxu0 0
    %1526 = vmatpush1.bf16.msra.mxu0 0
    %1527 = vmatprep.subr.bf16.mxu0 0
    %1528 = vmatpush1.bf16.msra.mxu0 0
    %1529 = vmatprep.subr.bf16.mxu0 0
    %1530 = vmatpush1.bf16.msra.mxu0 0
    %1531 = vmatprep.mubr.bf16.mxu0 0
    %1532 = vmatmul.mubr.bf16.gmra.mrb[0].mxu0 %v1497
    %v1533 = vpop.f32.mrb[0].mxu0
    %v1534 = vadd.f32 %v588, %v1533
    %v1535 = vpop.f32.mrb[0].mxu0
    %v1536 = vpop.f32.mrb[0].mxu0
    %v1537 = vpop.f32.mrb[0].mxu0
    %1538 = vdwg.mxu0
    %v1539 = vtanh.pop %v1534
    %v1540 = vmul.f32 %v1539, %v1382
    %1542 = vrot.lane.b32.xlu0 %v1540, 112
    %v1543 = vpop.permute.xlu0 %1542
    %v1545 = vadd.f32 %v1540, %v1543
    %1546 = vrot.lane.b32.xlu0 %v1540, 96
    %v1547 = vpop.permute.xlu0 %1546
    %v1549 = vadd.f32 %v1545, %v1547
    %1550 = vrot.lane.b32.xlu0 %v1540, 80
    %v1551 = vpop.permute.xlu0 %1550
    %v1553 = vadd.f32 %v1549, %v1551
    %1554 = vrot.lane.b32.xlu0 %v1540, 64
    %v1555 = vpop.permute.xlu0 %1554
    %v1557 = vadd.f32 %v1553, %v1555
    %v1558 = vadd.f32 %v1377, %v1557
    %v1559 = vmul.f32 %v1558, 0.5
    %v1560 = vadd.f32 %v1380, %v1559
    %s1561 = scalar_lea.vmem %s1, 40
    %v1562 = vld [vmem:[%s1561] sm:$0xff]
    %v1563 = vmul.f32 %v1560, 2.0
    %v1564 = vsub.f32 %v1563, %v1385
    %v1565 = vadd.f32 %v1564, %v1557
    %v1566 = vmul.f32 %v169, 6.0
    %v1567 = vpack.c.bf16 %v1565, %v1565
    %v1569 = vsel %vm451, %v1567, 0
    %1571 = vmatprep.subr.bf16.mxu0 0
    %1572 = vmatpush1.bf16.msra.mxu0 %v449
    %1573 = vmatprep.subr.bf16.mxu0 0
    %1574 = vmatpush1.bf16.msra.mxu0 0
    %1575 = vmatprep.subr.bf16.mxu0 0
    %1576 = vmatpush1.bf16.msra.mxu0 0
    %1577 = vmatprep.subr.bf16.mxu0 0
    %1578 = vmatpush1.bf16.msra.mxu0 0
    %1579 = vmatprep.subr.bf16.mxu0 0
    %1580 = vmatpush1.bf16.msra.mxu0 0
    %1581 = vmatprep.subr.bf16.mxu0 0
    %1582 = vmatpush1.bf16.msra.mxu0 0
    %1583 = vmatprep.subr.bf16.mxu0 0
    %1584 = vmatpush1.bf16.msra.mxu0 0
    %1585 = vmatprep.subr.bf16.mxu0 0
    %1586 = vmatpush1.bf16.msra.mxu0 0
    %1587 = vmatprep.subr.bf16.mxu0 0
    %1588 = vmatpush1.bf16.msra.mxu0 0
    %1589 = vmatprep.subr.bf16.mxu0 0
    %1590 = vmatpush1.bf16.msra.mxu0 0
    %1591 = vmatprep.subr.bf16.mxu0 0
    %1592 = vmatpush1.bf16.msra.mxu0 0
    %1593 = vmatprep.subr.bf16.mxu0 0
    %1594 = vmatpush1.bf16.msra.mxu0 0
    %1595 = vmatprep.subr.bf16.mxu0 0
    %1596 = vmatpush1.bf16.msra.mxu0 0
    %1597 = vmatprep.subr.bf16.mxu0 0
    %1598 = vmatpush1.bf16.msra.mxu0 0
    %1599 = vmatprep.subr.bf16.mxu0 0
    %1600 = vmatpush1.bf16.msra.mxu0 0
    %1601 = vmatprep.subr.bf16.mxu0 0
    %1602 = vmatpush1.bf16.msra.mxu0 0
    %1603 = vmatprep.mubr.bf16.mxu0 0
    %1604 = vmatmul.mubr.bf16.gmra.mrb[0].mxu0 %v1569
    %v1605 = vpop.f32.mrb[0].mxu0
    %v1606 = vadd.f32 0.0, %v1605
    %v1607 = vpop.f32.mrb[0].mxu0
    %v1608 = vpop.f32.mrb[0].mxu0
    %v1609 = vpop.f32.mrb[0].mxu0
    %1610 = vdwg.mxu0
    %v1612 = vlaneseq
    %v1613 = vshrl.u32 %v1612, 7
    %v1614 = vsub.s32 0, %v1613
    %v1615 = vrot.slane %v1566, %v1614
    %v1617 = vadd.f32 %v1615, %v1606
    %v1618 = vadd.f32 %v1617, %v506
    %v1619 = vsub.f32 0.0, %v1618
    %v1620 = vmul.f32 %v1619, 1.442695
    %v1621 = vpow.pop %v1620
    %v1622 = vadd.f32 %v1621, 1.0
    %v1623 = vrcp.pop %v1622
    %v1624 = vmul.f32 %v1618, %v1623
    %v1625 = vpack.c.bf16 %v1624, %v1624
    %v1627 = vsel %vm283, %v1625, 0
    %1629 = vmatprep.subr.bf16.mxu0 0
    %1630 = vmatpush1.bf16.msra.mxu0 %v530
    %1631 = vmatprep.subr.bf16.mxu0 0
    %1632 = vmatpush1.bf16.msra.mxu0 %v531
    %1633 = vmatprep.subr.bf16.mxu0 0
    %1634 = vmatpush1.bf16.msra.mxu0 0
    %1635 = vmatprep.subr.bf16.mxu0 0
    %1636 = vmatpush1.bf16.msra.mxu0 0
    %1637 = vmatprep.subr.bf16.mxu0 0
    %1638 = vmatpush1.bf16.msra.mxu0 0
    %1639 = vmatprep.subr.bf16.mxu0 0
    %1640 = vmatpush1.bf16.msra.mxu0 0
    %1641 = vmatprep.subr.bf16.mxu0 0
    %1642 = vmatpush1.bf16.msra.mxu0 0
    %1643 = vmatprep.subr.bf16.mxu0 0
    %1644 = vmatpush1.bf16.msra.mxu0 0
    %1645 = vmatprep.subr.bf16.mxu0 0
    %1646 = vmatpush1.bf16.msra.mxu0 0
    %1647 = vmatprep.subr.bf16.mxu0 0
    %1648 = vmatpush1.bf16.msra.mxu0 0
    %1649 = vmatprep.subr.bf16.mxu0 0
    %1650 = vmatpush1.bf16.msra.mxu0 0
    %1651 = vmatprep.subr.bf16.mxu0 0
    %1652 = vmatpush1.bf16.msra.mxu0 0
    %1653 = vmatprep.subr.bf16.mxu0 0
    %1654 = vmatpush1.bf16.msra.mxu0 0
    %1655 = vmatprep.subr.bf16.mxu0 0
    %1656 = vmatpush1.bf16.msra.mxu0 0
    %1657 = vmatprep.subr.bf16.mxu0 0
    %1658 = vmatpush1.bf16.msra.mxu0 0
    %1659 = vmatprep.subr.bf16.mxu0 0
    %1660 = vmatpush1.bf16.msra.mxu0 0
    %1661 = vmatprep.mubr.bf16.mxu0 0
    %1662 = vmatmul.mubr.bf16.gmra.mrb[0].mxu0 %v1627
    %v1663 = vpop.f32.mrb[0].mxu0
    %v1664 = vadd.f32 %v520, %v1663
    %v1665 = vpop.f32.mrb[0].mxu0
    %v1666 = vpop.f32.mrb[0].mxu0
    %v1667 = vpop.f32.mrb[0].mxu0
    %1668 = vdwg.mxu0
    %v1669 = vsub.f32 0.0, %v1664
    %v1670 = vmul.f32 %v1669, 1.442695
    %v1671 = vpow.pop %v1670
    %v1672 = vadd.f32 %v1671, 1.0
    %v1673 = vrcp.pop %v1672
    %v1674 = vmul.f32 %v1664, %v1673
    %v1675 = vpack.c.bf16 %v1674, %v1674
    %v1677 = vsel %vm283, %v1675, 0
    %1679 = vmatprep.subr.bf16.mxu0 0
    %1680 = vmatpush1.bf16.msra.mxu0 %v598
    %1681 = vmatprep.subr.bf16.mxu0 0
    %1682 = vmatpush1.bf16.msra.mxu0 %v599
    %1683 = vmatprep.subr.bf16.mxu0 0
    %1684 = vmatpush1.bf16.msra.mxu0 0
    %1685 = vmatprep.subr.bf16.mxu0 0
    %1686 = vmatpush1.bf16.msra.mxu0 0
    %1687 = vmatprep.subr.bf16.mxu0 0
    %1688 = vmatpush1.bf16.msra.mxu0 0
    %1689 = vmatprep.subr.bf16.mxu0 0
    %1690 = vmatpush1.bf16.msra.mxu0 0
    %1691 = vmatprep.subr.bf16.mxu0 0
    %1692 = vmatpush1.bf16.msra.mxu0 0
    %1693 = vmatprep.subr.bf16.mxu0 0
    %1694 = vmatpush1.bf16.msra.mxu0 0
    %1695 = vmatprep.subr.bf16.mxu0 0
    %1696 = vmatpush1.bf16.msra.mxu0 0
    %1697 = vmatprep.subr.bf16.mxu0 0
    %1698 = vmatpush1.bf16.msra.mxu0 0
    %1699 = vmatprep.subr.bf16.mxu0 0
    %1700 = vmatpush1.bf16.msra.mxu0 0
    %1701 = vmatprep.subr.bf16.mxu0 0
    %1702 = vmatpush1.bf16.msra.mxu0 0
    %1703 = vmatprep.subr.bf16.mxu0 0
    %1704 = vmatpush1.bf16.msra.mxu0 0
    %1705 = vmatprep.subr.bf16.mxu0 0
    %1706 = vmatpush1.bf16.msra.mxu0 0
    %1707 = vmatprep.subr.bf16.mxu0 0
    %1708 = vmatpush1.bf16.msra.mxu0 0
    %1709 = vmatprep.subr.bf16.mxu0 0
    %1710 = vmatpush1.bf16.msra.mxu0 0
    %1711 = vmatprep.mubr.bf16.mxu0 0
    %1712 = vmatmul.mubr.bf16.gmra.mrb[0].mxu0 %v1677
    %v1713 = vpop.f32.mrb[0].mxu0
    %v1714 = vadd.f32 %v588, %v1713
    %v1715 = vpop.f32.mrb[0].mxu0
    %v1716 = vpop.f32.mrb[0].mxu0
    %v1717 = vpop.f32.mrb[0].mxu0
    %1718 = vdwg.mxu0
    %v1719 = vtanh.pop %v1714
    %v1720 = vmul.f32 %v1719, %v1562
    %1722 = vrot.lane.b32.xlu0 %v1720, 112
    %v1723 = vpop.permute.xlu0 %1722
    %v1725 = vadd.f32 %v1720, %v1723
    %1726 = vrot.lane.b32.xlu0 %v1720, 96
    %v1727 = vpop.permute.xlu0 %1726
    %v1729 = vadd.f32 %v1725, %v1727
    %1730 = vrot.lane.b32.xlu0 %v1720, 80
    %v1731 = vpop.permute.xlu0 %1730
    %v1733 = vadd.f32 %v1729, %v1731
    %1734 = vrot.lane.b32.xlu0 %v1720, 64
    %v1735 = vpop.permute.xlu0 %1734
    %v1737 = vadd.f32 %v1733, %v1735
    %v1738 = vadd.f32 %v1557, %v1737
    %v1739 = vmul.f32 %v1738, 0.5
    %v1740 = vadd.f32 %v1560, %v1739
    %s1741 = scalar_lea.vmem %s1, 48
    %v1742 = vld [vmem:[%s1741] sm:$0xff]
    %v1743 = vmul.f32 %v1740, 2.0
    %v1744 = vsub.f32 %v1743, %v1565
    %v1745 = vadd.f32 %v1744, %v1737
    %v1746 = vmul.f32 %v169, 7.0
    %v1747 = vpack.c.bf16 %v1745, %v1745
    %v1749 = vsel %vm451, %v1747, 0
    %1751 = vmatprep.subr.bf16.mxu0 0
    %1752 = vmatpush1.bf16.msra.mxu0 %v449
    %1753 = vmatprep.subr.bf16.mxu0 0
    %1754 = vmatpush1.bf16.msra.mxu0 0
    %1755 = vmatprep.subr.bf16.mxu0 0
    %1756 = vmatpush1.bf16.msra.mxu0 0
    %1757 = vmatprep.subr.bf16.mxu0 0
    %1758 = vmatpush1.bf16.msra.mxu0 0
    %1759 = vmatprep.subr.bf16.mxu0 0
    %1760 = vmatpush1.bf16.msra.mxu0 0
    %1761 = vmatprep.subr.bf16.mxu0 0
    %1762 = vmatpush1.bf16.msra.mxu0 0
    %1763 = vmatprep.subr.bf16.mxu0 0
    %1764 = vmatpush1.bf16.msra.mxu0 0
    %1765 = vmatprep.subr.bf16.mxu0 0
    %1766 = vmatpush1.bf16.msra.mxu0 0
    %1767 = vmatprep.subr.bf16.mxu0 0
    %1768 = vmatpush1.bf16.msra.mxu0 0
    %1769 = vmatprep.subr.bf16.mxu0 0
    %1770 = vmatpush1.bf16.msra.mxu0 0
    %1771 = vmatprep.subr.bf16.mxu0 0
    %1772 = vmatpush1.bf16.msra.mxu0 0
    %1773 = vmatprep.subr.bf16.mxu0 0
    %1774 = vmatpush1.bf16.msra.mxu0 0
    %1775 = vmatprep.subr.bf16.mxu0 0
    %1776 = vmatpush1.bf16.msra.mxu0 0
    %1777 = vmatprep.subr.bf16.mxu0 0
    %1778 = vmatpush1.bf16.msra.mxu0 0
    %1779 = vmatprep.subr.bf16.mxu0 0
    %1780 = vmatpush1.bf16.msra.mxu0 0
    %1781 = vmatprep.subr.bf16.mxu0 0
    %1782 = vmatpush1.bf16.msra.mxu0 0
    %1783 = vmatprep.mubr.bf16.mxu0 0
    %1784 = vmatmul.mubr.bf16.gmra.mrb[0].mxu0 %v1749
    %v1785 = vpop.f32.mrb[0].mxu0
    %v1786 = vadd.f32 0.0, %v1785
    %v1787 = vpop.f32.mrb[0].mxu0
    %v1788 = vpop.f32.mrb[0].mxu0
    %v1789 = vpop.f32.mrb[0].mxu0
    %1790 = vdwg.mxu0
    %v1792 = vlaneseq
    %v1793 = vshrl.u32 %v1792, 7
    %v1794 = vsub.s32 0, %v1793
    %v1795 = vrot.slane %v1746, %v1794
    %v1797 = vadd.f32 %v1795, %v1786
    %v1798 = vadd.f32 %v1797, %v506
    %v1799 = vsub.f32 0.0, %v1798
    %v1800 = vmul.f32 %v1799, 1.442695
    %v1801 = vpow.pop %v1800
    %v1802 = vadd.f32 %v1801, 1.0
    %v1803 = vrcp.pop %v1802
    %v1804 = vmul.f32 %v1798, %v1803
    %v1805 = vpack.c.bf16 %v1804, %v1804
    %v1807 = vsel %vm283, %v1805, 0
    %1809 = vmatprep.subr.bf16.mxu0 0
    %1810 = vmatpush1.bf16.msra.mxu0 %v530
    %1811 = vmatprep.subr.bf16.mxu0 0
    %1812 = vmatpush1.bf16.msra.mxu0 %v531
    %1813 = vmatprep.subr.bf16.mxu0 0
    %1814 = vmatpush1.bf16.msra.mxu0 0
    %1815 = vmatprep.subr.bf16.mxu0 0
    %1816 = vmatpush1.bf16.msra.mxu0 0
    %1817 = vmatprep.subr.bf16.mxu0 0
    %1818 = vmatpush1.bf16.msra.mxu0 0
    %1819 = vmatprep.subr.bf16.mxu0 0
    %1820 = vmatpush1.bf16.msra.mxu0 0
    %1821 = vmatprep.subr.bf16.mxu0 0
    %1822 = vmatpush1.bf16.msra.mxu0 0
    %1823 = vmatprep.subr.bf16.mxu0 0
    %1824 = vmatpush1.bf16.msra.mxu0 0
    %1825 = vmatprep.subr.bf16.mxu0 0
    %1826 = vmatpush1.bf16.msra.mxu0 0
    %1827 = vmatprep.subr.bf16.mxu0 0
    %1828 = vmatpush1.bf16.msra.mxu0 0
    %1829 = vmatprep.subr.bf16.mxu0 0
    %1830 = vmatpush1.bf16.msra.mxu0 0
    %1831 = vmatprep.subr.bf16.mxu0 0
    %1832 = vmatpush1.bf16.msra.mxu0 0
    %1833 = vmatprep.subr.bf16.mxu0 0
    %1834 = vmatpush1.bf16.msra.mxu0 0
    %1835 = vmatprep.subr.bf16.mxu0 0
    %1836 = vmatpush1.bf16.msra.mxu0 0
    %1837 = vmatprep.subr.bf16.mxu0 0
    %1838 = vmatpush1.bf16.msra.mxu0 0
    %1839 = vmatprep.subr.bf16.mxu0 0
    %1840 = vmatpush1.bf16.msra.mxu0 0
    %1841 = vmatprep.mubr.bf16.mxu0 0
    %1842 = vmatmul.mubr.bf16.gmra.mrb[0].mxu0 %v1807
    %v1843 = vpop.f32.mrb[0].mxu0
    %v1844 = vadd.f32 %v520, %v1843
    %v1845 = vpop.f32.mrb[0].mxu0
    %v1846 = vpop.f32.mrb[0].mxu0
    %v1847 = vpop.f32.mrb[0].mxu0
    %1848 = vdwg.mxu0
    %v1849 = vsub.f32 0.0, %v1844
    %v1850 = vmul.f32 %v1849, 1.442695
    %v1851 = vpow.pop %v1850
    %v1852 = vadd.f32 %v1851, 1.0
    %v1853 = vrcp.pop %v1852
    %v1854 = vmul.f32 %v1844, %v1853
    %v1855 = vpack.c.bf16 %v1854, %v1854
    %v1857 = vsel %vm283, %v1855, 0
    %1859 = vmatprep.subr.bf16.mxu0 0
    %1860 = vmatpush1.bf16.msra.mxu0 %v598
    %1861 = vmatprep.subr.bf16.mxu0 0
    %1862 = vmatpush1.bf16.msra.mxu0 %v599
    %1863 = vmatprep.subr.bf16.mxu0 0
    %1864 = vmatpush1.bf16.msra.mxu0 0
    %1865 = vmatprep.subr.bf16.mxu0 0
    %1866 = vmatpush1.bf16.msra.mxu0 0
    %1867 = vmatprep.subr.bf16.mxu0 0
    %1868 = vmatpush1.bf16.msra.mxu0 0
    %1869 = vmatprep.subr.bf16.mxu0 0
    %1870 = vmatpush1.bf16.msra.mxu0 0
    %1871 = vmatprep.subr.bf16.mxu0 0
    %1872 = vmatpush1.bf16.msra.mxu0 0
    %1873 = vmatprep.subr.bf16.mxu0 0
    %1874 = vmatpush1.bf16.msra.mxu0 0
    %1875 = vmatprep.subr.bf16.mxu0 0
    %1876 = vmatpush1.bf16.msra.mxu0 0
    %1877 = vmatprep.subr.bf16.mxu0 0
    %1878 = vmatpush1.bf16.msra.mxu0 0
    %1879 = vmatprep.subr.bf16.mxu0 0
    %1880 = vmatpush1.bf16.msra.mxu0 0
    %1881 = vmatprep.subr.bf16.mxu0 0
    %1882 = vmatpush1.bf16.msra.mxu0 0
    %1883 = vmatprep.subr.bf16.mxu0 0
    %1884 = vmatpush1.bf16.msra.mxu0 0
    %1885 = vmatprep.subr.bf16.mxu0 0
    %1886 = vmatpush1.bf16.msra.mxu0 0
    %1887 = vmatprep.subr.bf16.mxu0 0
    %1888 = vmatpush1.bf16.msra.mxu0 0
    %1889 = vmatprep.subr.bf16.mxu0 0
    %1890 = vmatpush1.bf16.msra.mxu0 0
    %1891 = vmatprep.mubr.bf16.mxu0 0
    %1892 = vmatmul.mubr.bf16.gmra.mrb[0].mxu0 %v1857
    %v1893 = vpop.f32.mrb[0].mxu0
    %v1894 = vadd.f32 %v588, %v1893
    %v1895 = vpop.f32.mrb[0].mxu0
    %v1896 = vpop.f32.mrb[0].mxu0
    %v1897 = vpop.f32.mrb[0].mxu0
    %1898 = vdwg.mxu0
    %v1899 = vtanh.pop %v1894
    %v1900 = vmul.f32 %v1899, %v1742
    %1902 = vrot.lane.b32.xlu0 %v1900, 112
    %v1903 = vpop.permute.xlu0 %1902
    %v1905 = vadd.f32 %v1900, %v1903
    %1906 = vrot.lane.b32.xlu0 %v1900, 96
    %v1907 = vpop.permute.xlu0 %1906
    %v1909 = vadd.f32 %v1905, %v1907
    %1910 = vrot.lane.b32.xlu0 %v1900, 80
    %v1911 = vpop.permute.xlu0 %1910
    %v1913 = vadd.f32 %v1909, %v1911
    %1914 = vrot.lane.b32.xlu0 %v1900, 64
    %v1915 = vpop.permute.xlu0 %1914
    %v1917 = vadd.f32 %v1913, %v1915
    %v1918 = vadd.f32 %v1737, %v1917
    %v1919 = vmul.f32 %v1918, 0.5
    %v1920 = vadd.f32 %v1740, %v1919
    %s1921 = scalar_lea.vmem %s1, 56
    %v1922 = vld [vmem:[%s1921] sm:$0xff]
    %v1923 = vmul.f32 %v1920, 2.0
    %v1924 = vsub.f32 %v1923, %v1745
    %v1925 = vadd.f32 %v1924, %v1917
    %v1926 = vmul.f32 %v169, 8.0
    %v1927 = vpack.c.bf16 %v1925, %v1925
    %v1929 = vsel %vm451, %v1927, 0
    %1931 = vmatprep.subr.bf16.mxu0 0
    %1932 = vmatpush1.bf16.msra.mxu0 %v449
    %1933 = vmatprep.subr.bf16.mxu0 0
    %1934 = vmatpush1.bf16.msra.mxu0 0
    %1935 = vmatprep.subr.bf16.mxu0 0
    %1936 = vmatpush1.bf16.msra.mxu0 0
    %1937 = vmatprep.subr.bf16.mxu0 0
    %1938 = vmatpush1.bf16.msra.mxu0 0
    %1939 = vmatprep.subr.bf16.mxu0 0
    %1940 = vmatpush1.bf16.msra.mxu0 0
    %1941 = vmatprep.subr.bf16.mxu0 0
    %1942 = vmatpush1.bf16.msra.mxu0 0
    %1943 = vmatprep.subr.bf16.mxu0 0
    %1944 = vmatpush1.bf16.msra.mxu0 0
    %1945 = vmatprep.subr.bf16.mxu0 0
    %1946 = vmatpush1.bf16.msra.mxu0 0
    %1947 = vmatprep.subr.bf16.mxu0 0
    %1948 = vmatpush1.bf16.msra.mxu0 0
    %1949 = vmatprep.subr.bf16.mxu0 0
    %1950 = vmatpush1.bf16.msra.mxu0 0
    %1951 = vmatprep.subr.bf16.mxu0 0
    %1952 = vmatpush1.bf16.msra.mxu0 0
    %1953 = vmatprep.subr.bf16.mxu0 0
    %1954 = vmatpush1.bf16.msra.mxu0 0
    %1955 = vmatprep.subr.bf16.mxu0 0
    %1956 = vmatpush1.bf16.msra.mxu0 0
    %1957 = vmatprep.subr.bf16.mxu0 0
    %1958 = vmatpush1.bf16.msra.mxu0 0
    %1959 = vmatprep.subr.bf16.mxu0 0
    %1960 = vmatpush1.bf16.msra.mxu0 0
    %1961 = vmatprep.subr.bf16.mxu0 0
    %1962 = vmatpush1.bf16.msra.mxu0 0
    %1963 = vmatprep.mubr.bf16.mxu0 0
    %1964 = vmatmul.mubr.bf16.gmra.mrb[0].mxu0 %v1929
    %v1965 = vpop.f32.mrb[0].mxu0
    %v1966 = vadd.f32 0.0, %v1965
    %v1967 = vpop.f32.mrb[0].mxu0
    %v1968 = vpop.f32.mrb[0].mxu0
    %v1969 = vpop.f32.mrb[0].mxu0
    %1970 = vdwg.mxu0
    %v1972 = vlaneseq
    %v1973 = vshrl.u32 %v1972, 7
    %v1974 = vsub.s32 0, %v1973
    %v1975 = vrot.slane %v1926, %v1974
    %v1977 = vadd.f32 %v1975, %v1966
    %v1978 = vadd.f32 %v1977, %v506
    %v1979 = vsub.f32 0.0, %v1978
    %v1980 = vmul.f32 %v1979, 1.442695
    %v1981 = vpow.pop %v1980
    %v1982 = vadd.f32 %v1981, 1.0
    %v1983 = vrcp.pop %v1982
    %v1984 = vmul.f32 %v1978, %v1983
    %v1985 = vpack.c.bf16 %v1984, %v1984
    %v1987 = vsel %vm283, %v1985, 0
    %1989 = vmatprep.subr.bf16.mxu0 0
    %1990 = vmatpush1.bf16.msra.mxu0 %v530
    %1991 = vmatprep.subr.bf16.mxu0 0
    %1992 = vmatpush1.bf16.msra.mxu0 %v531
    %1993 = vmatprep.subr.bf16.mxu0 0
    %1994 = vmatpush1.bf16.msra.mxu0 0
    %1995 = vmatprep.subr.bf16.mxu0 0
    %1996 = vmatpush1.bf16.msra.mxu0 0
    %1997 = vmatprep.subr.bf16.mxu0 0
    %1998 = vmatpush1.bf16.msra.mxu0 0
    %1999 = vmatprep.subr.bf16.mxu0 0
    %2000 = vmatpush1.bf16.msra.mxu0 0
    %2001 = vmatprep.subr.bf16.mxu0 0
    %2002 = vmatpush1.bf16.msra.mxu0 0
    %2003 = vmatprep.subr.bf16.mxu0 0
    %2004 = vmatpush1.bf16.msra.mxu0 0
    %2005 = vmatprep.subr.bf16.mxu0 0
    %2006 = vmatpush1.bf16.msra.mxu0 0
    %2007 = vmatprep.subr.bf16.mxu0 0
    %2008 = vmatpush1.bf16.msra.mxu0 0
    %2009 = vmatprep.subr.bf16.mxu0 0
    %2010 = vmatpush1.bf16.msra.mxu0 0
    %2011 = vmatprep.subr.bf16.mxu0 0
    %2012 = vmatpush1.bf16.msra.mxu0 0
    %2013 = vmatprep.subr.bf16.mxu0 0
    %2014 = vmatpush1.bf16.msra.mxu0 0
    %2015 = vmatprep.subr.bf16.mxu0 0
    %2016 = vmatpush1.bf16.msra.mxu0 0
    %2017 = vmatprep.subr.bf16.mxu0 0
    %2018 = vmatpush1.bf16.msra.mxu0 0
    %2019 = vmatprep.subr.bf16.mxu0 0
    %2020 = vmatpush1.bf16.msra.mxu0 0
    %2021 = vmatprep.mubr.bf16.mxu0 0
    %2022 = vmatmul.mubr.bf16.gmra.mrb[0].mxu0 %v1987
    %v2023 = vpop.f32.mrb[0].mxu0
    %v2024 = vadd.f32 %v520, %v2023
    %v2025 = vpop.f32.mrb[0].mxu0
    %v2026 = vpop.f32.mrb[0].mxu0
    %v2027 = vpop.f32.mrb[0].mxu0
    %2028 = vdwg.mxu0
    %v2029 = vsub.f32 0.0, %v2024
    %v2030 = vmul.f32 %v2029, 1.442695
    %v2031 = vpow.pop %v2030
    %v2032 = vadd.f32 %v2031, 1.0
    %v2033 = vrcp.pop %v2032
    %v2034 = vmul.f32 %v2024, %v2033
    %v2035 = vpack.c.bf16 %v2034, %v2034
    %v2037 = vsel %vm283, %v2035, 0
    %2039 = vmatprep.subr.bf16.mxu0 0
    %2040 = vmatpush1.bf16.msra.mxu0 %v598
    %2041 = vmatprep.subr.bf16.mxu0 0
    %2042 = vmatpush1.bf16.msra.mxu0 %v599
    %2043 = vmatprep.subr.bf16.mxu0 0
    %2044 = vmatpush1.bf16.msra.mxu0 0
    %2045 = vmatprep.subr.bf16.mxu0 0
    %2046 = vmatpush1.bf16.msra.mxu0 0
    %2047 = vmatprep.subr.bf16.mxu0 0
    %2048 = vmatpush1.bf16.msra.mxu0 0
    %2049 = vmatprep.subr.bf16.mxu0 0
    %2050 = vmatpush1.bf16.msra.mxu0 0
    %2051 = vmatprep.subr.bf16.mxu0 0
    %2052 = vmatpush1.bf16.msra.mxu0 0
    %2053 = vmatprep.subr.bf16.mxu0 0
    %2054 = vmatpush1.bf16.msra.mxu0 0
    %2055 = vmatprep.subr.bf16.mxu0 0
    %2056 = vmatpush1.bf16.msra.mxu0 0
    %2057 = vmatprep.subr.bf16.mxu0 0
    %2058 = vmatpush1.bf16.msra.mxu0 0
    %2059 = vmatprep.subr.bf16.mxu0 0
    %2060 = vmatpush1.bf16.msra.mxu0 0
    %2061 = vmatprep.subr.bf16.mxu0 0
    %2062 = vmatpush1.bf16.msra.mxu0 0
    %2063 = vmatprep.subr.bf16.mxu0 0
    %2064 = vmatpush1.bf16.msra.mxu0 0
    %2065 = vmatprep.subr.bf16.mxu0 0
    %2066 = vmatpush1.bf16.msra.mxu0 0
    %2067 = vmatprep.subr.bf16.mxu0 0
    %2068 = vmatpush1.bf16.msra.mxu0 0
    %2069 = vmatprep.subr.bf16.mxu0 0
    %2070 = vmatpush1.bf16.msra.mxu0 0
    %2071 = vmatprep.mubr.bf16.mxu0 0
    %2072 = vmatmul.mubr.bf16.gmra.mrb[0].mxu0 %v2037
    %v2073 = vpop.f32.mrb[0].mxu0
    %v2074 = vadd.f32 %v588, %v2073
    %v2075 = vpop.f32.mrb[0].mxu0
    %v2076 = vpop.f32.mrb[0].mxu0
    %v2077 = vpop.f32.mrb[0].mxu0
    %2078 = vdwg.mxu0
    %v2079 = vtanh.pop %v2074
    %v2080 = vmul.f32 %v2079, %v1922
    %2082 = vrot.lane.b32.xlu0 %v2080, 112
    %v2083 = vpop.permute.xlu0 %2082
    %v2085 = vadd.f32 %v2080, %v2083
    %2086 = vrot.lane.b32.xlu0 %v2080, 96
    %v2087 = vpop.permute.xlu0 %2086
    %v2089 = vadd.f32 %v2085, %v2087
    %2090 = vrot.lane.b32.xlu0 %v2080, 80
    %v2091 = vpop.permute.xlu0 %2090
    %v2093 = vadd.f32 %v2089, %v2091
    %2094 = vrot.lane.b32.xlu0 %v2080, 64
    %v2095 = vpop.permute.xlu0 %2094
    %v2097 = vadd.f32 %v2093, %v2095
    %v2098 = vadd.f32 %v1917, %v2097
    %v2099 = vmul.f32 %v2098, 0.5
    %v2100 = vadd.f32 %v1920, %v2099
    %v2102 = vlaneseq
    %v2103 = vshrl.u32 %v2102, 7
    %v2104 = vsub.s32 0, %v2103
    %v2105 = vrot.slane %v185, %v2104
    %v2108 = vsel %vm451, %v2100, 0
    %2110 = vmatprep.subr.mxu0 0.0
    %2111 = vmatpush1.msra.mxu0 %v183
    %2112 = vmatprep.subr.mxu0 0.0
    %2113 = vmatpush1.msra.mxu0 %v184
    %2114 = vmatprep.subr.mxu0 0.0
    %2115 = vmatpush1.msra.mxu0 0.0
    %2116 = vmatprep.subr.mxu0 0.0
    %2117 = vmatpush1.msra.mxu0 0.0
    %2118 = vmatprep.subr.mxu0 0.0
    %2119 = vmatpush1.msra.mxu0 0.0
    %2120 = vmatprep.subr.mxu0 0.0
    %2121 = vmatpush1.msra.mxu0 0.0
    %2122 = vmatprep.subr.mxu0 0.0
    %2123 = vmatpush1.msra.mxu0 0.0
    %2124 = vmatprep.subr.mxu0 0.0
    %2125 = vmatpush1.msra.mxu0 0.0
    %2126 = vmatprep.subr.mxu0 0.0
    %2127 = vmatpush1.msra.mxu0 0.0
    %2128 = vmatprep.subr.mxu0 0.0
    %2129 = vmatpush1.msra.mxu0 0.0
    %2130 = vmatprep.subr.mxu0 0.0
    %2131 = vmatpush1.msra.mxu0 0.0
    %2132 = vmatprep.subr.mxu0 0.0
    %2133 = vmatpush1.msra.mxu0 0.0
    %2134 = vmatprep.subr.mxu0 0.0
    %2135 = vmatpush1.msra.mxu0 0.0
    %2136 = vmatprep.subr.mxu0 0.0
    %2137 = vmatpush1.msra.mxu0 0.0
    %2138 = vmatprep.subr.mxu0 0.0
    %2139 = vmatpush1.msra.mxu0 0.0
    %2140 = vmatprep.subr.mxu0 0.0
    %2141 = vmatpush1.msra.mxu0 0.0
    %2142 = vmatprep.subr.mxu0 0.0
    %2143 = vmatpush1.msra.mxu0 0.0
    %2144 = vmatprep.subr.mxu0 0.0
    %2145 = vmatpush1.msra.mxu0 0.0
    %2146 = vmatprep.subr.mxu0 0.0
    %2147 = vmatpush1.msra.mxu0 0.0
    %2148 = vmatprep.subr.mxu0 0.0
    %2149 = vmatpush1.msra.mxu0 0.0
    %2150 = vmatprep.subr.mxu0 0.0
    %2151 = vmatpush1.msra.mxu0 0.0
    %2152 = vmatprep.subr.mxu0 0.0
    %2153 = vmatpush1.msra.mxu0 0.0
    %2154 = vmatprep.subr.mxu0 0.0
    %2155 = vmatpush1.msra.mxu0 0.0
    %2156 = vmatprep.subr.mxu0 0.0
    %2157 = vmatpush1.msra.mxu0 0.0
    %2158 = vmatprep.subr.mxu0 0.0
    %2159 = vmatpush1.msra.mxu0 0.0
    %2160 = vmatprep.subr.mxu0 0.0
    %2161 = vmatpush1.msra.mxu0 0.0
    %2162 = vmatprep.subr.mxu0 0.0
    %2163 = vmatpush1.msra.mxu0 0.0
    %2164 = vmatprep.subr.mxu0 0.0
    %2165 = vmatpush1.msra.mxu0 0.0
    %2166 = vmatprep.subr.mxu0 0.0
    %2167 = vmatpush1.msra.mxu0 0.0
    %2168 = vmatprep.subr.mxu0 0.0
    %2169 = vmatpush1.msra.mxu0 0.0
    %2170 = vmatprep.subr.mxu0 0.0
    %2171 = vmatpush1.msra.mxu0 0.0
    %2172 = vmatprep.subr.mxu0 0.0
    %2173 = vmatpush1.msra.mxu0 0.0
    %2174 = vmatprep.mubr.f32.mxu0 0.0
    %2175 = vmatmul.mubr.f32.gmra.mrb[0].mxu0 %v2108
    %v2176 = vpop.f32.mrb[0].mxu0
    %v2177 = vadd.f32 %v2105, %v2176
    %v2178 = vpop.f32.mrb[0].mxu0
    %2179 = vdwg.mxu0
    %vm2180 = vcmask 7168
    %v2181 = vsel %vm2180, %v2177, 0.0
    %v2182 = vrot.slane %v2181, 4
    %v2183 = vadd.f32 %v2181, %v2182
    %v2184 = vrot.slane %v2183, 2
    %v2185 = vadd.f32 %v2183, %v2184
    %v2186 = vrot.slane %v2185, 1
    %v2187 = vadd.f32 %v2185, %v2186
    %v2188 = vmul.f32 %v2187, 0.125
    %vm2189 = vcmask 0
    %2190 = vst.msk [vmem:[#allocation17] sm:$0x1] %vm2189, %v2188
    // Predicated region
    $region102: #{tpu_custom_call.1} parent=1 // pred_check
      _
    $region103: #{tpu_custom_call.1} parent=1 // pred_check_branch
      %2192 = sbr.rel (0) target = $region105
    $region104: #{tpu_custom_call.1} parent=1 // pred_region
      %s2194 = ssub.s32 16, 16
      %2195 = vsyncadd [#allocation5], %s2194
      %s2197 = sshll.u32 [#allocation17], 4
      %s2198 = int_to_ptr.vmem [resolvable:$true] %s2197
      %2200 = dma.vmem_to_hbm [thread:$0]  %s2198, 16, %s17, [#allocation5]
    $region105: #{tpu_custom_call.1} parent=1 // pred_fallthru
      _
    // Predicated region
    $region106: #{tpu_custom_call.1} parent=1 // pred_check
      _
    $region107: #{tpu_custom_call.1} parent=1 // pred_check_branch
      %2202 = sbr.rel (0) target = $region109
    $region108: #{tpu_custom_call.1} parent=1 // pred_region
      %2203 = dma.done [#allocation5], 16
    $region109: #{tpu_custom_call.1} parent=1 // pred_fallthru
      _
    %2204 = vsyncpa [#allocation4], 1
    %2205 = vsyncpa [#allocation7], 1
    %2206 = vsyncpa [#allocation10], 1
    %2207 = vsyncpa [#allocation13], 1
    %2208 = vsyncpa [#allocation16], 1
    %2209 = vsyncpa [#allocation5], 1

</llo_original>
